<compile_context>
chip_gen: v5e
topology: v5e:2x2
jax: 0.10.0
libtpu: 0.0.40
codegen_flags: <defaults>
</compile_context>

<pallas_src>
from functools import partial

import jax
import jax.numpy as jnp
import numpy as np
from jax import lax
from jax.experimental import pallas as pl
from jax.experimental.pallas import tpu as pltpu

classes_per_latent = 10
num_latents = 32
_LOGITS = num_latents * classes_per_latent  # 320


# -----------------------------------------------------------------------------
# Fully fused encoder kernel (conv1 + conv2 + fc1 + fc_logits) per batch tile
# -----------------------------------------------------------------------------
def _encoder_kernel(x_ref, w1f_ref, w2f_ref, b2f_ref, wf1_ref, bf1_ref,
                    wf2_ref, bf2_ref, o_ref):
    # x_ref : (16*TB, 91)  conv1 row-folded im2col; row index = rp*8*TB + i*TB + b
    #                      where padded h1 row pr = 2*i + rp (pad rows are zero)
    # w1f   : (91, 448)    conv1 folded weights (bias in row 90); lanes = c*32 + cf
    # w2f   : (3, 448, 448) conv2 banded weights, one per row tap dh
    # b2f   : (1, 448)     conv2 bias tiled over the 7 output columns
    # wf1   : (7, 448, 32) fc1 weights split per conv2 output row u
    # wf2   : (32, 320), bf1: (1, 32), bf2: (1, 320)
    # o_ref : (TB, 320)    logits
    TB = o_ref.shape[0]

    # ---- conv1 + ReLU: one MXU matmul, M = 16*TB (=128 for TB=8).
    h1 = jnp.maximum(
        jnp.dot(x_ref[...], w1f_ref[...], preferred_element_type=jnp.float32),
        0.0)                                           # (16*TB, 448)

    # ---- conv2 + ReLU: 3 row-tap matmuls (column taps folded into w2f).
    # tap dh reads padded h1 row 2u+dh; row ordering makes every slice aligned.
    t0 = h1[0 * TB:7 * TB]       # dh = 0 -> plane rp=0, rows i = u
    t2 = h1[1 * TB:8 * TB]       # dh = 2 -> plane rp=0, rows i = u + 1
    t1 = h1[8 * TB:15 * TB]      # dh = 1 -> plane rp=1, rows i = u
    acc = jnp.dot(t0, w2f_ref[0], preferred_element_type=jnp.float32)
    acc = acc + jnp.dot(t1, w2f_ref[1], preferred_element_type=jnp.float32)
    acc = acc + jnp.dot(t2, w2f_ref[2], preferred_element_type=jnp.float32)
    h2 = jnp.maximum(acc + b2f_ref[...], 0.0)          # (7*TB, 448); rows (u, b)

    # ---- fc1 + ReLU: contract the 3136 features that live across 7 row blocks.
    f = jnp.dot(h2[0:TB], wf1_ref[0], preferred_element_type=jnp.float32)
    for u in range(1, 7):
        f = f + jnp.dot(h2[u * TB:(u + 1) * TB], wf1_ref[u],
                        preferred_element_type=jnp.float32)
    f = jnp.maximum(f + bf1_ref[...], 0.0)             # (TB, 32)

    # ---- fc_logits
    out = jnp.dot(f, wf2_ref[...], preferred_element_type=jnp.float32)
    o_ref[...] = (out + bf2_ref[...]).astype(o_ref.dtype)


# -----------------------------------------------------------------------------
# Forward pass wrapper
# -----------------------------------------------------------------------------
@partial(jax.jit, static_argnames=("tile_b",))
def encoder_forward(kparams, x, tile_b=8):
    # tile_b must be a multiple of 8 (sublane tile) so all in-kernel slices are
    # aligned.  8 is v5e-friendly; use 16/32 on v6e/v7x for a fuller MXU.
    assert tile_b % 8 == 0
    B = x.shape[0]
    TB = tile_b
    n_tiles = -(-B // TB)
    Bp = n_tiles * TB

    # ---- input glue (cheap XLA): build the row-folded conv1 im2col, ordered
    # (tile, row-parity, row-pair, image) with explicit zero rows that realize
    # conv2's zero padding.
    xi = x[:, 0].astype(jnp.float32)                              # (B, 28, 28)
    if Bp != B:
        xi = jnp.pad(xi, ((0, Bp - B), (0, 0), (0, 0)))
    xp = jnp.pad(xi, ((0, 0), (1, 1), (1, 1)))                    # (Bp, 30, 30)
    taps = [xp[:, dh:dh + 28:2, :] for dh in range(3)]            # 3 x (Bp, 14, 30)
    ones = jnp.ones((Bp, 14, 1), jnp.float32)                     # bias column
    lhs = jnp.concatenate(taps + [ones], axis=-1)                 # (Bp, 14, 91)
    zrow = jnp.zeros((Bp, 1, 91), jnp.float32)
    plane0 = jnp.concatenate([zrow, lhs[:, 1::2]], axis=1)        # padded rows 0,2,..,14
    plane1 = jnp.concatenate([lhs[:, 0::2], zrow], axis=1)        # padded rows 1,3,..,15
    planes = jnp.stack([plane0, plane1], axis=1)                  # (Bp, 2, 8, 91)
    planes = planes.reshape(n_tiles, TB, 2, 8, 91).transpose(0, 2, 3, 1, 4)
    x_lhs = planes.reshape(n_tiles * 16 * TB, 91)                 # (16*Bp, 91)

    w1f, w2f, b2f = kparams["w1f"], kparams["w2f"], kparams["b2f"]
    wf1, bf1 = kparams["wf1"], kparams["bf1"]
    wf2, bf2 = kparams["wf2"], kparams["bf2"]

    weight_bytes = 4 * (w1f.size + w2f.size + b2f.size + wf1.size + bf1.size
                        + wf2.size + bf2.size)
    flops = 2 * n_tiles * (16 * TB * 91 * 448 + 3 * 7 * TB * 448 * 448
                           + 7 * TB * 448 * 32 + TB * 32 * _LOGITS)
    bytes_accessed = 4 * (x_lhs.size + Bp * _LOGITS) + weight_bytes

    logits = pl.pallas_call(
        _encoder_kernel,
        out_shape=jax.ShapeDtypeStruct((Bp, _LOGITS), jnp.float32),
        grid=(n_tiles,),
        in_specs=[
            pl.BlockSpec((16 * TB, 91), lambda t: (t, 0)),
            pl.BlockSpec((91, 448), lambda t: (0, 0)),
            pl.BlockSpec((3, 448, 448), lambda t: (0, 0, 0)),
            pl.BlockSpec((1, 448), lambda t: (0, 0)),
            pl.BlockSpec((7, 448, 32), lambda t: (0, 0, 0)),
            pl.BlockSpec((1, 32), lambda t: (0, 0)),
            pl.BlockSpec((32, _LOGITS), lambda t: (0, 0)),
            pl.BlockSpec((1, _LOGITS), lambda t: (0, 0)),
        ],
        out_specs=pl.BlockSpec((TB, _LOGITS), lambda t: (t, 0)),
        compiler_params=pltpu.CompilerParams(
            dimension_semantics=("parallel",),
            vmem_limit_bytes=32 * 1024 * 1024),
        cost_estimate=pl.CostEstimate(
            flops=flops, transcendentals=0, bytes_accessed=bytes_accessed),
    )(x_lhs, w1f, w2f, b2f, wf1, bf1, wf2, bf2)

    return logits[:B].reshape(B, num_latents, classes_per_latent)


# -----------------------------------------------------------------------------
# Parameter init (torch layouts) + one-time re-layout into kernel layouts
# -----------------------------------------------------------------------------
def init_params(key):
    ks = jax.random.split(key, 8)

    def init(k, shape, fan_in):
        return jax.random.normal(k, shape, jnp.float32) / jnp.sqrt(float(fan_in))

    return {
        "conv1_w": init(ks[0], (32, 1, 3, 3), 9),
        "conv1_b": init(ks[1], (32,), 9),
        "conv2_w": init(ks[2], (64, 32, 3, 3), 32 * 9),
        "conv2_b": init(ks[3], (64,), 32 * 9),
        "fc1_w": init(ks[4], (32, 64 * 7 * 7), 64 * 49),
        "fc1_b": init(ks[5], (32,), 64 * 49),
        "fc2_w": init(ks[6], (_LOGITS, 32), 32),
        "fc2_b": init(ks[7], (_LOGITS,), 32),
    }


def prepare_params(params):
    """One-time re-layout of torch-shaped weights into the fused-kernel layouts."""
    w1 = np.asarray(params["conv1_w"])   # (32, 1, 3, 3)  [cf, 1, dh, dw]
    b1 = np.asarray(params["conv1_b"])   # (32,)
    w2 = np.asarray(params["conv2_w"])   # (64, 32, 3, 3) [co, ci, dh, dw]
    b2 = np.asarray(params["conv2_b"])   # (64,)
    f1w = np.asarray(params["fc1_w"])    # (32, 3136)
    f1b = np.asarray(params["fc1_b"])    # (32,)
    f2w = np.asarray(params["fc2_w"])    # (320, 32)
    f2b = np.asarray(params["fc2_b"])    # (320,)

    # conv1 row-folded weights: lane (c*32 + cf) of an h1 row is a banded linear
    # function of the 3 padded input rows (lanes dh*30 + pc).  Row 90 is the bias
    # (driven by the constant-1 input column; zero pad rows stay exactly zero).
    w1f = np.zeros((91, 448), np.float32)
    for dh in range(3):
        for c in range(14):
            for dw in range(3):
                pc = 2 * c + dw
                w1f[dh * 30 + pc, c * 32:(c + 1) * 32] = w1[:, 0, dh, dw]
    w1f[90, :] = np.tile(b1, 14)

    # conv2 banded weights: for row tap dh, output lanes (v*64 + co) of a conv2
    # row are a banded linear function of an h1 row's lanes (c*32 + ci), with
    # stride 2 + column zero-padding expressed by the band limits.
    w2f = np.zeros((3, 448, 448), np.float32)
    for dh in range(3):
        for v in range(7):
            for dw in range(3):
                c = 2 * v + dw - 1
                if 0 <= c < 14:
                    w2f[dh, c * 32:(c + 1) * 32, v * 64:(v + 1) * 64] = \
                        w2[:, :, dh, dw].T
    b2f = np.tile(b2, 7).reshape(1, 448).astype(np.float32)

    # fc1 columns permuted from torch's (co, u, v) flatten to the kernel's
    # per-row-block (u, v, co) order, split per conv2 output row u.
    wf1 = f1w.reshape(32, 64, 7, 7).transpose(2, 3, 1, 0).reshape(7, 448, 32)
    bf1 = f1b.reshape(1, 32)
    wf2 = f2w.T                                          # (32, 320)
    bf2 = f2b.reshape(1, _LOGITS)

    to_j = lambda a: jnp.asarray(np.ascontiguousarray(a), jnp.float32)
    return {"w1f": to_j(w1f), "w2f": to_j(w2f), "b2f": to_j(b2f),
            "wf1": to_j(wf1), "bf1": to_j(bf1), "wf2": to_j(wf2), "bf2": to_j(bf2)}


# -----------------------------------------------------------------------------
# Pure-JAX reference (torch-layout weights) for correctness check
# -----------------------------------------------------------------------------
def encoder_reference(params, x):
    def conv(x, w, b):
        y = lax.conv_general_dilated(
            x, w, window_strides=(2, 2), padding=((1, 1), (1, 1)),
            dimension_numbers=("NCHW", "OIHW", "NCHW"))
        return jax.nn.relu(y + b[None, :, None, None])

    h = conv(x, params["conv1_w"], params["conv1_b"])
    h = conv(h, params["conv2_w"], params["conv2_b"])
    h = h.reshape(x.shape[0], -1)
    h = jax.nn.relu(h @ params["fc1_w"].T + params["fc1_b"])
    logits = h @ params["fc2_w"].T + params["fc2_b"]
    return logits.reshape(-1, num_latents, classes_per_latent)


if __name__ == "__main__":
    key = jax.random.PRNGKey(0)
    k_param, k_x = jax.random.split(key)
    params = init_params(k_param)

    # Input shape forced by fc1 = Linear(64*7*7, 32): (B, 1, 28, 28)
    x = jax.random.normal(k_x, (2, 1, 28, 28), jnp.float32)

    # Round test data to bf16-representable f32 so the comparison is insensitive
    # to the MXU's default f32 precision mode (both the kernel's and XLA's
    # matmuls may round operands to bf16; with bf16-exact data the products are
    # exact and only f32 accumulation order differs).
    round_bf16 = lambda t: t.astype(jnp.bfloat16).astype(jnp.float32)
    params = jax.tree_util.tree_map(round_bf16, params)
    x = round_bf16(x)

    kparams = prepare_params(params)

    logits = jax.block_until_ready(encoder_forward(kparams, x))
    assert logits.shape == (2, num_latents, classes_per_latent), logits.shape

    ref = jax.block_until_ready(encoder_reference(params, x))
    assert jnp.allclose(logits, ref, rtol=2e-3, atol=2e-3), float(
        jnp.max(jnp.abs(logits - ref)))

    print("KERNEL_OK")
</pallas_src>

<mosaic_0001>
module attributes {stable_mosaic.version = 11 : i64} {
  func.func @_encoder_kernel(%arg0: i32, %arg1: memref<128x91xf32, #tpu.memory_space<vmem>>, %arg2: memref<91x448xf32, #tpu.memory_space<vmem>>, %arg3: memref<3x448x448xf32, #tpu.memory_space<vmem>>, %arg4: memref<1x448xf32, #tpu.memory_space<vmem>>, %arg5: memref<7x448x32xf32, #tpu.memory_space<vmem>>, %arg6: memref<1x32xf32, #tpu.memory_space<vmem>>, %arg7: memref<32x320xf32, #tpu.memory_space<vmem>>, %arg8: memref<1x320xf32, #tpu.memory_space<vmem>>, %arg9: memref<8x320xf32, #tpu.memory_space<vmem>>) attributes {dimension_semantics = [#tpu.dimension_semantics<parallel>], iteration_bounds = array<i64: 1>, scalar_prefetch = 0 : i64, scratch_operands = 0 : i64, tpu.core_type = #tpu.core_type<tc>, window_params = [{transform_indices = @transform_0, window_bounds = array<i64: 128, 91>}, {pipeline_mode = #tpu.pipeline_mode<synchronous>, transform_indices = @transform_1, window_bounds = array<i64: 91, 448>}, {pipeline_mode = #tpu.pipeline_mode<synchronous>, transform_indices = @transform_2, window_bounds = array<i64: 3, 448, 448>}, {pipeline_mode = #tpu.pipeline_mode<synchronous>, transform_indices = @transform_3, window_bounds = array<i64: 1, 448>}, {pipeline_mode = #tpu.pipeline_mode<synchronous>, transform_indices = @transform_4, window_bounds = array<i64: 7, 448, 32>}, {pipeline_mode = #tpu.pipeline_mode<synchronous>, transform_indices = @transform_5, window_bounds = array<i64: 1, 32>}, {pipeline_mode = #tpu.pipeline_mode<synchronous>, transform_indices = @transform_6, window_bounds = array<i64: 32, 320>}, {pipeline_mode = #tpu.pipeline_mode<synchronous>, transform_indices = @transform_7, window_bounds = array<i64: 1, 320>}, {transform_indices = @transform_8, window_bounds = array<i64: 8, 320>}]} {
    %c0 = arith.constant 0 : index
    %c0_0 = arith.constant 0 : index
    %0 = vector.load %arg1[%c0, %c0_0] : memref<128x91xf32, #tpu.memory_space<vmem>>, vector<128x91xf32>
    %c0_1 = arith.constant 0 : index
    %c0_2 = arith.constant 0 : index
    %1 = vector.load %arg2[%c0_1, %c0_2] : memref<91x448xf32, #tpu.memory_space<vmem>>, vector<91x448xf32>
    %cst = arith.constant dense<0.000000e+00> : vector<128x448xf32>
    %2 = tpu.matmul %0, %1, %cst {dimension_numbers = #tpu.dot_dimension_numbers<[1], [0], [0], [1], [0, 0, 1, 1], [], []>} : vector<128x91xf32>, vector<91x448xf32>, vector<128x448xf32> -> vector<128x448xf32>
    %cst_3 = arith.constant 0.000000e+00 : f32
    %3 = vector.broadcast %cst_3 : f32 to vector<128x448xf32>
    %4 = arith.maximumf %2, %3 : vector<128x448xf32>
    %5 = vector.extract_strided_slice %4 {offsets = [0, 0], sizes = [56, 448], strides = [1, 1]} : vector<128x448xf32> to vector<56x448xf32>
    %6 = vector.extract_strided_slice %4 {offsets = [8, 0], sizes = [56, 448], strides = [1, 1]} : vector<128x448xf32> to vector<56x448xf32>
    %7 = vector.extract_strided_slice %4 {offsets = [64, 0], sizes = [56, 448], strides = [1, 1]} : vector<128x448xf32> to vector<56x448xf32>
    %c0_4 = arith.constant 0 : index
    %c0_5 = arith.constant 0 : index
    %c0_6 = arith.constant 0 : index
    %8 = vector.load %arg3[%c0_4, %c0_5, %c0_6] : memref<3x448x448xf32, #tpu.memory_space<vmem>>, vector<1x448x448xf32>
    %9 = vector.shape_cast %8 : vector<1x448x448xf32> to vector<448x448xf32>
    %cst_7 = arith.constant dense<0.000000e+00> : vector<56x448xf32>
    %10 = tpu.matmul %5, %9, %cst_7 {dimension_numbers = #tpu.dot_dimension_numbers<[1], [0], [0], [1], [0, 0, 1, 1], [], []>} : vector<56x448xf32>, vector<448x448xf32>, vector<56x448xf32> -> vector<56x448xf32>
    %c1 = arith.constant 1 : index
    %c0_8 = arith.constant 0 : index
    %c0_9 = arith.constant 0 : index
    %11 = vector.load %arg3[%c1, %c0_8, %c0_9] : memref<3x448x448xf32, #tpu.memory_space<vmem>>, vector<1x448x448xf32>
    %12 = vector.shape_cast %11 : vector<1x448x448xf32> to vector<448x448xf32>
    %cst_10 = arith.constant dense<0.000000e+00> : vector<56x448xf32>
    %13 = tpu.matmul %7, %12, %cst_10 {dimension_numbers = #tpu.dot_dimension_numbers<[1], [0], [0], [1], [0, 0, 1, 1], [], []>} : vector<56x448xf32>, vector<448x448xf32>, vector<56x448xf32> -> vector<56x448xf32>
    %14 = arith.addf %10, %13 : vector<56x448xf32>
    %c2 = arith.constant 2 : index
    %c0_11 = arith.constant 0 : index
    %c0_12 = arith.constant 0 : index
    %15 = vector.load %arg3[%c2, %c0_11, %c0_12] : memref<3x448x448xf32, #tpu.memory_space<vmem>>, vector<1x448x448xf32>
    %16 = vector.shape_cast %15 : vector<1x448x448xf32> to vector<448x448xf32>
    %cst_13 = arith.constant dense<0.000000e+00> : vector<56x448xf32>
    %17 = tpu.matmul %6, %16, %cst_13 {dimension_numbers = #tpu.dot_dimension_numbers<[1], [0], [0], [1], [0, 0, 1, 1], [], []>} : vector<56x448xf32>, vector<448x448xf32>, vector<56x448xf32> -> vector<56x448xf32>
    %18 = arith.addf %14, %17 : vector<56x448xf32>
    %c0_14 = arith.constant 0 : index
    %c0_15 = arith.constant 0 : index
    %19 = vector.load %arg4[%c0_14, %c0_15] : memref<1x448xf32, #tpu.memory_space<vmem>>, vector<1x448xf32>
    %20 = vector.broadcast %19 : vector<1x448xf32> to vector<56x448xf32>
    %21 = arith.addf %18, %20 : vector<56x448xf32>
    %cst_16 = arith.constant 0.000000e+00 : f32
    %22 = vector.broadcast %cst_16 : f32 to vector<56x448xf32>
    %23 = arith.maximumf %21, %22 : vector<56x448xf32>
    %24 = vector.extract_strided_slice %23 {offsets = [0, 0], sizes = [8, 448], strides = [1, 1]} : vector<56x448xf32> to vector<8x448xf32>
    %c0_17 = arith.constant 0 : index
    %c0_18 = arith.constant 0 : index
    %c0_19 = arith.constant 0 : index
    %25 = vector.load %arg5[%c0_17, %c0_18, %c0_19] : memref<7x448x32xf32, #tpu.memory_space<vmem>>, vector<1x448x32xf32>
    %26 = vector.shape_cast %25 : vector<1x448x32xf32> to vector<448x32xf32>
    %cst_20 = arith.constant dense<0.000000e+00> : vector<8x32xf32>
    %27 = tpu.matmul %24, %26, %cst_20 {dimension_numbers = #tpu.dot_dimension_numbers<[1], [0], [0], [1], [0, 0, 1, 1], [], []>} : vector<8x448xf32>, vector<448x32xf32>, vector<8x32xf32> -> vector<8x32xf32>
    %28 = vector.extract_strided_slice %23 {offsets = [8, 0], sizes = [8, 448], strides = [1, 1]} : vector<56x448xf32> to vector<8x448xf32>
    %c1_21 = arith.constant 1 : index
    %c0_22 = arith.constant 0 : index
    %c0_23 = arith.constant 0 : index
    %29 = vector.load %arg5[%c1_21, %c0_22, %c0_23] : memref<7x448x32xf32, #tpu.memory_space<vmem>>, vector<1x448x32xf32>
    %30 = vector.shape_cast %29 : vector<1x448x32xf32> to vector<448x32xf32>
    %cst_24 = arith.constant dense<0.000000e+00> : vector<8x32xf32>
    %31 = tpu.matmul %28, %30, %cst_24 {dimension_numbers = #tpu.dot_dimension_numbers<[1], [0], [0], [1], [0, 0, 1, 1], [], []>} : vector<8x448xf32>, vector<448x32xf32>, vector<8x32xf32> -> vector<8x32xf32>
    %32 = arith.addf %27, %31 : vector<8x32xf32>
    %33 = vector.extract_strided_slice %23 {offsets = [16, 0], sizes = [8, 448], strides = [1, 1]} : vector<56x448xf32> to vector<8x448xf32>
    %c2_25 = arith.constant 2 : index
    %c0_26 = arith.constant 0 : index
    %c0_27 = arith.constant 0 : index
    %34 = vector.load %arg5[%c2_25, %c0_26, %c0_27] : memref<7x448x32xf32, #tpu.memory_space<vmem>>, vector<1x448x32xf32>
    %35 = vector.shape_cast %34 : vector<1x448x32xf32> to vector<448x32xf32>
    %cst_28 = arith.constant dense<0.000000e+00> : vector<8x32xf32>
    %36 = tpu.matmul %33, %35, %cst_28 {dimension_numbers = #tpu.dot_dimension_numbers<[1], [0], [0], [1], [0, 0, 1, 1], [], []>} : vector<8x448xf32>, vector<448x32xf32>, vector<8x32xf32> -> vector<8x32xf32>
    %37 = arith.addf %32, %36 : vector<8x32xf32>
    %38 = vector.extract_strided_slice %23 {offsets = [24, 0], sizes = [8, 448], strides = [1, 1]} : vector<56x448xf32> to vector<8x448xf32>
    %c3 = arith.constant 3 : index
    %c0_29 = arith.constant 0 : index
    %c0_30 = arith.constant 0 : index
    %39 = vector.load %arg5[%c3, %c0_29, %c0_30] : memref<7x448x32xf32, #tpu.memory_space<vmem>>, vector<1x448x32xf32>
    %40 = vector.shape_cast %39 : vector<1x448x32xf32> to vector<448x32xf32>
    %cst_31 = arith.constant dense<0.000000e+00> : vector<8x32xf32>
    %41 = tpu.matmul %38, %40, %cst_31 {dimension_numbers = #tpu.dot_dimension_numbers<[1], [0], [0], [1], [0, 0, 1, 1], [], []>} : vector<8x448xf32>, vector<448x32xf32>, vector<8x32xf32> -> vector<8x32xf32>
    %42 = arith.addf %37, %41 : vector<8x32xf32>
    %43 = vector.extract_strided_slice %23 {offsets = [32, 0], sizes = [8, 448], strides = [1, 1]} : vector<56x448xf32> to vector<8x448xf32>
    %c4 = arith.constant 4 : index
    %c0_32 = arith.constant 0 : index
    %c0_33 = arith.constant 0 : index
    %44 = vector.load %arg5[%c4, %c0_32, %c0_33] : memref<7x448x32xf32, #tpu.memory_space<vmem>>, vector<1x448x32xf32>
    %45 = vector.shape_cast %44 : vector<1x448x32xf32> to vector<448x32xf32>
    %cst_34 = arith.constant dense<0.000000e+00> : vector<8x32xf32>
    %46 = tpu.matmul %43, %45, %cst_34 {dimension_numbers = #tpu.dot_dimension_numbers<[1], [0], [0], [1], [0, 0, 1, 1], [], []>} : vector<8x448xf32>, vector<448x32xf32>, vector<8x32xf32> -> vector<8x32xf32>
    %47 = arith.addf %42, %46 : vector<8x32xf32>
    %48 = vector.extract_strided_slice %23 {offsets = [40, 0], sizes = [8, 448], strides = [1, 1]} : vector<56x448xf32> to vector<8x448xf32>
    %c5 = arith.constant 5 : index
    %c0_35 = arith.constant 0 : index
    %c0_36 = arith.constant 0 : index
    %49 = vector.load %arg5[%c5, %c0_35, %c0_36] : memref<7x448x32xf32, #tpu.memory_space<vmem>>, vector<1x448x32xf32>
    %50 = vector.shape_cast %49 : vector<1x448x32xf32> to vector<448x32xf32>
    %cst_37 = arith.constant dense<0.000000e+00> : vector<8x32xf32>
    %51 = tpu.matmul %48, %50, %cst_37 {dimension_numbers = #tpu.dot_dimension_numbers<[1], [0], [0], [1], [0, 0, 1, 1], [], []>} : vector<8x448xf32>, vector<448x32xf32>, vector<8x32xf32> -> vector<8x32xf32>
    %52 = arith.addf %47, %51 : vector<8x32xf32>
    %53 = vector.extract_strided_slice %23 {offsets = [48, 0], sizes = [8, 448], strides = [1, 1]} : vector<56x448xf32> to vector<8x448xf32>
    %c6 = arith.constant 6 : index
    %c0_38 = arith.constant 0 : index
    %c0_39 = arith.constant 0 : index
    %54 = vector.load %arg5[%c6, %c0_38, %c0_39] : memref<7x448x32xf32, #tpu.memory_space<vmem>>, vector<1x448x32xf32>
    %55 = vector.shape_cast %54 : vector<1x448x32xf32> to vector<448x32xf32>
    %cst_40 = arith.constant dense<0.000000e+00> : vector<8x32xf32>
    %56 = tpu.matmul %53, %55, %cst_40 {dimension_numbers = #tpu.dot_dimension_numbers<[1], [0], [0], [1], [0, 0, 1, 1], [], []>} : vector<8x448xf32>, vector<448x32xf32>, vector<8x32xf32> -> vector<8x32xf32>
    %57 = arith.addf %52, %56 : vector<8x32xf32>
    %c0_41 = arith.constant 0 : index
    %c0_42 = arith.constant 0 : index
    %58 = vector.load %arg6[%c0_41, %c0_42] : memref<1x32xf32, #tpu.memory_space<vmem>>, vector<1x32xf32>
    %59 = vector.broadcast %58 : vector<1x32xf32> to vector<8x32xf32>
    %60 = arith.addf %57, %59 : vector<8x32xf32>
    %cst_43 = arith.constant 0.000000e+00 : f32
    %61 = vector.broadcast %cst_43 : f32 to vector<8x32xf32>
    %62 = arith.maximumf %60, %61 : vector<8x32xf32>
    %c0_44 = arith.constant 0 : index
    %c0_45 = arith.constant 0 : index
    %63 = vector.load %arg7[%c0_44, %c0_45] : memref<32x320xf32, #tpu.memory_space<vmem>>, vector<32x320xf32>
    %cst_46 = arith.constant dense<0.000000e+00> : vector<8x320xf32>
    %64 = tpu.matmul %62, %63, %cst_46 {dimension_numbers = #tpu.dot_dimension_numbers<[1], [0], [0], [1], [0, 0, 1, 1], [], []>} : vector<8x32xf32>, vector<32x320xf32>, vector<8x320xf32> -> vector<8x320xf32>
    %c0_47 = arith.constant 0 : index
    %c0_48 = arith.constant 0 : index
    %65 = vector.load %arg8[%c0_47, %c0_48] : memref<1x320xf32, #tpu.memory_space<vmem>>, vector<1x320xf32>
    %66 = vector.broadcast %65 : vector<1x320xf32> to vector<8x320xf32>
    %67 = arith.addf %64, %66 : vector<8x320xf32>
    %c0_49 = arith.constant 0 : index
    %c0_50 = arith.constant 0 : index
    %68 = vector.load %arg9[%c0_49, %c0_50] : memref<8x320xf32, #tpu.memory_space<vmem>>, vector<8x320xf32>
    tpu.vector_store %arg9[%c0_49, %c0_50], %67 {strides = array<i32>} : memref<8x320xf32, #tpu.memory_space<vmem>>, vector<8x320xf32>,
    return
  }
  func.func @transform_0(%arg0: i32) -> (i32, i32) {
    %c0_i32 = arith.constant 0 : i32
    %c0_i32_0 = arith.constant 0 : i32
    return %arg0, %c0_i32 : i32, i32
  }
  func.func @transform_1(%arg0: i32) -> (i32, i32) {
    %c0_i32 = arith.constant 0 : i32
    %c0_i32_0 = arith.constant 0 : i32
    %c0_i32_1 = arith.constant 0 : i32
    return %c0_i32, %c0_i32_0 : i32, i32
  }
  func.func @transform_2(%arg0: i32) -> (i32, i32, i32) {
    %c0_i32 = arith.constant 0 : i32
    %c0_i32_0 = arith.constant 0 : i32
    %c0_i32_1 = arith.constant 0 : i32
    %c0_i32_2 = arith.constant 0 : i32
    return %c0_i32, %c0_i32_0, %c0_i32_1 : i32, i32, i32
  }
  func.func @transform_3(%arg0: i32) -> (i32, i32) {
    %c0_i32 = arith.constant 0 : i32
    %c0_i32_0 = arith.constant 0 : i32
    %c0_i32_1 = arith.constant 0 : i32
    return %c0_i32, %c0_i32_0 : i32, i32
  }
  func.func @transform_4(%arg0: i32) -> (i32, i32, i32) {
    %c0_i32 = arith.constant 0 : i32
    %c0_i32_0 = arith.constant 0 : i32
    %c0_i32_1 = arith.constant 0 : i32
    %c0_i32_2 = arith.constant 0 : i32
    return %c0_i32, %c0_i32_0, %c0_i32_1 : i32, i32, i32
  }
  func.func @transform_5(%arg0: i32) -> (i32, i32) {
    %c0_i32 = arith.constant 0 : i32
    %c0_i32_0 = arith.constant 0 : i32
    %c0_i32_1 = arith.constant 0 : i32
    return %c0_i32, %c0_i32_0 : i32, i32
  }
  func.func @transform_6(%arg0: i32) -> (i32, i32) {
    %c0_i32 = arith.constant 0 : i32
    %c0_i32_0 = arith.constant 0 : i32
    %c0_i32_1 = arith.constant 0 : i32
    return %c0_i32, %c0_i32_0 : i32, i32
  }
  func.func @transform_7(%arg0: i32) -> (i32, i32) {
    %c0_i32 = arith.constant 0 : i32
    %c0_i32_0 = arith.constant 0 : i32
    %c0_i32_1 = arith.constant 0 : i32
    return %c0_i32, %c0_i32_0 : i32, i32
  }
  func.func @transform_8(%arg0: i32) -> (i32, i32) {
    %c0_i32 = arith.constant 0 : i32
    %c0_i32_0 = arith.constant 0 : i32
    return %arg0, %c0_i32 : i32, i32
  }
}

</mosaic_0001>

<llo_original>
// kernel: encoder_forward.1
$region0: #{encoder_forward.1}
  #allocation0 [shape = 'u32[]', space=smem, size = 0x4, offset = 0x4, fixed_abs, tag = 'smem constant byte address 0x4 - core index']
  #allocation1 [shape = 'u32[72,128]{1,0:T(1,128)}', space=vmem, size = 0x9000, scoped, tag = 'internal scratch']
  %s0 = inlined_call_operand.vmem [shape: f32[128,91], index: 0, kind: input, shape index: {}]
  %s1 = inlined_call_operand.hbm [shape: f32[91,448], index: 1, kind: input, shape index: {}]
  %s2 = inlined_call_operand.vmem [shape: f32[3,448,448], index: 2, kind: input, shape index: {}]
  %s3 = inlined_call_operand.vmem [shape: f32[1,448], index: 3, kind: input, shape index: {}]
  %s4 = inlined_call_operand.vmem [shape: f32[7,448,32], index: 4, kind: input, shape index: {}]
  %s5 = inlined_call_operand.vmem [shape: f32[1,32], index: 5, kind: input, shape index: {}]
  %s6 = inlined_call_operand.vmem [shape: f32[32,320], index: 6, kind: input, shape index: {}]
  %s7 = inlined_call_operand.vmem [shape: f32[1,320], index: 7, kind: input, shape index: {}]
  %s8 = inlined_call_operand.vmem [shape: f32[8,320], index: 8, kind: output, shape index: {}]
  %s9 = sld [smem:[#allocation0]]
  $region46: #{encoder_forward.1} parent=0
    _
  %s11 = ssub.s32 1, %s9
  %s12 = scalar_select 0, %s11, %s9
  $region1: #{encoder_forward.1} parent=0
    #allocation2 [shape = 'u8[196608]{0}', space=vmem, size = 0x30000, scoped, tag = 'input window, operand 1, single buffered']
    #allocation3 [shape = 's32[1]{0}', space=sflag, size = 0x4, scoped, tag = 'scoped memory for encoder_forward.1']
    %13 = vsyncpa [#allocation3], 0
    // Predicated region
    $region2: #{encoder_forward.1} parent=1 // pred_check
      _
    $region3: #{encoder_forward.1} parent=1 // pred_check_branch
      %15 = sbr.rel (0) target = $region5
    $region4: #{encoder_forward.1} parent=1 // pred_region
      _
    $region5: #{encoder_forward.1} parent=1 // pred_fallthru
      _
    // Predicated region
    $region6: #{encoder_forward.1} parent=1 // pred_check
      _
    $region7: #{encoder_forward.1} parent=1 // pred_check_branch
      %17 = sbr.rel (0) target = $region9
    $region8: #{encoder_forward.1} parent=1 // pred_region
      %19 = vsyncadd [#allocation3], 0
      %s20 = sshll.u32 %s1, 4
      %s21 = int_to_ptr.hbm [resolvable:$true] %s20
      %s22 = sshll.u32 [#allocation2], 4
      %s23 = int_to_ptr.vmem [resolvable:$true] %s22
      %28 = dma.hbm_to_vmem [thread:$0]  %s21, 6144, %s23, [#allocation3], 512, 512, 32
    $region9: #{encoder_forward.1} parent=1 // pred_fallthru
      _
    // Predicated region
    $region10: #{encoder_forward.1} parent=1 // pred_check
      _
    $region11: #{encoder_forward.1} parent=1 // pred_check_branch
      %30 = sbr.rel (0) target = $region13
    $region12: #{encoder_forward.1} parent=1 // pred_region
      _
    $region13: #{encoder_forward.1} parent=1 // pred_fallthru
      _
    // Predicated region
    $region14: #{encoder_forward.1} parent=1 // pred_check
      _
    $region15: #{encoder_forward.1} parent=1 // pred_check_branch
      %32 = sbr.rel (0) target = $region17
    $region16: #{encoder_forward.1} parent=1 // pred_region
      _
    $region17: #{encoder_forward.1} parent=1 // pred_fallthru
      _
    // Predicated region
    $region18: #{encoder_forward.1} parent=1 // pred_check
      _
    $region19: #{encoder_forward.1} parent=1 // pred_check_branch
      %34 = sbr.rel (0) target = $region21
    $region20: #{encoder_forward.1} parent=1 // pred_region
      _
    $region21: #{encoder_forward.1} parent=1 // pred_fallthru
      _
    // Predicated region
    $region22: #{encoder_forward.1} parent=1 // pred_check
      _
    $region23: #{encoder_forward.1} parent=1 // pred_check_branch
      %36 = sbr.rel (0) target = $region25
    $region24: #{encoder_forward.1} parent=1 // pred_region
      _
    $region25: #{encoder_forward.1} parent=1 // pred_fallthru
      _
    // Predicated region
    $region26: #{encoder_forward.1} parent=1 // pred_check
      _
    $region27: #{encoder_forward.1} parent=1 // pred_check_branch
      %38 = sbr.rel (0) target = $region29
    $region28: #{encoder_forward.1} parent=1 // pred_region
      _
    $region29: #{encoder_forward.1} parent=1 // pred_fallthru
      _
    // Predicated region
    $region30: #{encoder_forward.1} parent=1 // pred_check
      _
    $region31: #{encoder_forward.1} parent=1 // pred_check_branch
      %40 = sbr.rel (0) target = $region33
    $region32: #{encoder_forward.1} parent=1 // pred_region
      _
    $region33: #{encoder_forward.1} parent=1 // pred_fallthru
      _
    // Predicated region
    $region34: #{encoder_forward.1} parent=1 // pred_check
      _
    $region35: #{encoder_forward.1} parent=1 // pred_check_branch
      %42 = sbr.rel (0) target = $region37
    $region36: #{encoder_forward.1} parent=1 // pred_region
      %44 = dma.done [#allocation3], 6144
    $region37: #{encoder_forward.1} parent=1 // pred_fallthru
      _
    %v45 = vld [vmem:[%s0] sm:$0xff]
    %v46 = vld [vmem:[%s0 + $0x8] sm:$0xff]
    %v47 = vld [vmem:[%s0 + $0x10] sm:$0xff]
    %v48 = vld [vmem:[%s0 + $0x18] sm:$0xff]
    %v49 = vld [vmem:[%s0 + $0x20] sm:$0xff]
    %v50 = vld [vmem:[%s0 + $0x28] sm:$0xff]
    %v51 = vld [vmem:[%s0 + $0x30] sm:$0xff]
    %v52 = vld [vmem:[%s0 + $0x38] sm:$0xff]
    %v53 = vld [vmem:[%s0 + $0x40] sm:$0xff]
    %v54 = vld [vmem:[%s0 + $0x48] sm:$0xff]
    %v55 = vld [vmem:[%s0 + $0x50] sm:$0xff]
    %v56 = vld [vmem:[%s0 + $0x58] sm:$0xff]
    %v57 = vld [vmem:[%s0 + $0x60] sm:$0xff]
    %v58 = vld [vmem:[%s0 + $0x68] sm:$0xff]
    %v59 = vld [vmem:[%s0 + $0x70] sm:$0xff]
    %v60 = vld [vmem:[%s0 + $0x78] sm:$0xff]
    %v61 = vld [vmem:[#allocation2] sm:$0xff]
    %v62 = vld [vmem:[#allocation2 + $0x8] sm:$0xff]
    %v63 = vld [vmem:[#allocation2 + $0x10] sm:$0xff]
    %v64 = vld [vmem:[#allocation2 + $0x18] sm:$0xff]
    %v65 = vld [vmem:[#allocation2 + $0x20] sm:$0xff]
    %v66 = vld [vmem:[#allocation2 + $0x28] sm:$0xff]
    %v67 = vld [vmem:[#allocation2 + $0x30] sm:$0xff]
    %v68 = vld [vmem:[#allocation2 + $0x38] sm:$0xff]
    %v69 = vld [vmem:[#allocation2 + $0x40] sm:$0xff]
    %v70 = vld [vmem:[#allocation2 + $0x48] sm:$0xff]
    %v71 = vld [vmem:[#allocation2 + $0x50] sm:$0xff]
    %v72 = vld [vmem:[#allocation2 + $0x58] sm:$0xff]
    %v73 = vld [vmem:[#allocation2 + $0x60] sm:$0xff]
    %v74 = vld [vmem:[#allocation2 + $0x68] sm:$0xff]
    %v75 = vld [vmem:[#allocation2 + $0x70] sm:$0xff]
    %v76 = vld [vmem:[#allocation2 + $0x78] sm:$0xff]
    %v77 = vld [vmem:[#allocation2 + $0x80] sm:$0xff]
    %v78 = vld [vmem:[#allocation2 + $0x88] sm:$0xff]
    %v79 = vld [vmem:[#allocation2 + $0x90] sm:$0xff]
    %v80 = vld [vmem:[#allocation2 + $0x98] sm:$0xff]
    %v81 = vld [vmem:[#allocation2 + $0xa0] sm:$0xff]
    %v82 = vld [vmem:[#allocation2 + $0xa8] sm:$0xff]
    %v83 = vld [vmem:[#allocation2 + $0xb0] sm:$0xff]
    %v84 = vld [vmem:[#allocation2 + $0xb8] sm:$0xff]
    %v85 = vld [vmem:[#allocation2 + $0xc0] sm:$0xff]
    %v86 = vld [vmem:[#allocation2 + $0xc8] sm:$0xff]
    %v87 = vld [vmem:[#allocation2 + $0xd0] sm:$0xff]
    %v88 = vld [vmem:[#allocation2 + $0xd8] sm:$0xff]
    %v89 = vld [vmem:[#allocation2 + $0xe0] sm:$0xff]
    %v90 = vld [vmem:[#allocation2 + $0xe8] sm:$0xff]
    %v91 = vld [vmem:[#allocation2 + $0xf0] sm:$0xff]
    %v92 = vld [vmem:[#allocation2 + $0xf8] sm:$0xff]
    %v93 = vld [vmem:[#allocation2 + $0x100] sm:$0xff]
    %v94 = vld [vmem:[#allocation2 + $0x108] sm:$0xff]
    %v95 = vld [vmem:[#allocation2 + $0x110] sm:$0xff]
    %v96 = vld [vmem:[#allocation2 + $0x118] sm:$0xff]
    %v97 = vld [vmem:[#allocation2 + $0x120] sm:$0xff]
    %v98 = vld [vmem:[#allocation2 + $0x128] sm:$0xff]
    %v99 = vld [vmem:[#allocation2 + $0x130] sm:$0xff]
    %v100 = vld [vmem:[#allocation2 + $0x138] sm:$0xff]
    %v101 = vld [vmem:[#allocation2 + $0x140] sm:$0xff]
    %v102 = vld [vmem:[#allocation2 + $0x148] sm:$0xff]
    %v103 = vld [vmem:[#allocation2 + $0x150] sm:$0xff]
    %v104 = vld [vmem:[#allocation2 + $0x158] sm:$0xff]
    %v105 = vld [vmem:[#allocation2 + $0x160] sm:$0x7]
    %v106 = vld [vmem:[#allocation2 + $0x168] sm:$0x7]
    %v107 = vld [vmem:[#allocation2 + $0x170] sm:$0x7]
    %v108 = vld [vmem:[#allocation2 + $0x178] sm:$0x7]
    %vm109 = vcmask 744448
    %v111 = vsel %vm109, %v45, 0
    %v114 = vsel %vm109, %v46, 0
    %v117 = vsel %vm109, %v47, 0
    %v120 = vsel %vm109, %v48, 0
    %v123 = vsel %vm109, %v49, 0
    %v126 = vsel %vm109, %v50, 0
    %v129 = vsel %vm109, %v51, 0
    %v132 = vsel %vm109, %v52, 0
    %v135 = vsel %vm109, %v53, 0
    %v138 = vsel %vm109, %v54, 0
    %v141 = vsel %vm109, %v55, 0
    %v144 = vsel %vm109, %v56, 0
    %v147 = vsel %vm109, %v57, 0
    %v150 = vsel %vm109, %v58, 0
    %v153 = vsel %vm109, %v59, 0
    %v156 = vsel %vm109, %v60, 0
    %vm158 = vcmask 1042432
    %v160 = vsel %vm158, %v105, 0
    %v163 = vsel %vm158, %v106, 0
    %v166 = vsel %vm158, %v107, 0
    %v169 = vsel %vm158, %v108, 0
    %171 = vmatpush.msra.mxu0 0.0
    %172 = vmatpush.msra.mxu0 0.0
    %173 = vmatpush.msra.mxu0 0.0
    %174 = vmatpush.msra.mxu0 0.0
    %175 = vmatpush.msra.mxu0 %v160
    %176 = vmatpush.msra.mxu0 %v101
    %177 = vmatpush.msra.mxu0 %v97
    %178 = vmatpush.msra.mxu0 %v93
    %179 = vmatpush.msra.mxu0 %v89
    %180 = vmatpush.msra.mxu0 %v85
    %181 = vmatpush.msra.mxu0 %v81
    %182 = vmatpush.msra.mxu0 %v77
    %183 = vmatpush.msra.mxu0 %v73
    %184 = vmatpush.msra.mxu0 %v69
    %185 = vmatpush.msra.mxu0 %v65
    %186 = vmatpush.msra.mxu0 %v61
    %187 = vmatmul.f32.gmra.mxu0 %v111
    %v188 = vpop.f32.mrf.mxu0
    %v189 = vadd.f32 0.0, %v188
    %190 = vmatmul.f32.gmra.mxu0 %v114
    %v191 = vpop.f32.mrf.mxu0
    %v192 = vadd.f32 0.0, %v191
    %193 = vmatmul.f32.gmra.mxu0 %v117
    %v194 = vpop.f32.mrf.mxu0
    %v195 = vadd.f32 0.0, %v194
    %196 = vmatmul.f32.gmra.mxu0 %v120
    %v197 = vpop.f32.mrf.mxu0
    %v198 = vadd.f32 0.0, %v197
    %199 = vmatmul.f32.gmra.mxu0 %v123
    %v200 = vpop.f32.mrf.mxu0
    %v201 = vadd.f32 0.0, %v200
    %202 = vmatmul.f32.gmra.mxu0 %v126
    %v203 = vpop.f32.mrf.mxu0
    %v204 = vadd.f32 0.0, %v203
    %205 = vmatmul.f32.gmra.mxu0 %v129
    %v206 = vpop.f32.mrf.mxu0
    %v207 = vadd.f32 0.0, %v206
    %208 = vmatmul.f32.gmra.mxu0 %v132
    %v209 = vpop.f32.mrf.mxu0
    %v210 = vadd.f32 0.0, %v209
    %211 = vmatmul.f32.gmra.mxu0 %v135
    %v212 = vpop.f32.mrf.mxu0
    %v213 = vadd.f32 0.0, %v212
    %214 = vmatmul.f32.gmra.mxu0 %v138
    %v215 = vpop.f32.mrf.mxu0
    %v216 = vadd.f32 0.0, %v215
    %217 = vmatmul.f32.gmra.mxu0 %v141
    %v218 = vpop.f32.mrf.mxu0
    %v219 = vadd.f32 0.0, %v218
    %220 = vmatmul.f32.gmra.mxu0 %v144
    %v221 = vpop.f32.mrf.mxu0
    %v222 = vadd.f32 0.0, %v221
    %223 = vmatmul.f32.gmra.mxu0 %v147
    %v224 = vpop.f32.mrf.mxu0
    %v225 = vadd.f32 0.0, %v224
    %226 = vmatmul.f32.gmra.mxu0 %v150
    %v227 = vpop.f32.mrf.mxu0
    %v228 = vadd.f32 0.0, %v227
    %229 = vmatmul.f32.gmra.mxu0 %v153
    %v230 = vpop.f32.mrf.mxu0
    %v231 = vadd.f32 0.0, %v230
    %232 = vmatmul.f32.gmra.mxu0 %v156
    %v233 = vpop.f32.mrf.mxu0
    %234 = vdwg.mxu0
    %235 = vmatpush.msra.mxu0 0.0
    %236 = vmatpush.msra.mxu0 0.0
    %237 = vmatpush.msra.mxu0 0.0
    %238 = vmatpush.msra.mxu0 0.0
    %239 = vmatpush.msra.mxu0 %v163
    %240 = vmatpush.msra.mxu0 %v102
    %241 = vmatpush.msra.mxu0 %v98
    %242 = vmatpush.msra.mxu0 %v94
    %243 = vmatpush.msra.mxu0 %v90
    %244 = vmatpush.msra.mxu0 %v86
    %245 = vmatpush.msra.mxu0 %v82
    %246 = vmatpush.msra.mxu0 %v78
    %247 = vmatpush.msra.mxu0 %v74
    %248 = vmatpush.msra.mxu0 %v70
    %249 = vmatpush.msra.mxu0 %v66
    %250 = vmatpush.msra.mxu0 %v62
    %251 = vmatmul.f32.gmra.mxu0 %v111
    %v252 = vpop.f32.mrf.mxu0
    %v253 = vadd.f32 0.0, %v252
    %254 = vmatmul.f32.gmra.mxu0 %v114
    %v255 = vpop.f32.mrf.mxu0
    %v256 = vadd.f32 0.0, %v255
    %257 = vmatmul.f32.gmra.mxu0 %v117
    %v258 = vpop.f32.mrf.mxu0
    %v259 = vadd.f32 0.0, %v258
    %260 = vmatmul.f32.gmra.mxu0 %v120
    %v261 = vpop.f32.mrf.mxu0
    %v262 = vadd.f32 0.0, %v261
    %263 = vmatmul.f32.gmra.mxu0 %v123
    %v264 = vpop.f32.mrf.mxu0
    %v265 = vadd.f32 0.0, %v264
    %266 = vmatmul.f32.gmra.mxu0 %v126
    %v267 = vpop.f32.mrf.mxu0
    %v268 = vadd.f32 0.0, %v267
    %269 = vmatmul.f32.gmra.mxu0 %v129
    %v270 = vpop.f32.mrf.mxu0
    %v271 = vadd.f32 0.0, %v270
    %272 = vmatmul.f32.gmra.mxu0 %v132
    %v273 = vpop.f32.mrf.mxu0
    %v274 = vadd.f32 0.0, %v273
    %275 = vmatmul.f32.gmra.mxu0 %v135
    %v276 = vpop.f32.mrf.mxu0
    %v277 = vadd.f32 0.0, %v276
    %278 = vmatmul.f32.gmra.mxu0 %v138
    %v279 = vpop.f32.mrf.mxu0
    %v280 = vadd.f32 0.0, %v279
    %281 = vmatmul.f32.gmra.mxu0 %v141
    %v282 = vpop.f32.mrf.mxu0
    %v283 = vadd.f32 0.0, %v282
    %284 = vmatmul.f32.gmra.mxu0 %v144
    %v285 = vpop.f32.mrf.mxu0
    %v286 = vadd.f32 0.0, %v285
    %287 = vmatmul.f32.gmra.mxu0 %v147
    %v288 = vpop.f32.mrf.mxu0
    %v289 = vadd.f32 0.0, %v288
    %290 = vmatmul.f32.gmra.mxu0 %v150
    %v291 = vpop.f32.mrf.mxu0
    %v292 = vadd.f32 0.0, %v291
    %293 = vmatmul.f32.gmra.mxu0 %v153
    %v294 = vpop.f32.mrf.mxu0
    %v295 = vadd.f32 0.0, %v294
    %296 = vmatmul.f32.gmra.mxu0 %v156
    %v297 = vpop.f32.mrf.mxu0
    %298 = vdwg.mxu0
    %299 = vmatpush.msra.mxu0 0.0
    %300 = vmatpush.msra.mxu0 0.0
    %301 = vmatpush.msra.mxu0 0.0
    %302 = vmatpush.msra.mxu0 0.0
    %303 = vmatpush.msra.mxu0 %v166
    %304 = vmatpush.msra.mxu0 %v103
    %305 = vmatpush.msra.mxu0 %v99
    %306 = vmatpush.msra.mxu0 %v95
    %307 = vmatpush.msra.mxu0 %v91
    %308 = vmatpush.msra.mxu0 %v87
    %309 = vmatpush.msra.mxu0 %v83
    %310 = vmatpush.msra.mxu0 %v79
    %311 = vmatpush.msra.mxu0 %v75
    %312 = vmatpush.msra.mxu0 %v71
    %313 = vmatpush.msra.mxu0 %v67
    %314 = vmatpush.msra.mxu0 %v63
    %315 = vmatmul.f32.gmra.mxu0 %v111
    %v316 = vpop.f32.mrf.mxu0
    %v317 = vadd.f32 0.0, %v316
    %318 = vmatmul.f32.gmra.mxu0 %v114
    %v319 = vpop.f32.mrf.mxu0
    %v320 = vadd.f32 0.0, %v319
    %321 = vmatmul.f32.gmra.mxu0 %v117
    %v322 = vpop.f32.mrf.mxu0
    %v323 = vadd.f32 0.0, %v322
    %324 = vmatmul.f32.gmra.mxu0 %v120
    %v325 = vpop.f32.mrf.mxu0
    %v326 = vadd.f32 0.0, %v325
    %327 = vmatmul.f32.gmra.mxu0 %v123
    %v328 = vpop.f32.mrf.mxu0
    %v329 = vadd.f32 0.0, %v328
    %330 = vmatmul.f32.gmra.mxu0 %v126
    %v331 = vpop.f32.mrf.mxu0
    %v332 = vadd.f32 0.0, %v331
    %333 = vmatmul.f32.gmra.mxu0 %v129
    %v334 = vpop.f32.mrf.mxu0
    %v335 = vadd.f32 0.0, %v334
    %336 = vmatmul.f32.gmra.mxu0 %v132
    %v337 = vpop.f32.mrf.mxu0
    %v338 = vadd.f32 0.0, %v337
    %339 = vmatmul.f32.gmra.mxu0 %v135
    %v340 = vpop.f32.mrf.mxu0
    %v341 = vadd.f32 0.0, %v340
    %342 = vmatmul.f32.gmra.mxu0 %v138
    %v343 = vpop.f32.mrf.mxu0
    %v344 = vadd.f32 0.0, %v343
    %345 = vmatmul.f32.gmra.mxu0 %v141
    %v346 = vpop.f32.mrf.mxu0
    %v347 = vadd.f32 0.0, %v346
    %348 = vmatmul.f32.gmra.mxu0 %v144
    %v349 = vpop.f32.mrf.mxu0
    %v350 = vadd.f32 0.0, %v349
    %351 = vmatmul.f32.gmra.mxu0 %v147
    %v352 = vpop.f32.mrf.mxu0
    %v353 = vadd.f32 0.0, %v352
    %354 = vmatmul.f32.gmra.mxu0 %v150
    %v355 = vpop.f32.mrf.mxu0
    %v356 = vadd.f32 0.0, %v355
    %357 = vmatmul.f32.gmra.mxu0 %v153
    %v358 = vpop.f32.mrf.mxu0
    %v359 = vadd.f32 0.0, %v358
    %360 = vmatmul.f32.gmra.mxu0 %v156
    %v361 = vpop.f32.mrf.mxu0
    %362 = vdwg.mxu0
    %363 = vmatpush.msra.mxu0 0.0
    %364 = vmatpush.msra.mxu0 0.0
    %365 = vmatpush.msra.mxu0 0.0
    %366 = vmatpush.msra.mxu0 0.0
    %367 = vmatpush.msra.mxu0 %v169
    %368 = vmatpush.msra.mxu0 %v104
    %369 = vmatpush.msra.mxu0 %v100
    %370 = vmatpush.msra.mxu0 %v96
    %371 = vmatpush.msra.mxu0 %v92
    %372 = vmatpush.msra.mxu0 %v88
    %373 = vmatpush.msra.mxu0 %v84
    %374 = vmatpush.msra.mxu0 %v80
    %375 = vmatpush.msra.mxu0 %v76
    %376 = vmatpush.msra.mxu0 %v72
    %377 = vmatpush.msra.mxu0 %v68
    %378 = vmatpush.msra.mxu0 %v64
    %379 = vmatmul.f32.gmra.mxu0 %v111
    %v380 = vpop.f32.mrf.mxu0
    %v381 = vadd.f32 0.0, %v380
    %382 = vmatmul.f32.gmra.mxu0 %v114
    %v383 = vpop.f32.mrf.mxu0
    %v384 = vadd.f32 0.0, %v383
    %385 = vmatmul.f32.gmra.mxu0 %v117
    %v386 = vpop.f32.mrf.mxu0
    %v387 = vadd.f32 0.0, %v386
    %388 = vmatmul.f32.gmra.mxu0 %v120
    %v389 = vpop.f32.mrf.mxu0
    %v390 = vadd.f32 0.0, %v389
    %391 = vmatmul.f32.gmra.mxu0 %v123
    %v392 = vpop.f32.mrf.mxu0
    %v393 = vadd.f32 0.0, %v392
    %394 = vmatmul.f32.gmra.mxu0 %v126
    %v395 = vpop.f32.mrf.mxu0
    %v396 = vadd.f32 0.0, %v395
    %397 = vmatmul.f32.gmra.mxu0 %v129
    %v398 = vpop.f32.mrf.mxu0
    %v399 = vadd.f32 0.0, %v398
    %400 = vmatmul.f32.gmra.mxu0 %v132
    %v401 = vpop.f32.mrf.mxu0
    %v402 = vadd.f32 0.0, %v401
    %403 = vmatmul.f32.gmra.mxu0 %v135
    %v404 = vpop.f32.mrf.mxu0
    %v405 = vadd.f32 0.0, %v404
    %406 = vmatmul.f32.gmra.mxu0 %v138
    %v407 = vpop.f32.mrf.mxu0
    %v408 = vadd.f32 0.0, %v407
    %409 = vmatmul.f32.gmra.mxu0 %v141
    %v410 = vpop.f32.mrf.mxu0
    %v411 = vadd.f32 0.0, %v410
    %412 = vmatmul.f32.gmra.mxu0 %v144
    %v413 = vpop.f32.mrf.mxu0
    %v414 = vadd.f32 0.0, %v413
    %415 = vmatmul.f32.gmra.mxu0 %v147
    %v416 = vpop.f32.mrf.mxu0
    %v417 = vadd.f32 0.0, %v416
    %418 = vmatmul.f32.gmra.mxu0 %v150
    %v419 = vpop.f32.mrf.mxu0
    %v420 = vadd.f32 0.0, %v419
    %421 = vmatmul.f32.gmra.mxu0 %v153
    %v422 = vpop.f32.mrf.mxu0
    %v423 = vadd.f32 0.0, %v422
    %424 = vmatmul.f32.gmra.mxu0 %v156
    %v425 = vpop.f32.mrf.mxu0
    %426 = vdwg.mxu0
    %v427 = vmax.f32 %v189, 0.0
    %v428 = vmax.f32 %v253, 0.0
    %v429 = vmax.f32 %v317, 0.0
    %v430 = vmax.f32 %v381, 0.0
    %v431 = vmax.f32 %v192, 0.0
    %v432 = vmax.f32 %v256, 0.0
    %v433 = vmax.f32 %v320, 0.0
    %v434 = vmax.f32 %v384, 0.0
    %v435 = vmax.f32 %v195, 0.0
    %v436 = vmax.f32 %v259, 0.0
    %v437 = vmax.f32 %v323, 0.0
    %v438 = vmax.f32 %v387, 0.0
    %v439 = vmax.f32 %v198, 0.0
    %v440 = vmax.f32 %v262, 0.0
    %v441 = vmax.f32 %v326, 0.0
    %v442 = vmax.f32 %v390, 0.0
    %v443 = vmax.f32 %v201, 0.0
    %v444 = vmax.f32 %v265, 0.0
    %v445 = vmax.f32 %v329, 0.0
    %v446 = vmax.f32 %v393, 0.0
    %v447 = vmax.f32 %v204, 0.0
    %v448 = vmax.f32 %v268, 0.0
    %v449 = vmax.f32 %v332, 0.0
    %v450 = vmax.f32 %v396, 0.0
    %v451 = vmax.f32 %v207, 0.0
    %v452 = vmax.f32 %v271, 0.0
    %v453 = vmax.f32 %v335, 0.0
    %v454 = vmax.f32 %v399, 0.0
    %v455 = vmax.f32 %v210, 0.0
    %v456 = vmax.f32 %v274, 0.0
    %v457 = vmax.f32 %v338, 0.0
    %v458 = vmax.f32 %v402, 0.0
    %v459 = vmax.f32 %v213, 0.0
    %v460 = vmax.f32 %v277, 0.0
    %v461 = vmax.f32 %v341, 0.0
    %v462 = vmax.f32 %v405, 0.0
    %v463 = vmax.f32 %v216, 0.0
    %v464 = vmax.f32 %v280, 0.0
    %v465 = vmax.f32 %v344, 0.0
    %v466 = vmax.f32 %v408, 0.0
    %v467 = vmax.f32 %v219, 0.0
    %v468 = vmax.f32 %v283, 0.0
    %v469 = vmax.f32 %v347, 0.0
    %v470 = vmax.f32 %v411, 0.0
    %v471 = vmax.f32 %v222, 0.0
    %v472 = vmax.f32 %v286, 0.0
    %v473 = vmax.f32 %v350, 0.0
    %v474 = vmax.f32 %v414, 0.0
    %v475 = vmax.f32 %v225, 0.0
    %v476 = vmax.f32 %v289, 0.0
    %v477 = vmax.f32 %v353, 0.0
    %v478 = vmax.f32 %v417, 0.0
    %v479 = vmax.f32 %v228, 0.0
    %v480 = vmax.f32 %v292, 0.0
    %v481 = vmax.f32 %v356, 0.0
    %v482 = vmax.f32 %v420, 0.0
    %v483 = vmax.f32 %v231, 0.0
    %v484 = vmax.f32 %v295, 0.0
    %v485 = vmax.f32 %v359, 0.0
    %v486 = vmax.f32 %v423, 0.0
    %v487 = vld [vmem:[%s2] sm:$0xff]
    %v488 = vld [vmem:[%s2 + $0x8] sm:$0xff]
    %v489 = vld [vmem:[%s2 + $0x10] sm:$0xff]
    %v490 = vld [vmem:[%s2 + $0x18] sm:$0xff]
    %v491 = vld [vmem:[%s2 + $0x20] sm:$0xff]
    %v492 = vld [vmem:[%s2 + $0x28] sm:$0xff]
    %v493 = vld [vmem:[%s2 + $0x30] sm:$0xff]
    %v494 = vld [vmem:[%s2 + $0x38] sm:$0xff]
    %v495 = vld [vmem:[%s2 + $0x40] sm:$0xff]
    %v496 = vld [vmem:[%s2 + $0x48] sm:$0xff]
    %v497 = vld [vmem:[%s2 + $0x50] sm:$0xff]
    %v498 = vld [vmem:[%s2 + $0x58] sm:$0xff]
    %v499 = vld [vmem:[%s2 + $0x60] sm:$0xff]
    %v500 = vld [vmem:[%s2 + $0x68] sm:$0xff]
    %v501 = vld [vmem:[%s2 + $0x70] sm:$0xff]
    %v502 = vld [vmem:[%s2 + $0x78] sm:$0xff]
    %v503 = vld [vmem:[%s2 + $0x80] sm:$0xff]
    %v504 = vld [vmem:[%s2 + $0x88] sm:$0xff]
    %v505 = vld [vmem:[%s2 + $0x90] sm:$0xff]
    %v506 = vld [vmem:[%s2 + $0x98] sm:$0xff]
    %v507 = vld [vmem:[%s2 + $0xa0] sm:$0xff]
    %v508 = vld [vmem:[%s2 + $0xa8] sm:$0xff]
    %v509 = vld [vmem:[%s2 + $0xb0] sm:$0xff]
    %v510 = vld [vmem:[%s2 + $0xb8] sm:$0xff]
    %v511 = vld [vmem:[%s2 + $0xc0] sm:$0xff]
    %v512 = vld [vmem:[%s2 + $0xc8] sm:$0xff]
    %v513 = vld [vmem:[%s2 + $0xd0] sm:$0xff]
    %v514 = vld [vmem:[%s2 + $0xd8] sm:$0xff]
    %v515 = vld [vmem:[%s2 + $0xe0] sm:$0xff]
    %v516 = vld [vmem:[%s2 + $0xe8] sm:$0xff]
    %v517 = vld [vmem:[%s2 + $0xf0] sm:$0xff]
    %v518 = vld [vmem:[%s2 + $0xf8] sm:$0xff]
    %v519 = vld [vmem:[%s2 + $0x100] sm:$0xff]
    %v520 = vld [vmem:[%s2 + $0x108] sm:$0xff]
    %v521 = vld [vmem:[%s2 + $0x110] sm:$0xff]
    %v522 = vld [vmem:[%s2 + $0x118] sm:$0xff]
    %v523 = vld [vmem:[%s2 + $0x120] sm:$0xff]
    %v524 = vld [vmem:[%s2 + $0x128] sm:$0xff]
    %v525 = vld [vmem:[%s2 + $0x130] sm:$0xff]
    %v526 = vld [vmem:[%s2 + $0x138] sm:$0xff]
    %v527 = vld [vmem:[%s2 + $0x140] sm:$0xff]
    %v528 = vld [vmem:[%s2 + $0x148] sm:$0xff]
    %v529 = vld [vmem:[%s2 + $0x150] sm:$0xff]
    %v530 = vld [vmem:[%s2 + $0x158] sm:$0xff]
    %v531 = vld [vmem:[%s2 + $0x160] sm:$0xff]
    %v532 = vld [vmem:[%s2 + $0x168] sm:$0xff]
    %v533 = vld [vmem:[%s2 + $0x170] sm:$0xff]
    %v534 = vld [vmem:[%s2 + $0x178] sm:$0xff]
    %v535 = vld [vmem:[%s2 + $0x180] sm:$0xff]
    %v536 = vld [vmem:[%s2 + $0x188] sm:$0xff]
    %v537 = vld [vmem:[%s2 + $0x190] sm:$0xff]
    %v538 = vld [vmem:[%s2 + $0x198] sm:$0xff]
    %v539 = vld [vmem:[%s2 + $0x1a0] sm:$0xff]
    %v540 = vld [vmem:[%s2 + $0x1a8] sm:$0xff]
    %v541 = vld [vmem:[%s2 + $0x1b0] sm:$0xff]
    %v542 = vld [vmem:[%s2 + $0x1b8] sm:$0xff]
    %v543 = vld [vmem:[%s2 + $0x1c0] sm:$0xff]
    %v544 = vld [vmem:[%s2 + $0x1c8] sm:$0xff]
    %v545 = vld [vmem:[%s2 + $0x1d0] sm:$0xff]
    %v546 = vld [vmem:[%s2 + $0x1d8] sm:$0xff]
    %v547 = vld [vmem:[%s2 + $0x1e0] sm:$0xff]
    %v548 = vld [vmem:[%s2 + $0x1e8] sm:$0xff]
    %v549 = vld [vmem:[%s2 + $0x1f0] sm:$0xff]
    %v550 = vld [vmem:[%s2 + $0x1f8] sm:$0xff]
    %v551 = vld [vmem:[%s2 + $0x200] sm:$0xff]
    %v552 = vld [vmem:[%s2 + $0x208] sm:$0xff]
    %v553 = vld [vmem:[%s2 + $0x210] sm:$0xff]
    %v554 = vld [vmem:[%s2 + $0x218] sm:$0xff]
    %v555 = vld [vmem:[%s2 + $0x220] sm:$0xff]
    %v556 = vld [vmem:[%s2 + $0x228] sm:$0xff]
    %v557 = vld [vmem:[%s2 + $0x230] sm:$0xff]
    %v558 = vld [vmem:[%s2 + $0x238] sm:$0xff]
    %v559 = vld [vmem:[%s2 + $0x240] sm:$0xff]
    %v560 = vld [vmem:[%s2 + $0x248] sm:$0xff]
    %v561 = vld [vmem:[%s2 + $0x250] sm:$0xff]
    %v562 = vld [vmem:[%s2 + $0x258] sm:$0xff]
    %v563 = vld [vmem:[%s2 + $0x260] sm:$0xff]
    %v564 = vld [vmem:[%s2 + $0x268] sm:$0xff]
    %v565 = vld [vmem:[%s2 + $0x270] sm:$0xff]
    %v566 = vld [vmem:[%s2 + $0x278] sm:$0xff]
    %v567 = vld [vmem:[%s2 + $0x280] sm:$0xff]
    %v568 = vld [vmem:[%s2 + $0x288] sm:$0xff]
    %v569 = vld [vmem:[%s2 + $0x290] sm:$0xff]
    %v570 = vld [vmem:[%s2 + $0x298] sm:$0xff]
    %v571 = vld [vmem:[%s2 + $0x2a0] sm:$0xff]
    %v572 = vld [vmem:[%s2 + $0x2a8] sm:$0xff]
    %v573 = vld [vmem:[%s2 + $0x2b0] sm:$0xff]
    %v574 = vld [vmem:[%s2 + $0x2b8] sm:$0xff]
    %v575 = vld [vmem:[%s2 + $0x2c0] sm:$0xff]
    %v576 = vld [vmem:[%s2 + $0x2c8] sm:$0xff]
    %v577 = vld [vmem:[%s2 + $0x2d0] sm:$0xff]
    %v578 = vld [vmem:[%s2 + $0x2d8] sm:$0xff]
    %v579 = vld [vmem:[%s2 + $0x2e0] sm:$0xff]
    %v580 = vld [vmem:[%s2 + $0x2e8] sm:$0xff]
    %v581 = vld [vmem:[%s2 + $0x2f0] sm:$0xff]
    %v582 = vld [vmem:[%s2 + $0x2f8] sm:$0xff]
    %v583 = vld [vmem:[%s2 + $0x300] sm:$0xff]
    %v584 = vld [vmem:[%s2 + $0x308] sm:$0xff]
    %v585 = vld [vmem:[%s2 + $0x310] sm:$0xff]
    %v586 = vld [vmem:[%s2 + $0x318] sm:$0xff]
    %v587 = vld [vmem:[%s2 + $0x320] sm:$0xff]
    %v588 = vld [vmem:[%s2 + $0x328] sm:$0xff]
    %v589 = vld [vmem:[%s2 + $0x330] sm:$0xff]
    %v590 = vld [vmem:[%s2 + $0x338] sm:$0xff]
    %v591 = vld [vmem:[%s2 + $0x340] sm:$0xff]
    %v592 = vld [vmem:[%s2 + $0x348] sm:$0xff]
    %v593 = vld [vmem:[%s2 + $0x350] sm:$0xff]
    %v594 = vld [vmem:[%s2 + $0x358] sm:$0xff]
    %v595 = vld [vmem:[%s2 + $0x360] sm:$0xff]
    %v596 = vld [vmem:[%s2 + $0x368] sm:$0xff]
    %v597 = vld [vmem:[%s2 + $0x370] sm:$0xff]
    %v598 = vld [vmem:[%s2 + $0x378] sm:$0xff]
    %v599 = vld [vmem:[%s2 + $0x380] sm:$0xff]
    %v600 = vld [vmem:[%s2 + $0x388] sm:$0xff]
    %v601 = vld [vmem:[%s2 + $0x390] sm:$0xff]
    %v602 = vld [vmem:[%s2 + $0x398] sm:$0xff]
    %v603 = vld [vmem:[%s2 + $0x3a0] sm:$0xff]
    %v604 = vld [vmem:[%s2 + $0x3a8] sm:$0xff]
    %v605 = vld [vmem:[%s2 + $0x3b0] sm:$0xff]
    %v606 = vld [vmem:[%s2 + $0x3b8] sm:$0xff]
    %v607 = vld [vmem:[%s2 + $0x3c0] sm:$0xff]
    %v608 = vld [vmem:[%s2 + $0x3c8] sm:$0xff]
    %v609 = vld [vmem:[%s2 + $0x3d0] sm:$0xff]
    %v610 = vld [vmem:[%s2 + $0x3d8] sm:$0xff]
    %v611 = vld [vmem:[%s2 + $0x3e0] sm:$0xff]
    %v612 = vld [vmem:[%s2 + $0x3e8] sm:$0xff]
    %v613 = vld [vmem:[%s2 + $0x3f0] sm:$0xff]
    %v614 = vld [vmem:[%s2 + $0x3f8] sm:$0xff]
    %v615 = vld [vmem:[%s2 + $0x400] sm:$0xff]
    %v616 = vld [vmem:[%s2 + $0x408] sm:$0xff]
    %v617 = vld [vmem:[%s2 + $0x410] sm:$0xff]
    %v618 = vld [vmem:[%s2 + $0x418] sm:$0xff]
    %v619 = vld [vmem:[%s2 + $0x420] sm:$0xff]
    %v620 = vld [vmem:[%s2 + $0x428] sm:$0xff]
    %v621 = vld [vmem:[%s2 + $0x430] sm:$0xff]
    %v622 = vld [vmem:[%s2 + $0x438] sm:$0xff]
    %v623 = vld [vmem:[%s2 + $0x440] sm:$0xff]
    %v624 = vld [vmem:[%s2 + $0x448] sm:$0xff]
    %v625 = vld [vmem:[%s2 + $0x450] sm:$0xff]
    %v626 = vld [vmem:[%s2 + $0x458] sm:$0xff]
    %v627 = vld [vmem:[%s2 + $0x460] sm:$0xff]
    %v628 = vld [vmem:[%s2 + $0x468] sm:$0xff]
    %v629 = vld [vmem:[%s2 + $0x470] sm:$0xff]
    %v630 = vld [vmem:[%s2 + $0x478] sm:$0xff]
    %v631 = vld [vmem:[%s2 + $0x480] sm:$0xff]
    %v632 = vld [vmem:[%s2 + $0x488] sm:$0xff]
    %v633 = vld [vmem:[%s2 + $0x490] sm:$0xff]
    %v634 = vld [vmem:[%s2 + $0x498] sm:$0xff]
    %v635 = vld [vmem:[%s2 + $0x4a0] sm:$0xff]
    %v636 = vld [vmem:[%s2 + $0x4a8] sm:$0xff]
    %v637 = vld [vmem:[%s2 + $0x4b0] sm:$0xff]
    %v638 = vld [vmem:[%s2 + $0x4b8] sm:$0xff]
    %v639 = vld [vmem:[%s2 + $0x4c0] sm:$0xff]
    %v640 = vld [vmem:[%s2 + $0x4c8] sm:$0xff]
    %v641 = vld [vmem:[%s2 + $0x4d0] sm:$0xff]
    %v642 = vld [vmem:[%s2 + $0x4d8] sm:$0xff]
    %v643 = vld [vmem:[%s2 + $0x4e0] sm:$0xff]
    %v644 = vld [vmem:[%s2 + $0x4e8] sm:$0xff]
    %v645 = vld [vmem:[%s2 + $0x4f0] sm:$0xff]
    %v646 = vld [vmem:[%s2 + $0x4f8] sm:$0xff]
    %v647 = vld [vmem:[%s2 + $0x500] sm:$0xff]
    %v648 = vld [vmem:[%s2 + $0x508] sm:$0xff]
    %v649 = vld [vmem:[%s2 + $0x510] sm:$0xff]
    %v650 = vld [vmem:[%s2 + $0x518] sm:$0xff]
    %v651 = vld [vmem:[%s2 + $0x520] sm:$0xff]
    %v652 = vld [vmem:[%s2 + $0x528] sm:$0xff]
    %v653 = vld [vmem:[%s2 + $0x530] sm:$0xff]
    %v654 = vld [vmem:[%s2 + $0x538] sm:$0xff]
    %v655 = vld [vmem:[%s2 + $0x540] sm:$0xff]
    %v656 = vld [vmem:[%s2 + $0x548] sm:$0xff]
    %v657 = vld [vmem:[%s2 + $0x550] sm:$0xff]
    %v658 = vld [vmem:[%s2 + $0x558] sm:$0xff]
    %v659 = vld [vmem:[%s2 + $0x560] sm:$0xff]
    %v660 = vld [vmem:[%s2 + $0x568] sm:$0xff]
    %v661 = vld [vmem:[%s2 + $0x570] sm:$0xff]
    %v662 = vld [vmem:[%s2 + $0x578] sm:$0xff]
    %v663 = vld [vmem:[%s2 + $0x580] sm:$0xff]
    %v664 = vld [vmem:[%s2 + $0x588] sm:$0xff]
    %v665 = vld [vmem:[%s2 + $0x590] sm:$0xff]
    %v666 = vld [vmem:[%s2 + $0x598] sm:$0xff]
    %v667 = vld [vmem:[%s2 + $0x5a0] sm:$0xff]
    %v668 = vld [vmem:[%s2 + $0x5a8] sm:$0xff]
    %v669 = vld [vmem:[%s2 + $0x5b0] sm:$0xff]
    %v670 = vld [vmem:[%s2 + $0x5b8] sm:$0xff]
    %v671 = vld [vmem:[%s2 + $0x5c0] sm:$0xff]
    %v672 = vld [vmem:[%s2 + $0x5c8] sm:$0xff]
    %v673 = vld [vmem:[%s2 + $0x5d0] sm:$0xff]
    %v674 = vld [vmem:[%s2 + $0x5d8] sm:$0xff]
    %v675 = vld [vmem:[%s2 + $0x5e0] sm:$0xff]
    %v676 = vld [vmem:[%s2 + $0x5e8] sm:$0xff]
    %v677 = vld [vmem:[%s2 + $0x5f0] sm:$0xff]
    %v678 = vld [vmem:[%s2 + $0x5f8] sm:$0xff]
    %v679 = vld [vmem:[%s2 + $0x600] sm:$0xff]
    %v680 = vld [vmem:[%s2 + $0x608] sm:$0xff]
    %v681 = vld [vmem:[%s2 + $0x610] sm:$0xff]
    %v682 = vld [vmem:[%s2 + $0x618] sm:$0xff]
    %v683 = vld [vmem:[%s2 + $0x620] sm:$0xff]
    %v684 = vld [vmem:[%s2 + $0x628] sm:$0xff]
    %v685 = vld [vmem:[%s2 + $0x630] sm:$0xff]
    %v686 = vld [vmem:[%s2 + $0x638] sm:$0xff]
    %v687 = vld [vmem:[%s2 + $0x640] sm:$0xff]
    %v688 = vld [vmem:[%s2 + $0x648] sm:$0xff]
    %v689 = vld [vmem:[%s2 + $0x650] sm:$0xff]
    %v690 = vld [vmem:[%s2 + $0x658] sm:$0xff]
    %v691 = vld [vmem:[%s2 + $0x660] sm:$0xff]
    %v692 = vld [vmem:[%s2 + $0x668] sm:$0xff]
    %v693 = vld [vmem:[%s2 + $0x670] sm:$0xff]
    %v694 = vld [vmem:[%s2 + $0x678] sm:$0xff]
    %v695 = vld [vmem:[%s2 + $0x680] sm:$0xff]
    %v696 = vld [vmem:[%s2 + $0x688] sm:$0xff]
    %v697 = vld [vmem:[%s2 + $0x690] sm:$0xff]
    %v698 = vld [vmem:[%s2 + $0x698] sm:$0xff]
    %v699 = vld [vmem:[%s2 + $0x6a0] sm:$0xff]
    %v700 = vld [vmem:[%s2 + $0x6a8] sm:$0xff]
    %v701 = vld [vmem:[%s2 + $0x6b0] sm:$0xff]
    %v702 = vld [vmem:[%s2 + $0x6b8] sm:$0xff]
    %v703 = vld [vmem:[%s2 + $0x6c0] sm:$0xff]
    %v704 = vld [vmem:[%s2 + $0x6c8] sm:$0xff]
    %v705 = vld [vmem:[%s2 + $0x6d0] sm:$0xff]
    %v706 = vld [vmem:[%s2 + $0x6d8] sm:$0xff]
    %v707 = vld [vmem:[%s2 + $0x6e0] sm:$0xff]
    %v708 = vld [vmem:[%s2 + $0x6e8] sm:$0xff]
    %v709 = vld [vmem:[%s2 + $0x6f0] sm:$0xff]
    %v710 = vld [vmem:[%s2 + $0x6f8] sm:$0xff]
    %s711 = scalar_lea.vmem %s2, 1792
    %v712 = vld [vmem:[%s711] sm:$0xff]
    %v713 = vld [vmem:[%s711 + $0x8] sm:$0xff]
    %v714 = vld [vmem:[%s711 + $0x10] sm:$0xff]
    %v715 = vld [vmem:[%s711 + $0x18] sm:$0xff]
    %v716 = vld [vmem:[%s711 + $0x20] sm:$0xff]
    %v717 = vld [vmem:[%s711 + $0x28] sm:$0xff]
    %v718 = vld [vmem:[%s711 + $0x30] sm:$0xff]
    %v719 = vld [vmem:[%s711 + $0x38] sm:$0xff]
    %v720 = vld [vmem:[%s711 + $0x40] sm:$0xff]
    %v721 = vld [vmem:[%s711 + $0x48] sm:$0xff]
    %v722 = vld [vmem:[%s711 + $0x50] sm:$0xff]
    %v723 = vld [vmem:[%s711 + $0x58] sm:$0xff]
    %v724 = vld [vmem:[%s711 + $0x60] sm:$0xff]
    %v725 = vld [vmem:[%s711 + $0x68] sm:$0xff]
    %v726 = vld [vmem:[%s711 + $0x70] sm:$0xff]
    %v727 = vld [vmem:[%s711 + $0x78] sm:$0xff]
    %v728 = vld [vmem:[%s711 + $0x80] sm:$0xff]
    %v729 = vld [vmem:[%s711 + $0x88] sm:$0xff]
    %v730 = vld [vmem:[%s711 + $0x90] sm:$0xff]
    %v731 = vld [vmem:[%s711 + $0x98] sm:$0xff]
    %v732 = vld [vmem:[%s711 + $0xa0] sm:$0xff]
    %v733 = vld [vmem:[%s711 + $0xa8] sm:$0xff]
    %v734 = vld [vmem:[%s711 + $0xb0] sm:$0xff]
    %v735 = vld [vmem:[%s711 + $0xb8] sm:$0xff]
    %v736 = vld [vmem:[%s711 + $0xc0] sm:$0xff]
    %v737 = vld [vmem:[%s711 + $0xc8] sm:$0xff]
    %v738 = vld [vmem:[%s711 + $0xd0] sm:$0xff]
    %v739 = vld [vmem:[%s711 + $0xd8] sm:$0xff]
    %v740 = vld [vmem:[%s711 + $0xe0] sm:$0xff]
    %v741 = vld [vmem:[%s711 + $0xe8] sm:$0xff]
    %v742 = vld [vmem:[%s711 + $0xf0] sm:$0xff]
    %v743 = vld [vmem:[%s711 + $0xf8] sm:$0xff]
    %v744 = vld [vmem:[%s711 + $0x100] sm:$0xff]
    %v745 = vld [vmem:[%s711 + $0x108] sm:$0xff]
    %v746 = vld [vmem:[%s711 + $0x110] sm:$0xff]
    %v747 = vld [vmem:[%s711 + $0x118] sm:$0xff]
    %v748 = vld [vmem:[%s711 + $0x120] sm:$0xff]
    %v749 = vld [vmem:[%s711 + $0x128] sm:$0xff]
    %v750 = vld [vmem:[%s711 + $0x130] sm:$0xff]
    %v751 = vld [vmem:[%s711 + $0x138] sm:$0xff]
    %v752 = vld [vmem:[%s711 + $0x140] sm:$0xff]
    %v753 = vld [vmem:[%s711 + $0x148] sm:$0xff]
    %v754 = vld [vmem:[%s711 + $0x150] sm:$0xff]
    %v755 = vld [vmem:[%s711 + $0x158] sm:$0xff]
    %v756 = vld [vmem:[%s711 + $0x160] sm:$0xff]
    %v757 = vld [vmem:[%s711 + $0x168] sm:$0xff]
    %v758 = vld [vmem:[%s711 + $0x170] sm:$0xff]
    %v759 = vld [vmem:[%s711 + $0x178] sm:$0xff]
    %v760 = vld [vmem:[%s711 + $0x180] sm:$0xff]
    %v761 = vld [vmem:[%s711 + $0x188] sm:$0xff]
    %v762 = vld [vmem:[%s711 + $0x190] sm:$0xff]
    %v763 = vld [vmem:[%s711 + $0x198] sm:$0xff]
    %v764 = vld [vmem:[%s711 + $0x1a0] sm:$0xff]
    %v765 = vld [vmem:[%s711 + $0x1a8] sm:$0xff]
    %v766 = vld [vmem:[%s711 + $0x1b0] sm:$0xff]
    %v767 = vld [vmem:[%s711 + $0x1b8] sm:$0xff]
    %v768 = vld [vmem:[%s711 + $0x1c0] sm:$0xff]
    %v769 = vld [vmem:[%s711 + $0x1c8] sm:$0xff]
    %v770 = vld [vmem:[%s711 + $0x1d0] sm:$0xff]
    %v771 = vld [vmem:[%s711 + $0x1d8] sm:$0xff]
    %v772 = vld [vmem:[%s711 + $0x1e0] sm:$0xff]
    %v773 = vld [vmem:[%s711 + $0x1e8] sm:$0xff]
    %v774 = vld [vmem:[%s711 + $0x1f0] sm:$0xff]
    %v775 = vld [vmem:[%s711 + $0x1f8] sm:$0xff]
    %v776 = vld [vmem:[%s711 + $0x200] sm:$0xff]
    %v777 = vld [vmem:[%s711 + $0x208] sm:$0xff]
    %v778 = vld [vmem:[%s711 + $0x210] sm:$0xff]
    %v779 = vld [vmem:[%s711 + $0x218] sm:$0xff]
    %v780 = vld [vmem:[%s711 + $0x220] sm:$0xff]
    %v781 = vld [vmem:[%s711 + $0x228] sm:$0xff]
    %v782 = vld [vmem:[%s711 + $0x230] sm:$0xff]
    %v783 = vld [vmem:[%s711 + $0x238] sm:$0xff]
    %v784 = vld [vmem:[%s711 + $0x240] sm:$0xff]
    %v785 = vld [vmem:[%s711 + $0x248] sm:$0xff]
    %v786 = vld [vmem:[%s711 + $0x250] sm:$0xff]
    %v787 = vld [vmem:[%s711 + $0x258] sm:$0xff]
    %v788 = vld [vmem:[%s711 + $0x260] sm:$0xff]
    %v789 = vld [vmem:[%s711 + $0x268] sm:$0xff]
    %v790 = vld [vmem:[%s711 + $0x270] sm:$0xff]
    %v791 = vld [vmem:[%s711 + $0x278] sm:$0xff]
    %v792 = vld [vmem:[%s711 + $0x280] sm:$0xff]
    %v793 = vld [vmem:[%s711 + $0x288] sm:$0xff]
    %v794 = vld [vmem:[%s711 + $0x290] sm:$0xff]
    %v795 = vld [vmem:[%s711 + $0x298] sm:$0xff]
    %v796 = vld [vmem:[%s711 + $0x2a0] sm:$0xff]
    %v797 = vld [vmem:[%s711 + $0x2a8] sm:$0xff]
    %v798 = vld [vmem:[%s711 + $0x2b0] sm:$0xff]
    %v799 = vld [vmem:[%s711 + $0x2b8] sm:$0xff]
    %v800 = vld [vmem:[%s711 + $0x2c0] sm:$0xff]
    %v801 = vld [vmem:[%s711 + $0x2c8] sm:$0xff]
    %v802 = vld [vmem:[%s711 + $0x2d0] sm:$0xff]
    %v803 = vld [vmem:[%s711 + $0x2d8] sm:$0xff]
    %v804 = vld [vmem:[%s711 + $0x2e0] sm:$0xff]
    %v805 = vld [vmem:[%s711 + $0x2e8] sm:$0xff]
    %v806 = vld [vmem:[%s711 + $0x2f0] sm:$0xff]
    %v807 = vld [vmem:[%s711 + $0x2f8] sm:$0xff]
    %v808 = vld [vmem:[%s711 + $0x300] sm:$0xff]
    %v809 = vld [vmem:[%s711 + $0x308] sm:$0xff]
    %v810 = vld [vmem:[%s711 + $0x310] sm:$0xff]
    %v811 = vld [vmem:[%s711 + $0x318] sm:$0xff]
    %v812 = vld [vmem:[%s711 + $0x320] sm:$0xff]
    %v813 = vld [vmem:[%s711 + $0x328] sm:$0xff]
    %v814 = vld [vmem:[%s711 + $0x330] sm:$0xff]
    %v815 = vld [vmem:[%s711 + $0x338] sm:$0xff]
    %v816 = vld [vmem:[%s711 + $0x340] sm:$0xff]
    %v817 = vld [vmem:[%s711 + $0x348] sm:$0xff]
    %v818 = vld [vmem:[%s711 + $0x350] sm:$0xff]
    %v819 = vld [vmem:[%s711 + $0x358] sm:$0xff]
    %v820 = vld [vmem:[%s711 + $0x360] sm:$0xff]
    %v821 = vld [vmem:[%s711 + $0x368] sm:$0xff]
    %v822 = vld [vmem:[%s711 + $0x370] sm:$0xff]
    %v823 = vld [vmem:[%s711 + $0x378] sm:$0xff]
    %v824 = vld [vmem:[%s711 + $0x380] sm:$0xff]
    %v825 = vld [vmem:[%s711 + $0x388] sm:$0xff]
    %v826 = vld [vmem:[%s711 + $0x390] sm:$0xff]
    %v827 = vld [vmem:[%s711 + $0x398] sm:$0xff]
    %v828 = vld [vmem:[%s711 + $0x3a0] sm:$0xff]
    %v829 = vld [vmem:[%s711 + $0x3a8] sm:$0xff]
    %v830 = vld [vmem:[%s711 + $0x3b0] sm:$0xff]
    %v831 = vld [vmem:[%s711 + $0x3b8] sm:$0xff]
    %v832 = vld [vmem:[%s711 + $0x3c0] sm:$0xff]
    %v833 = vld [vmem:[%s711 + $0x3c8] sm:$0xff]
    %v834 = vld [vmem:[%s711 + $0x3d0] sm:$0xff]
    %v835 = vld [vmem:[%s711 + $0x3d8] sm:$0xff]
    %v836 = vld [vmem:[%s711 + $0x3e0] sm:$0xff]
    %v837 = vld [vmem:[%s711 + $0x3e8] sm:$0xff]
    %v838 = vld [vmem:[%s711 + $0x3f0] sm:$0xff]
    %v839 = vld [vmem:[%s711 + $0x3f8] sm:$0xff]
    %v840 = vld [vmem:[%s711 + $0x400] sm:$0xff]
    %v841 = vld [vmem:[%s711 + $0x408] sm:$0xff]
    %v842 = vld [vmem:[%s711 + $0x410] sm:$0xff]
    %v843 = vld [vmem:[%s711 + $0x418] sm:$0xff]
    %v844 = vld [vmem:[%s711 + $0x420] sm:$0xff]
    %v845 = vld [vmem:[%s711 + $0x428] sm:$0xff]
    %v846 = vld [vmem:[%s711 + $0x430] sm:$0xff]
    %v847 = vld [vmem:[%s711 + $0x438] sm:$0xff]
    %v848 = vld [vmem:[%s711 + $0x440] sm:$0xff]
    %v849 = vld [vmem:[%s711 + $0x448] sm:$0xff]
    %v850 = vld [vmem:[%s711 + $0x450] sm:$0xff]
    %v851 = vld [vmem:[%s711 + $0x458] sm:$0xff]
    %v852 = vld [vmem:[%s711 + $0x460] sm:$0xff]
    %v853 = vld [vmem:[%s711 + $0x468] sm:$0xff]
    %v854 = vld [vmem:[%s711 + $0x470] sm:$0xff]
    %v855 = vld [vmem:[%s711 + $0x478] sm:$0xff]
    %v856 = vld [vmem:[%s711 + $0x480] sm:$0xff]
    %v857 = vld [vmem:[%s711 + $0x488] sm:$0xff]
    %v858 = vld [vmem:[%s711 + $0x490] sm:$0xff]
    %v859 = vld [vmem:[%s711 + $0x498] sm:$0xff]
    %v860 = vld [vmem:[%s711 + $0x4a0] sm:$0xff]
    %v861 = vld [vmem:[%s711 + $0x4a8] sm:$0xff]
    %v862 = vld [vmem:[%s711 + $0x4b0] sm:$0xff]
    %v863 = vld [vmem:[%s711 + $0x4b8] sm:$0xff]
    %v864 = vld [vmem:[%s711 + $0x4c0] sm:$0xff]
    %v865 = vld [vmem:[%s711 + $0x4c8] sm:$0xff]
    %v866 = vld [vmem:[%s711 + $0x4d0] sm:$0xff]
    %v867 = vld [vmem:[%s711 + $0x4d8] sm:$0xff]
    %v868 = vld [vmem:[%s711 + $0x4e0] sm:$0xff]
    %v869 = vld [vmem:[%s711 + $0x4e8] sm:$0xff]
    %v870 = vld [vmem:[%s711 + $0x4f0] sm:$0xff]
    %v871 = vld [vmem:[%s711 + $0x4f8] sm:$0xff]
    %v872 = vld [vmem:[%s711 + $0x500] sm:$0xff]
    %v873 = vld [vmem:[%s711 + $0x508] sm:$0xff]
    %v874 = vld [vmem:[%s711 + $0x510] sm:$0xff]
    %v875 = vld [vmem:[%s711 + $0x518] sm:$0xff]
    %v876 = vld [vmem:[%s711 + $0x520] sm:$0xff]
    %v877 = vld [vmem:[%s711 + $0x528] sm:$0xff]
    %v878 = vld [vmem:[%s711 + $0x530] sm:$0xff]
    %v879 = vld [vmem:[%s711 + $0x538] sm:$0xff]
    %v880 = vld [vmem:[%s711 + $0x540] sm:$0xff]
    %v881 = vld [vmem:[%s711 + $0x548] sm:$0xff]
    %v882 = vld [vmem:[%s711 + $0x550] sm:$0xff]
    %v883 = vld [vmem:[%s711 + $0x558] sm:$0xff]
    %v884 = vld [vmem:[%s711 + $0x560] sm:$0xff]
    %v885 = vld [vmem:[%s711 + $0x568] sm:$0xff]
    %v886 = vld [vmem:[%s711 + $0x570] sm:$0xff]
    %v887 = vld [vmem:[%s711 + $0x578] sm:$0xff]
    %v888 = vld [vmem:[%s711 + $0x580] sm:$0xff]
    %v889 = vld [vmem:[%s711 + $0x588] sm:$0xff]
    %v890 = vld [vmem:[%s711 + $0x590] sm:$0xff]
    %v891 = vld [vmem:[%s711 + $0x598] sm:$0xff]
    %v892 = vld [vmem:[%s711 + $0x5a0] sm:$0xff]
    %v893 = vld [vmem:[%s711 + $0x5a8] sm:$0xff]
    %v894 = vld [vmem:[%s711 + $0x5b0] sm:$0xff]
    %v895 = vld [vmem:[%s711 + $0x5b8] sm:$0xff]
    %v896 = vld [vmem:[%s711 + $0x5c0] sm:$0xff]
    %v897 = vld [vmem:[%s711 + $0x5c8] sm:$0xff]
    %v898 = vld [vmem:[%s711 + $0x5d0] sm:$0xff]
    %v899 = vld [vmem:[%s711 + $0x5d8] sm:$0xff]
    %v900 = vld [vmem:[%s711 + $0x5e0] sm:$0xff]
    %v901 = vld [vmem:[%s711 + $0x5e8] sm:$0xff]
    %v902 = vld [vmem:[%s711 + $0x5f0] sm:$0xff]
    %v903 = vld [vmem:[%s711 + $0x5f8] sm:$0xff]
    %v904 = vld [vmem:[%s711 + $0x600] sm:$0xff]
    %v905 = vld [vmem:[%s711 + $0x608] sm:$0xff]
    %v906 = vld [vmem:[%s711 + $0x610] sm:$0xff]
    %v907 = vld [vmem:[%s711 + $0x618] sm:$0xff]
    %v908 = vld [vmem:[%s711 + $0x620] sm:$0xff]
    %v909 = vld [vmem:[%s711 + $0x628] sm:$0xff]
    %v910 = vld [vmem:[%s711 + $0x630] sm:$0xff]
    %v911 = vld [vmem:[%s711 + $0x638] sm:$0xff]
    %v912 = vld [vmem:[%s711 + $0x640] sm:$0xff]
    %v913 = vld [vmem:[%s711 + $0x648] sm:$0xff]
    %v914 = vld [vmem:[%s711 + $0x650] sm:$0xff]
    %v915 = vld [vmem:[%s711 + $0x658] sm:$0xff]
    %v916 = vld [vmem:[%s711 + $0x660] sm:$0xff]
    %v917 = vld [vmem:[%s711 + $0x668] sm:$0xff]
    %v918 = vld [vmem:[%s711 + $0x670] sm:$0xff]
    %v919 = vld [vmem:[%s711 + $0x678] sm:$0xff]
    %v920 = vld [vmem:[%s711 + $0x680] sm:$0xff]
    %v921 = vld [vmem:[%s711 + $0x688] sm:$0xff]
    %v922 = vld [vmem:[%s711 + $0x690] sm:$0xff]
    %v923 = vld [vmem:[%s711 + $0x698] sm:$0xff]
    %v924 = vld [vmem:[%s711 + $0x6a0] sm:$0xff]
    %v925 = vld [vmem:[%s711 + $0x6a8] sm:$0xff]
    %v926 = vld [vmem:[%s711 + $0x6b0] sm:$0xff]
    %v927 = vld [vmem:[%s711 + $0x6b8] sm:$0xff]
    %v928 = vld [vmem:[%s711 + $0x6c0] sm:$0xff]
    %v929 = vld [vmem:[%s711 + $0x6c8] sm:$0xff]
    %v930 = vld [vmem:[%s711 + $0x6d0] sm:$0xff]
    %v931 = vld [vmem:[%s711 + $0x6d8] sm:$0xff]
    %v932 = vld [vmem:[%s711 + $0x6e0] sm:$0xff]
    %v933 = vld [vmem:[%s711 + $0x6e8] sm:$0xff]
    %v934 = vld [vmem:[%s711 + $0x6f0] sm:$0xff]
    %v935 = vld [vmem:[%s711 + $0x6f8] sm:$0xff]
    %vm936 = vcmask 523264
    %v938 = vsel %vm936, %v462, 0
    %v941 = vsel %vm936, %v466, 0
    %v944 = vsel %vm936, %v470, 0
    %v947 = vsel %vm936, %v474, 0
    %v950 = vsel %vm936, %v478, 0
    %v953 = vsel %vm936, %v482, 0
    %v956 = vsel %vm936, %v486, 0
    %958 = vmatpush.msra.mxu0 %v772
    %959 = vmatpush.msra.mxu0 %v768
    %960 = vmatpush.msra.mxu0 %v764
    %961 = vmatpush.msra.mxu0 %v760
    %962 = vmatpush.msra.mxu0 %v756
    %963 = vmatpush.msra.mxu0 %v752
    %964 = vmatpush.msra.mxu0 %v748
    %965 = vmatpush.msra.mxu0 %v744
    %966 = vmatpush.msra.mxu0 %v740
    %967 = vmatpush.msra.mxu0 %v736
    %968 = vmatpush.msra.mxu0 %v732
    %969 = vmatpush.msra.mxu0 %v728
    %970 = vmatpush.msra.mxu0 %v724
    %971 = vmatpush.msra.mxu0 %v720
    %972 = vmatpush.msra.mxu0 %v716
    %973 = vmatpush.msra.mxu0 %v712
    %974 = vmatmul.f32.gmra.mxu0 %v459
    %v975 = vpop.f32.mrf.mxu0
    %v976 = vadd.f32 0.0, %v975
    %977 = vmatmul.f32.gmra.mxu0 %v463
    %v978 = vpop.f32.mrf.mxu0
    %v979 = vadd.f32 0.0, %v978
    %980 = vmatmul.f32.gmra.mxu0 %v467
    %v981 = vpop.f32.mrf.mxu0
    %v982 = vadd.f32 0.0, %v981
    %983 = vmatmul.f32.gmra.mxu0 %v471
    %v984 = vpop.f32.mrf.mxu0
    %v985 = vadd.f32 0.0, %v984
    %986 = vmatmul.f32.gmra.mxu0 %v475
    %v987 = vpop.f32.mrf.mxu0
    %v988 = vadd.f32 0.0, %v987
    %989 = vmatmul.f32.gmra.mxu0 %v479
    %v990 = vpop.f32.mrf.mxu0
    %v991 = vadd.f32 0.0, %v990
    %992 = vmatmul.f32.gmra.mxu0 %v483
    %v993 = vpop.f32.mrf.mxu0
    %v994 = vadd.f32 0.0, %v993
    %995 = vdwg.mxu0
    %996 = vmatpush.msra.mxu0 %v836
    %997 = vmatpush.msra.mxu0 %v832
    %998 = vmatpush.msra.mxu0 %v828
    %999 = vmatpush.msra.mxu0 %v824
    %1000 = vmatpush.msra.mxu0 %v820
    %1001 = vmatpush.msra.mxu0 %v816
    %1002 = vmatpush.msra.mxu0 %v812
    %1003 = vmatpush.msra.mxu0 %v808
    %1004 = vmatpush.msra.mxu0 %v804
    %1005 = vmatpush.msra.mxu0 %v800
    %1006 = vmatpush.msra.mxu0 %v796
    %1007 = vmatpush.msra.mxu0 %v792
    %1008 = vmatpush.msra.mxu0 %v788
    %1009 = vmatpush.msra.mxu0 %v784
    %1010 = vmatpush.msra.mxu0 %v780
    %1011 = vmatpush.msra.mxu0 %v776
    %1012 = vmatmul.f32.gmra.mxu0 %v460
    %v1013 = vpop.f32.mrf.mxu0
    %v1014 = vadd.f32 %v976, %v1013
    %1015 = vmatmul.f32.gmra.mxu0 %v464
    %v1016 = vpop.f32.mrf.mxu0
    %v1017 = vadd.f32 %v979, %v1016
    %1018 = vmatmul.f32.gmra.mxu0 %v468
    %v1019 = vpop.f32.mrf.mxu0
    %v1020 = vadd.f32 %v982, %v1019
    %1021 = vmatmul.f32.gmra.mxu0 %v472
    %v1022 = vpop.f32.mrf.mxu0
    %v1023 = vadd.f32 %v985, %v1022
    %1024 = vmatmul.f32.gmra.mxu0 %v476
    %v1025 = vpop.f32.mrf.mxu0
    %v1026 = vadd.f32 %v988, %v1025
    %1027 = vmatmul.f32.gmra.mxu0 %v480
    %v1028 = vpop.f32.mrf.mxu0
    %v1029 = vadd.f32 %v991, %v1028
    %1030 = vmatmul.f32.gmra.mxu0 %v484
    %v1031 = vpop.f32.mrf.mxu0
    %v1032 = vadd.f32 %v994, %v1031
    %1033 = vdwg.mxu0
    %1034 = vmatpush.msra.mxu0 %v900
    %1035 = vmatpush.msra.mxu0 %v896
    %1036 = vmatpush.msra.mxu0 %v892
    %1037 = vmatpush.msra.mxu0 %v888
    %1038 = vmatpush.msra.mxu0 %v884
    %1039 = vmatpush.msra.mxu0 %v880
    %1040 = vmatpush.msra.mxu0 %v876
    %1041 = vmatpush.msra.mxu0 %v872
    %1042 = vmatpush.msra.mxu0 %v868
    %1043 = vmatpush.msra.mxu0 %v864
    %1044 = vmatpush.msra.mxu0 %v860
    %1045 = vmatpush.msra.mxu0 %v856
    %1046 = vmatpush.msra.mxu0 %v852
    %1047 = vmatpush.msra.mxu0 %v848
    %1048 = vmatpush.msra.mxu0 %v844
    %1049 = vmatpush.msra.mxu0 %v840
    %1050 = vmatmul.f32.gmra.mxu0 %v461
    %v1051 = vpop.f32.mrf.mxu0
    %v1052 = vadd.f32 %v1014, %v1051
    %1053 = vmatmul.f32.gmra.mxu0 %v465
    %v1054 = vpop.f32.mrf.mxu0
    %v1055 = vadd.f32 %v1017, %v1054
    %1056 = vmatmul.f32.gmra.mxu0 %v469
    %v1057 = vpop.f32.mrf.mxu0
    %v1058 = vadd.f32 %v1020, %v1057
    %1059 = vmatmul.f32.gmra.mxu0 %v473
    %v1060 = vpop.f32.mrf.mxu0
    %v1061 = vadd.f32 %v1023, %v1060
    %1062 = vmatmul.f32.gmra.mxu0 %v477
    %v1063 = vpop.f32.mrf.mxu0
    %v1064 = vadd.f32 %v1026, %v1063
    %1065 = vmatmul.f32.gmra.mxu0 %v481
    %v1066 = vpop.f32.mrf.mxu0
    %v1067 = vadd.f32 %v1029, %v1066
    %1068 = vmatmul.f32.gmra.mxu0 %v485
    %v1069 = vpop.f32.mrf.mxu0
    %v1070 = vadd.f32 %v1032, %v1069
    %1071 = vdwg.mxu0
    %1072 = vmatpush.msra.mxu0 0.0
    %1073 = vmatpush.msra.mxu0 0.0
    %1074 = vmatpush.msra.mxu0 0.0
    %1075 = vmatpush.msra.mxu0 0.0
    %1076 = vmatpush.msra.mxu0 0.0
    %1077 = vmatpush.msra.mxu0 0.0
    %1078 = vmatpush.msra.mxu0 0.0
    %1079 = vmatpush.msra.mxu0 0.0
    %1080 = vmatpush.msra.mxu0 %v932
    %1081 = vmatpush.msra.mxu0 %v928
    %1082 = vmatpush.msra.mxu0 %v924
    %1083 = vmatpush.msra.mxu0 %v920
    %1084 = vmatpush.msra.mxu0 %v916
    %1085 = vmatpush.msra.mxu0 %v912
    %1086 = vmatpush.msra.mxu0 %v908
    %1087 = vmatpush.msra.mxu0 %v904
    %1088 = vmatmul.f32.gmra.mxu0 %v938
    %v1089 = vpop.f32.mrf.mxu0
    %v1090 = vadd.f32 %v1052, %v1089
    %1091 = vmatmul.f32.gmra.mxu0 %v941
    %v1092 = vpop.f32.mrf.mxu0
    %v1093 = vadd.f32 %v1055, %v1092
    %1094 = vmatmul.f32.gmra.mxu0 %v944
    %v1095 = vpop.f32.mrf.mxu0
    %v1096 = vadd.f32 %v1058, %v1095
    %1097 = vmatmul.f32.gmra.mxu0 %v947
    %v1098 = vpop.f32.mrf.mxu0
    %v1099 = vadd.f32 %v1061, %v1098
    %1100 = vmatmul.f32.gmra.mxu0 %v950
    %v1101 = vpop.f32.mrf.mxu0
    %v1102 = vadd.f32 %v1064, %v1101
    %1103 = vmatmul.f32.gmra.mxu0 %v953
    %v1104 = vpop.f32.mrf.mxu0
    %v1105 = vadd.f32 %v1067, %v1104
    %1106 = vmatmul.f32.gmra.mxu0 %v956
    %v1107 = vpop.f32.mrf.mxu0
    %v1108 = vadd.f32 %v1070, %v1107
    %1109 = vdwg.mxu0
    %1110 = vmatpush.msra.mxu0 %v773
    %1111 = vmatpush.msra.mxu0 %v769
    %1112 = vmatpush.msra.mxu0 %v765
    %1113 = vmatpush.msra.mxu0 %v761
    %1114 = vmatpush.msra.mxu0 %v757
    %1115 = vmatpush.msra.mxu0 %v753
    %1116 = vmatpush.msra.mxu0 %v749
    %1117 = vmatpush.msra.mxu0 %v745
    %1118 = vmatpush.msra.mxu0 %v741
    %1119 = vmatpush.msra.mxu0 %v737
    %1120 = vmatpush.msra.mxu0 %v733
    %1121 = vmatpush.msra.mxu0 %v729
    %1122 = vmatpush.msra.mxu0 %v725
    %1123 = vmatpush.msra.mxu0 %v721
    %1124 = vmatpush.msra.mxu0 %v717
    %1125 = vmatpush.msra.mxu0 %v713
    %1126 = vmatmul.f32.gmra.mxu0 %v459
    %v1127 = vpop.f32.mrf.mxu0
    %v1128 = vadd.f32 0.0, %v1127
    %1129 = vmatmul.f32.gmra.mxu0 %v463
    %v1130 = vpop.f32.mrf.mxu0
    %v1131 = vadd.f32 0.0, %v1130
    %1132 = vmatmul.f32.gmra.mxu0 %v467
    %v1133 = vpop.f32.mrf.mxu0
    %v1134 = vadd.f32 0.0, %v1133
    %1135 = vmatmul.f32.gmra.mxu0 %v471
    %v1136 = vpop.f32.mrf.mxu0
    %v1137 = vadd.f32 0.0, %v1136
    %1138 = vmatmul.f32.gmra.mxu0 %v475
    %v1139 = vpop.f32.mrf.mxu0
    %v1140 = vadd.f32 0.0, %v1139
    %1141 = vmatmul.f32.gmra.mxu0 %v479
    %v1142 = vpop.f32.mrf.mxu0
    %v1143 = vadd.f32 0.0, %v1142
    %1144 = vmatmul.f32.gmra.mxu0 %v483
    %v1145 = vpop.f32.mrf.mxu0
    %v1146 = vadd.f32 0.0, %v1145
    %1147 = vdwg.mxu0
    %1148 = vmatpush.msra.mxu0 %v837
    %1149 = vmatpush.msra.mxu0 %v833
    %1150 = vmatpush.msra.mxu0 %v829
    %1151 = vmatpush.msra.mxu0 %v825
    %1152 = vmatpush.msra.mxu0 %v821
    %1153 = vmatpush.msra.mxu0 %v817
    %1154 = vmatpush.msra.mxu0 %v813
    %1155 = vmatpush.msra.mxu0 %v809
    %1156 = vmatpush.msra.mxu0 %v805
    %1157 = vmatpush.msra.mxu0 %v801
    %1158 = vmatpush.msra.mxu0 %v797
    %1159 = vmatpush.msra.mxu0 %v793
    %1160 = vmatpush.msra.mxu0 %v789
    %1161 = vmatpush.msra.mxu0 %v785
    %1162 = vmatpush.msra.mxu0 %v781
    %1163 = vmatpush.msra.mxu0 %v777
    %1164 = vmatmul.f32.gmra.mxu0 %v460
    %v1165 = vpop.f32.mrf.mxu0
    %v1166 = vadd.f32 %v1128, %v1165
    %1167 = vmatmul.f32.gmra.mxu0 %v464
    %v1168 = vpop.f32.mrf.mxu0
    %v1169 = vadd.f32 %v1131, %v1168
    %1170 = vmatmul.f32.gmra.mxu0 %v468
    %v1171 = vpop.f32.mrf.mxu0
    %v1172 = vadd.f32 %v1134, %v1171
    %1173 = vmatmul.f32.gmra.mxu0 %v472
    %v1174 = vpop.f32.mrf.mxu0
    %v1175 = vadd.f32 %v1137, %v1174
    %1176 = vmatmul.f32.gmra.mxu0 %v476
    %v1177 = vpop.f32.mrf.mxu0
    %v1178 = vadd.f32 %v1140, %v1177
    %1179 = vmatmul.f32.gmra.mxu0 %v480
    %v1180 = vpop.f32.mrf.mxu0
    %v1181 = vadd.f32 %v1143, %v1180
    %1182 = vmatmul.f32.gmra.mxu0 %v484
    %v1183 = vpop.f32.mrf.mxu0
    %v1184 = vadd.f32 %v1146, %v1183
    %1185 = vdwg.mxu0
    %1186 = vmatpush.msra.mxu0 %v901
    %1187 = vmatpush.msra.mxu0 %v897
    %1188 = vmatpush.msra.mxu0 %v893
    %1189 = vmatpush.msra.mxu0 %v889
    %1190 = vmatpush.msra.mxu0 %v885
    %1191 = vmatpush.msra.mxu0 %v881
    %1192 = vmatpush.msra.mxu0 %v877
    %1193 = vmatpush.msra.mxu0 %v873
    %1194 = vmatpush.msra.mxu0 %v869
    %1195 = vmatpush.msra.mxu0 %v865
    %1196 = vmatpush.msra.mxu0 %v861
    %1197 = vmatpush.msra.mxu0 %v857
    %1198 = vmatpush.msra.mxu0 %v853
    %1199 = vmatpush.msra.mxu0 %v849
    %1200 = vmatpush.msra.mxu0 %v845
    %1201 = vmatpush.msra.mxu0 %v841
    %1202 = vmatmul.f32.gmra.mxu0 %v461
    %v1203 = vpop.f32.mrf.mxu0
    %v1204 = vadd.f32 %v1166, %v1203
    %1205 = vmatmul.f32.gmra.mxu0 %v465
    %v1206 = vpop.f32.mrf.mxu0
    %v1207 = vadd.f32 %v1169, %v1206
    %1208 = vmatmul.f32.gmra.mxu0 %v469
    %v1209 = vpop.f32.mrf.mxu0
    %v1210 = vadd.f32 %v1172, %v1209
    %1211 = vmatmul.f32.gmra.mxu0 %v473
    %v1212 = vpop.f32.mrf.mxu0
    %v1213 = vadd.f32 %v1175, %v1212
    %1214 = vmatmul.f32.gmra.mxu0 %v477
    %v1215 = vpop.f32.mrf.mxu0
    %v1216 = vadd.f32 %v1178, %v1215
    %1217 = vmatmul.f32.gmra.mxu0 %v481
    %v1218 = vpop.f32.mrf.mxu0
    %v1219 = vadd.f32 %v1181, %v1218
    %1220 = vmatmul.f32.gmra.mxu0 %v485
    %v1221 = vpop.f32.mrf.mxu0
    %v1222 = vadd.f32 %v1184, %v1221
    %1223 = vdwg.mxu0
    %1224 = vmatpush.msra.mxu0 0.0
    %1225 = vmatpush.msra.mxu0 0.0
    %1226 = vmatpush.msra.mxu0 0.0
    %1227 = vmatpush.msra.mxu0 0.0
    %1228 = vmatpush.msra.mxu0 0.0
    %1229 = vmatpush.msra.mxu0 0.0
    %1230 = vmatpush.msra.mxu0 0.0
    %1231 = vmatpush.msra.mxu0 0.0
    %1232 = vmatpush.msra.mxu0 %v933
    %1233 = vmatpush.msra.mxu0 %v929
    %1234 = vmatpush.msra.mxu0 %v925
    %1235 = vmatpush.msra.mxu0 %v921
    %1236 = vmatpush.msra.mxu0 %v917
    %1237 = vmatpush.msra.mxu0 %v913
    %1238 = vmatpush.msra.mxu0 %v909
    %1239 = vmatpush.msra.mxu0 %v905
    %1240 = vmatmul.f32.gmra.mxu0 %v938
    %v1241 = vpop.f32.mrf.mxu0
    %v1242 = vadd.f32 %v1204, %v1241
    %1243 = vmatmul.f32.gmra.mxu0 %v941
    %v1244 = vpop.f32.mrf.mxu0
    %v1245 = vadd.f32 %v1207, %v1244
    %1246 = vmatmul.f32.gmra.mxu0 %v944
    %v1247 = vpop.f32.mrf.mxu0
    %v1248 = vadd.f32 %v1210, %v1247
    %1249 = vmatmul.f32.gmra.mxu0 %v947
    %v1250 = vpop.f32.mrf.mxu0
    %v1251 = vadd.f32 %v1213, %v1250
    %1252 = vmatmul.f32.gmra.mxu0 %v950
    %v1253 = vpop.f32.mrf.mxu0
    %v1254 = vadd.f32 %v1216, %v1253
    %1255 = vmatmul.f32.gmra.mxu0 %v953
    %v1256 = vpop.f32.mrf.mxu0
    %v1257 = vadd.f32 %v1219, %v1256
    %1258 = vmatmul.f32.gmra.mxu0 %v956
    %v1259 = vpop.f32.mrf.mxu0
    %v1260 = vadd.f32 %v1222, %v1259
    %1261 = vdwg.mxu0
    %1262 = vmatpush.msra.mxu0 %v774
    %1263 = vmatpush.msra.mxu0 %v770
    %1264 = vmatpush.msra.mxu0 %v766
    %1265 = vmatpush.msra.mxu0 %v762
    %1266 = vmatpush.msra.mxu0 %v758
    %1267 = vmatpush.msra.mxu0 %v754
    %1268 = vmatpush.msra.mxu0 %v750
    %1269 = vmatpush.msra.mxu0 %v746
    %1270 = vmatpush.msra.mxu0 %v742
    %1271 = vmatpush.msra.mxu0 %v738
    %1272 = vmatpush.msra.mxu0 %v734
    %1273 = vmatpush.msra.mxu0 %v730
    %1274 = vmatpush.msra.mxu0 %v726
    %1275 = vmatpush.msra.mxu0 %v722
    %1276 = vmatpush.msra.mxu0 %v718
    %1277 = vmatpush.msra.mxu0 %v714
    %1278 = vmatmul.f32.gmra.mxu0 %v459
    %v1279 = vpop.f32.mrf.mxu0
    %v1280 = vadd.f32 0.0, %v1279
    %1281 = vmatmul.f32.gmra.mxu0 %v463
    %v1282 = vpop.f32.mrf.mxu0
    %v1283 = vadd.f32 0.0, %v1282
    %1284 = vmatmul.f32.gmra.mxu0 %v467
    %v1285 = vpop.f32.mrf.mxu0
    %v1286 = vadd.f32 0.0, %v1285
    %1287 = vmatmul.f32.gmra.mxu0 %v471
    %v1288 = vpop.f32.mrf.mxu0
    %v1289 = vadd.f32 0.0, %v1288
    %1290 = vmatmul.f32.gmra.mxu0 %v475
    %v1291 = vpop.f32.mrf.mxu0
    %v1292 = vadd.f32 0.0, %v1291
    %1293 = vmatmul.f32.gmra.mxu0 %v479
    %v1294 = vpop.f32.mrf.mxu0
    %v1295 = vadd.f32 0.0, %v1294
    %1296 = vmatmul.f32.gmra.mxu0 %v483
    %v1297 = vpop.f32.mrf.mxu0
    %v1298 = vadd.f32 0.0, %v1297
    %1299 = vdwg.mxu0
    %1300 = vmatpush.msra.mxu0 %v838
    %1301 = vmatpush.msra.mxu0 %v834
    %1302 = vmatpush.msra.mxu0 %v830
    %1303 = vmatpush.msra.mxu0 %v826
    %1304 = vmatpush.msra.mxu0 %v822
    %1305 = vmatpush.msra.mxu0 %v818
    %1306 = vmatpush.msra.mxu0 %v814
    %1307 = vmatpush.msra.mxu0 %v810
    %1308 = vmatpush.msra.mxu0 %v806
    %1309 = vmatpush.msra.mxu0 %v802
    %1310 = vmatpush.msra.mxu0 %v798
    %1311 = vmatpush.msra.mxu0 %v794
    %1312 = vmatpush.msra.mxu0 %v790
    %1313 = vmatpush.msra.mxu0 %v786
    %1314 = vmatpush.msra.mxu0 %v782
    %1315 = vmatpush.msra.mxu0 %v778
    %1316 = vmatmul.f32.gmra.mxu0 %v460
    %v1317 = vpop.f32.mrf.mxu0
    %v1318 = vadd.f32 %v1280, %v1317
    %1319 = vmatmul.f32.gmra.mxu0 %v464
    %v1320 = vpop.f32.mrf.mxu0
    %v1321 = vadd.f32 %v1283, %v1320
    %1322 = vmatmul.f32.gmra.mxu0 %v468
    %v1323 = vpop.f32.mrf.mxu0
    %v1324 = vadd.f32 %v1286, %v1323
    %1325 = vmatmul.f32.gmra.mxu0 %v472
    %v1326 = vpop.f32.mrf.mxu0
    %v1327 = vadd.f32 %v1289, %v1326
    %1328 = vmatmul.f32.gmra.mxu0 %v476
    %v1329 = vpop.f32.mrf.mxu0
    %v1330 = vadd.f32 %v1292, %v1329
    %1331 = vmatmul.f32.gmra.mxu0 %v480
    %v1332 = vpop.f32.mrf.mxu0
    %v1333 = vadd.f32 %v1295, %v1332
    %1334 = vmatmul.f32.gmra.mxu0 %v484
    %v1335 = vpop.f32.mrf.mxu0
    %v1336 = vadd.f32 %v1298, %v1335
    %1337 = vdwg.mxu0
    %1338 = vmatpush.msra.mxu0 %v902
    %1339 = vmatpush.msra.mxu0 %v898
    %1340 = vmatpush.msra.mxu0 %v894
    %1341 = vmatpush.msra.mxu0 %v890
    %1342 = vmatpush.msra.mxu0 %v886
    %1343 = vmatpush.msra.mxu0 %v882
    %1344 = vmatpush.msra.mxu0 %v878
    %1345 = vmatpush.msra.mxu0 %v874
    %1346 = vmatpush.msra.mxu0 %v870
    %1347 = vmatpush.msra.mxu0 %v866
    %1348 = vmatpush.msra.mxu0 %v862
    %1349 = vmatpush.msra.mxu0 %v858
    %1350 = vmatpush.msra.mxu0 %v854
    %1351 = vmatpush.msra.mxu0 %v850
    %1352 = vmatpush.msra.mxu0 %v846
    %1353 = vmatpush.msra.mxu0 %v842
    %1354 = vmatmul.f32.gmra.mxu0 %v461
    %v1355 = vpop.f32.mrf.mxu0
    %v1356 = vadd.f32 %v1318, %v1355
    %1357 = vmatmul.f32.gmra.mxu0 %v465
    %v1358 = vpop.f32.mrf.mxu0
    %v1359 = vadd.f32 %v1321, %v1358
    %1360 = vmatmul.f32.gmra.mxu0 %v469
    %v1361 = vpop.f32.mrf.mxu0
    %v1362 = vadd.f32 %v1324, %v1361
    %1363 = vmatmul.f32.gmra.mxu0 %v473
    %v1364 = vpop.f32.mrf.mxu0
    %v1365 = vadd.f32 %v1327, %v1364
    %1366 = vmatmul.f32.gmra.mxu0 %v477
    %v1367 = vpop.f32.mrf.mxu0
    %v1368 = vadd.f32 %v1330, %v1367
    %1369 = vmatmul.f32.gmra.mxu0 %v481
    %v1370 = vpop.f32.mrf.mxu0
    %v1371 = vadd.f32 %v1333, %v1370
    %1372 = vmatmul.f32.gmra.mxu0 %v485
    %v1373 = vpop.f32.mrf.mxu0
    %v1374 = vadd.f32 %v1336, %v1373
    %1375 = vdwg.mxu0
    %1376 = vmatpush.msra.mxu0 0.0
    %1377 = vmatpush.msra.mxu0 0.0
    %1378 = vmatpush.msra.mxu0 0.0
    %1379 = vmatpush.msra.mxu0 0.0
    %1380 = vmatpush.msra.mxu0 0.0
    %1381 = vmatpush.msra.mxu0 0.0
    %1382 = vmatpush.msra.mxu0 0.0
    %1383 = vmatpush.msra.mxu0 0.0
    %1384 = vmatpush.msra.mxu0 %v934
    %1385 = vmatpush.msra.mxu0 %v930
    %1386 = vmatpush.msra.mxu0 %v926
    %1387 = vmatpush.msra.mxu0 %v922
    %1388 = vmatpush.msra.mxu0 %v918
    %1389 = vmatpush.msra.mxu0 %v914
    %1390 = vmatpush.msra.mxu0 %v910
    %1391 = vmatpush.msra.mxu0 %v906
    %1392 = vmatmul.f32.gmra.mxu0 %v938
    %v1393 = vpop.f32.mrf.mxu0
    %v1394 = vadd.f32 %v1356, %v1393
    %1395 = vmatmul.f32.gmra.mxu0 %v941
    %v1396 = vpop.f32.mrf.mxu0
    %v1397 = vadd.f32 %v1359, %v1396
    %1398 = vmatmul.f32.gmra.mxu0 %v944
    %v1399 = vpop.f32.mrf.mxu0
    %v1400 = vadd.f32 %v1362, %v1399
    %1401 = vmatmul.f32.gmra.mxu0 %v947
    %v1402 = vpop.f32.mrf.mxu0
    %v1403 = vadd.f32 %v1365, %v1402
    %1404 = vmatmul.f32.gmra.mxu0 %v950
    %v1405 = vpop.f32.mrf.mxu0
    %v1406 = vadd.f32 %v1368, %v1405
    %1407 = vmatmul.f32.gmra.mxu0 %v953
    %v1408 = vpop.f32.mrf.mxu0
    %v1409 = vadd.f32 %v1371, %v1408
    %1410 = vmatmul.f32.gmra.mxu0 %v956
    %v1411 = vpop.f32.mrf.mxu0
    %v1412 = vadd.f32 %v1374, %v1411
    %1413 = vdwg.mxu0
    %1414 = vmatpush.msra.mxu0 %v775
    %1415 = vmatpush.msra.mxu0 %v771
    %1416 = vmatpush.msra.mxu0 %v767
    %1417 = vmatpush.msra.mxu0 %v763
    %1418 = vmatpush.msra.mxu0 %v759
    %1419 = vmatpush.msra.mxu0 %v755
    %1420 = vmatpush.msra.mxu0 %v751
    %1421 = vmatpush.msra.mxu0 %v747
    %1422 = vmatpush.msra.mxu0 %v743
    %1423 = vmatpush.msra.mxu0 %v739
    %1424 = vmatpush.msra.mxu0 %v735
    %1425 = vmatpush.msra.mxu0 %v731
    %1426 = vmatpush.msra.mxu0 %v727
    %1427 = vmatpush.msra.mxu0 %v723
    %1428 = vmatpush.msra.mxu0 %v719
    %1429 = vmatpush.msra.mxu0 %v715
    %1430 = vmatmul.f32.gmra.mxu0 %v459
    %v1431 = vpop.f32.mrf.mxu0
    %v1432 = vadd.f32 0.0, %v1431
    %1433 = vmatmul.f32.gmra.mxu0 %v463
    %v1434 = vpop.f32.mrf.mxu0
    %v1435 = vadd.f32 0.0, %v1434
    %1436 = vmatmul.f32.gmra.mxu0 %v467
    %v1437 = vpop.f32.mrf.mxu0
    %v1438 = vadd.f32 0.0, %v1437
    %1439 = vmatmul.f32.gmra.mxu0 %v471
    %v1440 = vpop.f32.mrf.mxu0
    %v1441 = vadd.f32 0.0, %v1440
    %1442 = vmatmul.f32.gmra.mxu0 %v475
    %v1443 = vpop.f32.mrf.mxu0
    %v1444 = vadd.f32 0.0, %v1443
    %1445 = vmatmul.f32.gmra.mxu0 %v479
    %v1446 = vpop.f32.mrf.mxu0
    %v1447 = vadd.f32 0.0, %v1446
    %1448 = vmatmul.f32.gmra.mxu0 %v483
    %v1449 = vpop.f32.mrf.mxu0
    %v1450 = vadd.f32 0.0, %v1449
    %1451 = vdwg.mxu0
    %1452 = vmatpush.msra.mxu0 %v839
    %1453 = vmatpush.msra.mxu0 %v835
    %1454 = vmatpush.msra.mxu0 %v831
    %1455 = vmatpush.msra.mxu0 %v827
    %1456 = vmatpush.msra.mxu0 %v823
    %1457 = vmatpush.msra.mxu0 %v819
    %1458 = vmatpush.msra.mxu0 %v815
    %1459 = vmatpush.msra.mxu0 %v811
    %1460 = vmatpush.msra.mxu0 %v807
    %1461 = vmatpush.msra.mxu0 %v803
    %1462 = vmatpush.msra.mxu0 %v799
    %1463 = vmatpush.msra.mxu0 %v795
    %1464 = vmatpush.msra.mxu0 %v791
    %1465 = vmatpush.msra.mxu0 %v787
    %1466 = vmatpush.msra.mxu0 %v783
    %1467 = vmatpush.msra.mxu0 %v779
    %1468 = vmatmul.f32.gmra.mxu0 %v460
    %v1469 = vpop.f32.mrf.mxu0
    %v1470 = vadd.f32 %v1432, %v1469
    %1471 = vmatmul.f32.gmra.mxu0 %v464
    %v1472 = vpop.f32.mrf.mxu0
    %v1473 = vadd.f32 %v1435, %v1472
    %1474 = vmatmul.f32.gmra.mxu0 %v468
    %v1475 = vpop.f32.mrf.mxu0
    %v1476 = vadd.f32 %v1438, %v1475
    %1477 = vmatmul.f32.gmra.mxu0 %v472
    %v1478 = vpop.f32.mrf.mxu0
    %v1479 = vadd.f32 %v1441, %v1478
    %1480 = vmatmul.f32.gmra.mxu0 %v476
    %v1481 = vpop.f32.mrf.mxu0
    %v1482 = vadd.f32 %v1444, %v1481
    %1483 = vmatmul.f32.gmra.mxu0 %v480
    %v1484 = vpop.f32.mrf.mxu0
    %v1485 = vadd.f32 %v1447, %v1484
    %1486 = vmatmul.f32.gmra.mxu0 %v484
    %v1487 = vpop.f32.mrf.mxu0
    %v1488 = vadd.f32 %v1450, %v1487
    %1489 = vdwg.mxu0
    %1490 = vmatpush.msra.mxu0 %v903
    %1491 = vmatpush.msra.mxu0 %v899
    %1492 = vmatpush.msra.mxu0 %v895
    %1493 = vmatpush.msra.mxu0 %v891
    %1494 = vmatpush.msra.mxu0 %v887
    %1495 = vmatpush.msra.mxu0 %v883
    %1496 = vmatpush.msra.mxu0 %v879
    %1497 = vmatpush.msra.mxu0 %v875
    %1498 = vmatpush.msra.mxu0 %v871
    %1499 = vmatpush.msra.mxu0 %v867
    %1500 = vmatpush.msra.mxu0 %v863
    %1501 = vmatpush.msra.mxu0 %v859
    %1502 = vmatpush.msra.mxu0 %v855
    %1503 = vmatpush.msra.mxu0 %v851
    %1504 = vmatpush.msra.mxu0 %v847
    %1505 = vmatpush.msra.mxu0 %v843
    %1506 = vmatmul.f32.gmra.mxu0 %v461
    %v1507 = vpop.f32.mrf.mxu0
    %v1508 = vadd.f32 %v1470, %v1507
    %1509 = vmatmul.f32.gmra.mxu0 %v465
    %v1510 = vpop.f32.mrf.mxu0
    %v1511 = vadd.f32 %v1473, %v1510
    %1512 = vmatmul.f32.gmra.mxu0 %v469
    %v1513 = vpop.f32.mrf.mxu0
    %v1514 = vadd.f32 %v1476, %v1513
    %1515 = vmatmul.f32.gmra.mxu0 %v473
    %v1516 = vpop.f32.mrf.mxu0
    %v1517 = vadd.f32 %v1479, %v1516
    %1518 = vmatmul.f32.gmra.mxu0 %v477
    %v1519 = vpop.f32.mrf.mxu0
    %v1520 = vadd.f32 %v1482, %v1519
    %1521 = vmatmul.f32.gmra.mxu0 %v481
    %v1522 = vpop.f32.mrf.mxu0
    %v1523 = vadd.f32 %v1485, %v1522
    %1524 = vmatmul.f32.gmra.mxu0 %v485
    %v1525 = vpop.f32.mrf.mxu0
    %v1526 = vadd.f32 %v1488, %v1525
    %1527 = vdwg.mxu0
    %1528 = vmatpush.msra.mxu0 0.0
    %1529 = vmatpush.msra.mxu0 0.0
    %1530 = vmatpush.msra.mxu0 0.0
    %1531 = vmatpush.msra.mxu0 0.0
    %1532 = vmatpush.msra.mxu0 0.0
    %1533 = vmatpush.msra.mxu0 0.0
    %1534 = vmatpush.msra.mxu0 0.0
    %1535 = vmatpush.msra.mxu0 0.0
    %1536 = vmatpush.msra.mxu0 %v935
    %1537 = vmatpush.msra.mxu0 %v931
    %1538 = vmatpush.msra.mxu0 %v927
    %1539 = vmatpush.msra.mxu0 %v923
    %1540 = vmatpush.msra.mxu0 %v919
    %1541 = vmatpush.msra.mxu0 %v915
    %1542 = vmatpush.msra.mxu0 %v911
    %1543 = vmatpush.msra.mxu0 %v907
    %1544 = vmatmul.f32.gmra.mxu0 %v938
    %v1545 = vpop.f32.mrf.mxu0
    %v1546 = vadd.f32 %v1508, %v1545
    %1547 = vmatmul.f32.gmra.mxu0 %v941
    %v1548 = vpop.f32.mrf.mxu0
    %v1549 = vadd.f32 %v1511, %v1548
    %1550 = vmatmul.f32.gmra.mxu0 %v944
    %v1551 = vpop.f32.mrf.mxu0
    %v1552 = vadd.f32 %v1514, %v1551
    %1553 = vmatmul.f32.gmra.mxu0 %v947
    %v1554 = vpop.f32.mrf.mxu0
    %v1555 = vadd.f32 %v1517, %v1554
    %1556 = vmatmul.f32.gmra.mxu0 %v950
    %v1557 = vpop.f32.mrf.mxu0
    %v1558 = vadd.f32 %v1520, %v1557
    %1559 = vmatmul.f32.gmra.mxu0 %v953
    %v1560 = vpop.f32.mrf.mxu0
    %v1561 = vadd.f32 %v1523, %v1560
    %1562 = vmatmul.f32.gmra.mxu0 %v956
    %v1563 = vpop.f32.mrf.mxu0
    %v1564 = vadd.f32 %v1526, %v1563
    %1565 = vdwg.mxu0
    %v1567 = vsel %vm936, %v430, 0
    %v1570 = vsel %vm936, %v434, 0
    %v1573 = vsel %vm936, %v438, 0
    %v1576 = vsel %vm936, %v442, 0
    %v1579 = vsel %vm936, %v446, 0
    %v1582 = vsel %vm936, %v450, 0
    %v1585 = vsel %vm936, %v454, 0
    %1587 = vmatpush.msra.mxu0 %v547
    %1588 = vmatpush.msra.mxu0 %v543
    %1589 = vmatpush.msra.mxu0 %v539
    %1590 = vmatpush.msra.mxu0 %v535
    %1591 = vmatpush.msra.mxu0 %v531
    %1592 = vmatpush.msra.mxu0 %v527
    %1593 = vmatpush.msra.mxu0 %v523
    %1594 = vmatpush.msra.mxu0 %v519
    %1595 = vmatpush.msra.mxu0 %v515
    %1596 = vmatpush.msra.mxu0 %v511
    %1597 = vmatpush.msra.mxu0 %v507
    %1598 = vmatpush.msra.mxu0 %v503
    %1599 = vmatpush.msra.mxu0 %v499
    %1600 = vmatpush.msra.mxu0 %v495
    %1601 = vmatpush.msra.mxu0 %v491
    %1602 = vmatpush.msra.mxu0 %v487
    %1603 = vmatmul.f32.gmra.mxu0 %v427
    %v1604 = vpop.f32.mrf.mxu0
    %v1605 = vadd.f32 %v1090, %v1604
    %1606 = vmatmul.f32.gmra.mxu0 %v431
    %v1607 = vpop.f32.mrf.mxu0
    %v1608 = vadd.f32 %v1093, %v1607
    %1609 = vmatmul.f32.gmra.mxu0 %v435
    %v1610 = vpop.f32.mrf.mxu0
    %v1611 = vadd.f32 %v1096, %v1610
    %1612 = vmatmul.f32.gmra.mxu0 %v439
    %v1613 = vpop.f32.mrf.mxu0
    %v1614 = vadd.f32 %v1099, %v1613
    %1615 = vmatmul.f32.gmra.mxu0 %v443
    %v1616 = vpop.f32.mrf.mxu0
    %v1617 = vadd.f32 %v1102, %v1616
    %1618 = vmatmul.f32.gmra.mxu0 %v447
    %v1619 = vpop.f32.mrf.mxu0
    %v1620 = vadd.f32 %v1105, %v1619
    %1621 = vmatmul.f32.gmra.mxu0 %v451
    %v1622 = vpop.f32.mrf.mxu0
    %v1623 = vadd.f32 %v1108, %v1622
    %1624 = vdwg.mxu0
    %1625 = vmatpush.msra.mxu0 %v611
    %1626 = vmatpush.msra.mxu0 %v607
    %1627 = vmatpush.msra.mxu0 %v603
    %1628 = vmatpush.msra.mxu0 %v599
    %1629 = vmatpush.msra.mxu0 %v595
    %1630 = vmatpush.msra.mxu0 %v591
    %1631 = vmatpush.msra.mxu0 %v587
    %1632 = vmatpush.msra.mxu0 %v583
    %1633 = vmatpush.msra.mxu0 %v579
    %1634 = vmatpush.msra.mxu0 %v575
    %1635 = vmatpush.msra.mxu0 %v571
    %1636 = vmatpush.msra.mxu0 %v567
    %1637 = vmatpush.msra.mxu0 %v563
    %1638 = vmatpush.msra.mxu0 %v559
    %1639 = vmatpush.msra.mxu0 %v555
    %1640 = vmatpush.msra.mxu0 %v551
    %1641 = vmatmul.f32.gmra.mxu0 %v428
    %v1642 = vpop.f32.mrf.mxu0
    %v1643 = vadd.f32 %v1605, %v1642
    %1644 = vmatmul.f32.gmra.mxu0 %v432
    %v1645 = vpop.f32.mrf.mxu0
    %v1646 = vadd.f32 %v1608, %v1645
    %1647 = vmatmul.f32.gmra.mxu0 %v436
    %v1648 = vpop.f32.mrf.mxu0
    %v1649 = vadd.f32 %v1611, %v1648
    %1650 = vmatmul.f32.gmra.mxu0 %v440
    %v1651 = vpop.f32.mrf.mxu0
    %v1652 = vadd.f32 %v1614, %v1651
    %1653 = vmatmul.f32.gmra.mxu0 %v444
    %v1654 = vpop.f32.mrf.mxu0
    %v1655 = vadd.f32 %v1617, %v1654
    %1656 = vmatmul.f32.gmra.mxu0 %v448
    %v1657 = vpop.f32.mrf.mxu0
    %v1658 = vadd.f32 %v1620, %v1657
    %1659 = vmatmul.f32.gmra.mxu0 %v452
    %v1660 = vpop.f32.mrf.mxu0
    %v1661 = vadd.f32 %v1623, %v1660
    %1662 = vdwg.mxu0
    %1663 = vmatpush.msra.mxu0 %v675
    %1664 = vmatpush.msra.mxu0 %v671
    %1665 = vmatpush.msra.mxu0 %v667
    %1666 = vmatpush.msra.mxu0 %v663
    %1667 = vmatpush.msra.mxu0 %v659
    %1668 = vmatpush.msra.mxu0 %v655
    %1669 = vmatpush.msra.mxu0 %v651
    %1670 = vmatpush.msra.mxu0 %v647
    %1671 = vmatpush.msra.mxu0 %v643
    %1672 = vmatpush.msra.mxu0 %v639
    %1673 = vmatpush.msra.mxu0 %v635
    %1674 = vmatpush.msra.mxu0 %v631
    %1675 = vmatpush.msra.mxu0 %v627
    %1676 = vmatpush.msra.mxu0 %v623
    %1677 = vmatpush.msra.mxu0 %v619
    %1678 = vmatpush.msra.mxu0 %v615
    %1679 = vmatmul.f32.gmra.mxu0 %v429
    %v1680 = vpop.f32.mrf.mxu0
    %v1681 = vadd.f32 %v1643, %v1680
    %1682 = vmatmul.f32.gmra.mxu0 %v433
    %v1683 = vpop.f32.mrf.mxu0
    %v1684 = vadd.f32 %v1646, %v1683
    %1685 = vmatmul.f32.gmra.mxu0 %v437
    %v1686 = vpop.f32.mrf.mxu0
    %v1687 = vadd.f32 %v1649, %v1686
    %1688 = vmatmul.f32.gmra.mxu0 %v441
    %v1689 = vpop.f32.mrf.mxu0
    %v1690 = vadd.f32 %v1652, %v1689
    %1691 = vmatmul.f32.gmra.mxu0 %v445
    %v1692 = vpop.f32.mrf.mxu0
    %v1693 = vadd.f32 %v1655, %v1692
    %1694 = vmatmul.f32.gmra.mxu0 %v449
    %v1695 = vpop.f32.mrf.mxu0
    %v1696 = vadd.f32 %v1658, %v1695
    %1697 = vmatmul.f32.gmra.mxu0 %v453
    %v1698 = vpop.f32.mrf.mxu0
    %v1699 = vadd.f32 %v1661, %v1698
    %1700 = vdwg.mxu0
    %1701 = vmatpush.msra.mxu0 0.0
    %1702 = vmatpush.msra.mxu0 0.0
    %1703 = vmatpush.msra.mxu0 0.0
    %1704 = vmatpush.msra.mxu0 0.0
    %1705 = vmatpush.msra.mxu0 0.0
    %1706 = vmatpush.msra.mxu0 0.0
    %1707 = vmatpush.msra.mxu0 0.0
    %1708 = vmatpush.msra.mxu0 0.0
    %1709 = vmatpush.msra.mxu0 %v707
    %1710 = vmatpush.msra.mxu0 %v703
    %1711 = vmatpush.msra.mxu0 %v699
    %1712 = vmatpush.msra.mxu0 %v695
    %1713 = vmatpush.msra.mxu0 %v691
    %1714 = vmatpush.msra.mxu0 %v687
    %1715 = vmatpush.msra.mxu0 %v683
    %1716 = vmatpush.msra.mxu0 %v679
    %1717 = vmatmul.f32.gmra.mxu0 %v1567
    %v1718 = vpop.f32.mrf.mxu0
    %v1719 = vadd.f32 %v1681, %v1718
    %1720 = vmatmul.f32.gmra.mxu0 %v1570
    %v1721 = vpop.f32.mrf.mxu0
    %v1722 = vadd.f32 %v1684, %v1721
    %1723 = vmatmul.f32.gmra.mxu0 %v1573
    %v1724 = vpop.f32.mrf.mxu0
    %v1725 = vadd.f32 %v1687, %v1724
    %1726 = vmatmul.f32.gmra.mxu0 %v1576
    %v1727 = vpop.f32.mrf.mxu0
    %v1728 = vadd.f32 %v1690, %v1727
    %1729 = vmatmul.f32.gmra.mxu0 %v1579
    %v1730 = vpop.f32.mrf.mxu0
    %v1731 = vadd.f32 %v1693, %v1730
    %1732 = vmatmul.f32.gmra.mxu0 %v1582
    %v1733 = vpop.f32.mrf.mxu0
    %v1734 = vadd.f32 %v1696, %v1733
    %1735 = vmatmul.f32.gmra.mxu0 %v1585
    %v1736 = vpop.f32.mrf.mxu0
    %v1737 = vadd.f32 %v1699, %v1736
    %1738 = vdwg.mxu0
    %1739 = vmatpush.msra.mxu0 %v548
    %1740 = vmatpush.msra.mxu0 %v544
    %1741 = vmatpush.msra.mxu0 %v540
    %1742 = vmatpush.msra.mxu0 %v536
    %1743 = vmatpush.msra.mxu0 %v532
    %1744 = vmatpush.msra.mxu0 %v528
    %1745 = vmatpush.msra.mxu0 %v524
    %1746 = vmatpush.msra.mxu0 %v520
    %1747 = vmatpush.msra.mxu0 %v516
    %1748 = vmatpush.msra.mxu0 %v512
    %1749 = vmatpush.msra.mxu0 %v508
    %1750 = vmatpush.msra.mxu0 %v504
    %1751 = vmatpush.msra.mxu0 %v500
    %1752 = vmatpush.msra.mxu0 %v496
    %1753 = vmatpush.msra.mxu0 %v492
    %1754 = vmatpush.msra.mxu0 %v488
    %1755 = vmatmul.f32.gmra.mxu0 %v427
    %v1756 = vpop.f32.mrf.mxu0
    %v1757 = vadd.f32 %v1242, %v1756
    %1758 = vmatmul.f32.gmra.mxu0 %v431
    %v1759 = vpop.f32.mrf.mxu0
    %v1760 = vadd.f32 %v1245, %v1759
    %1761 = vmatmul.f32.gmra.mxu0 %v435
    %v1762 = vpop.f32.mrf.mxu0
    %v1763 = vadd.f32 %v1248, %v1762
    %1764 = vmatmul.f32.gmra.mxu0 %v439
    %v1765 = vpop.f32.mrf.mxu0
    %v1766 = vadd.f32 %v1251, %v1765
    %1767 = vmatmul.f32.gmra.mxu0 %v443
    %v1768 = vpop.f32.mrf.mxu0
    %v1769 = vadd.f32 %v1254, %v1768
    %1770 = vmatmul.f32.gmra.mxu0 %v447
    %v1771 = vpop.f32.mrf.mxu0
    %v1772 = vadd.f32 %v1257, %v1771
    %1773 = vmatmul.f32.gmra.mxu0 %v451
    %v1774 = vpop.f32.mrf.mxu0
    %v1775 = vadd.f32 %v1260, %v1774
    %1776 = vdwg.mxu0
    %1777 = vmatpush.msra.mxu0 %v612
    %1778 = vmatpush.msra.mxu0 %v608
    %1779 = vmatpush.msra.mxu0 %v604
    %1780 = vmatpush.msra.mxu0 %v600
    %1781 = vmatpush.msra.mxu0 %v596
    %1782 = vmatpush.msra.mxu0 %v592
    %1783 = vmatpush.msra.mxu0 %v588
    %1784 = vmatpush.msra.mxu0 %v584
    %1785 = vmatpush.msra.mxu0 %v580
    %1786 = vmatpush.msra.mxu0 %v576
    %1787 = vmatpush.msra.mxu0 %v572
    %1788 = vmatpush.msra.mxu0 %v568
    %1789 = vmatpush.msra.mxu0 %v564
    %1790 = vmatpush.msra.mxu0 %v560
    %1791 = vmatpush.msra.mxu0 %v556
    %1792 = vmatpush.msra.mxu0 %v552
    %1793 = vmatmul.f32.gmra.mxu0 %v428
    %v1794 = vpop.f32.mrf.mxu0
    %v1795 = vadd.f32 %v1757, %v1794
    %1796 = vmatmul.f32.gmra.mxu0 %v432
    %v1797 = vpop.f32.mrf.mxu0
    %v1798 = vadd.f32 %v1760, %v1797
    %1799 = vmatmul.f32.gmra.mxu0 %v436
    %v1800 = vpop.f32.mrf.mxu0
    %v1801 = vadd.f32 %v1763, %v1800
    %1802 = vmatmul.f32.gmra.mxu0 %v440
    %v1803 = vpop.f32.mrf.mxu0
    %v1804 = vadd.f32 %v1766, %v1803
    %1805 = vmatmul.f32.gmra.mxu0 %v444
    %v1806 = vpop.f32.mrf.mxu0
    %v1807 = vadd.f32 %v1769, %v1806
    %1808 = vmatmul.f32.gmra.mxu0 %v448
    %v1809 = vpop.f32.mrf.mxu0
    %v1810 = vadd.f32 %v1772, %v1809
    %1811 = vmatmul.f32.gmra.mxu0 %v452
    %v1812 = vpop.f32.mrf.mxu0
    %v1813 = vadd.f32 %v1775, %v1812
    %1814 = vdwg.mxu0
    %1815 = vmatpush.msra.mxu0 %v676
    %1816 = vmatpush.msra.mxu0 %v672
    %1817 = vmatpush.msra.mxu0 %v668
    %1818 = vmatpush.msra.mxu0 %v664
    %1819 = vmatpush.msra.mxu0 %v660
    %1820 = vmatpush.msra.mxu0 %v656
    %1821 = vmatpush.msra.mxu0 %v652
    %1822 = vmatpush.msra.mxu0 %v648
    %1823 = vmatpush.msra.mxu0 %v644
    %1824 = vmatpush.msra.mxu0 %v640
    %1825 = vmatpush.msra.mxu0 %v636
    %1826 = vmatpush.msra.mxu0 %v632
    %1827 = vmatpush.msra.mxu0 %v628
    %1828 = vmatpush.msra.mxu0 %v624
    %1829 = vmatpush.msra.mxu0 %v620
    %1830 = vmatpush.msra.mxu0 %v616
    %1831 = vmatmul.f32.gmra.mxu0 %v429
    %v1832 = vpop.f32.mrf.mxu0
    %v1833 = vadd.f32 %v1795, %v1832
    %1834 = vmatmul.f32.gmra.mxu0 %v433
    %v1835 = vpop.f32.mrf.mxu0
    %v1836 = vadd.f32 %v1798, %v1835
    %1837 = vmatmul.f32.gmra.mxu0 %v437
    %v1838 = vpop.f32.mrf.mxu0
    %v1839 = vadd.f32 %v1801, %v1838
    %1840 = vmatmul.f32.gmra.mxu0 %v441
    %v1841 = vpop.f32.mrf.mxu0
    %v1842 = vadd.f32 %v1804, %v1841
    %1843 = vmatmul.f32.gmra.mxu0 %v445
    %v1844 = vpop.f32.mrf.mxu0
    %v1845 = vadd.f32 %v1807, %v1844
    %1846 = vmatmul.f32.gmra.mxu0 %v449
    %v1847 = vpop.f32.mrf.mxu0
    %v1848 = vadd.f32 %v1810, %v1847
    %1849 = vmatmul.f32.gmra.mxu0 %v453
    %v1850 = vpop.f32.mrf.mxu0
    %v1851 = vadd.f32 %v1813, %v1850
    %1852 = vdwg.mxu0
    %1853 = vmatpush.msra.mxu0 0.0
    %1854 = vmatpush.msra.mxu0 0.0
    %1855 = vmatpush.msra.mxu0 0.0
    %1856 = vmatpush.msra.mxu0 0.0
    %1857 = vmatpush.msra.mxu0 0.0
    %1858 = vmatpush.msra.mxu0 0.0
    %1859 = vmatpush.msra.mxu0 0.0
    %1860 = vmatpush.msra.mxu0 0.0
    %1861 = vmatpush.msra.mxu0 %v708
    %1862 = vmatpush.msra.mxu0 %v704
    %1863 = vmatpush.msra.mxu0 %v700
    %1864 = vmatpush.msra.mxu0 %v696
    %1865 = vmatpush.msra.mxu0 %v692
    %1866 = vmatpush.msra.mxu0 %v688
    %1867 = vmatpush.msra.mxu0 %v684
    %1868 = vmatpush.msra.mxu0 %v680
    %1869 = vmatmul.f32.gmra.mxu0 %v1567
    %v1870 = vpop.f32.mrf.mxu0
    %v1871 = vadd.f32 %v1833, %v1870
    %1872 = vmatmul.f32.gmra.mxu0 %v1570
    %v1873 = vpop.f32.mrf.mxu0
    %v1874 = vadd.f32 %v1836, %v1873
    %1875 = vmatmul.f32.gmra.mxu0 %v1573
    %v1876 = vpop.f32.mrf.mxu0
    %v1877 = vadd.f32 %v1839, %v1876
    %1878 = vmatmul.f32.gmra.mxu0 %v1576
    %v1879 = vpop.f32.mrf.mxu0
    %v1880 = vadd.f32 %v1842, %v1879
    %1881 = vmatmul.f32.gmra.mxu0 %v1579
    %v1882 = vpop.f32.mrf.mxu0
    %v1883 = vadd.f32 %v1845, %v1882
    %1884 = vmatmul.f32.gmra.mxu0 %v1582
    %v1885 = vpop.f32.mrf.mxu0
    %v1886 = vadd.f32 %v1848, %v1885
    %1887 = vmatmul.f32.gmra.mxu0 %v1585
    %v1888 = vpop.f32.mrf.mxu0
    %v1889 = vadd.f32 %v1851, %v1888
    %1890 = vdwg.mxu0
    %1891 = vmatpush.msra.mxu0 %v549
    %1892 = vmatpush.msra.mxu0 %v545
    %1893 = vmatpush.msra.mxu0 %v541
    %1894 = vmatpush.msra.mxu0 %v537
    %1895 = vmatpush.msra.mxu0 %v533
    %1896 = vmatpush.msra.mxu0 %v529
    %1897 = vmatpush.msra.mxu0 %v525
    %1898 = vmatpush.msra.mxu0 %v521
    %1899 = vmatpush.msra.mxu0 %v517
    %1900 = vmatpush.msra.mxu0 %v513
    %1901 = vmatpush.msra.mxu0 %v509
    %1902 = vmatpush.msra.mxu0 %v505
    %1903 = vmatpush.msra.mxu0 %v501
    %1904 = vmatpush.msra.mxu0 %v497
    %1905 = vmatpush.msra.mxu0 %v493
    %1906 = vmatpush.msra.mxu0 %v489
    %1907 = vmatmul.f32.gmra.mxu0 %v427
    %v1908 = vpop.f32.mrf.mxu0
    %v1909 = vadd.f32 %v1394, %v1908
    %1910 = vmatmul.f32.gmra.mxu0 %v431
    %v1911 = vpop.f32.mrf.mxu0
    %v1912 = vadd.f32 %v1397, %v1911
    %1913 = vmatmul.f32.gmra.mxu0 %v435
    %v1914 = vpop.f32.mrf.mxu0
    %v1915 = vadd.f32 %v1400, %v1914
    %1916 = vmatmul.f32.gmra.mxu0 %v439
    %v1917 = vpop.f32.mrf.mxu0
    %v1918 = vadd.f32 %v1403, %v1917
    %1919 = vmatmul.f32.gmra.mxu0 %v443
    %v1920 = vpop.f32.mrf.mxu0
    %v1921 = vadd.f32 %v1406, %v1920
    %1922 = vmatmul.f32.gmra.mxu0 %v447
    %v1923 = vpop.f32.mrf.mxu0
    %v1924 = vadd.f32 %v1409, %v1923
    %1925 = vmatmul.f32.gmra.mxu0 %v451
    %v1926 = vpop.f32.mrf.mxu0
    %v1927 = vadd.f32 %v1412, %v1926
    %1928 = vdwg.mxu0
    %1929 = vmatpush.msra.mxu0 %v613
    %1930 = vmatpush.msra.mxu0 %v609
    %1931 = vmatpush.msra.mxu0 %v605
    %1932 = vmatpush.msra.mxu0 %v601
    %1933 = vmatpush.msra.mxu0 %v597
    %1934 = vmatpush.msra.mxu0 %v593
    %1935 = vmatpush.msra.mxu0 %v589
    %1936 = vmatpush.msra.mxu0 %v585
    %1937 = vmatpush.msra.mxu0 %v581
    %1938 = vmatpush.msra.mxu0 %v577
    %1939 = vmatpush.msra.mxu0 %v573
    %1940 = vmatpush.msra.mxu0 %v569
    %1941 = vmatpush.msra.mxu0 %v565
    %1942 = vmatpush.msra.mxu0 %v561
    %1943 = vmatpush.msra.mxu0 %v557
    %1944 = vmatpush.msra.mxu0 %v553
    %1945 = vmatmul.f32.gmra.mxu0 %v428
    %v1946 = vpop.f32.mrf.mxu0
    %v1947 = vadd.f32 %v1909, %v1946
    %1948 = vmatmul.f32.gmra.mxu0 %v432
    %v1949 = vpop.f32.mrf.mxu0
    %v1950 = vadd.f32 %v1912, %v1949
    %1951 = vmatmul.f32.gmra.mxu0 %v436
    %v1952 = vpop.f32.mrf.mxu0
    %v1953 = vadd.f32 %v1915, %v1952
    %1954 = vmatmul.f32.gmra.mxu0 %v440
    %v1955 = vpop.f32.mrf.mxu0
    %v1956 = vadd.f32 %v1918, %v1955
    %1957 = vmatmul.f32.gmra.mxu0 %v444
    %v1958 = vpop.f32.mrf.mxu0
    %v1959 = vadd.f32 %v1921, %v1958
    %1960 = vmatmul.f32.gmra.mxu0 %v448
    %v1961 = vpop.f32.mrf.mxu0
    %v1962 = vadd.f32 %v1924, %v1961
    %1963 = vmatmul.f32.gmra.mxu0 %v452
    %v1964 = vpop.f32.mrf.mxu0
    %v1965 = vadd.f32 %v1927, %v1964
    %1966 = vdwg.mxu0
    %1967 = vmatpush.msra.mxu0 %v677
    %1968 = vmatpush.msra.mxu0 %v673
    %1969 = vmatpush.msra.mxu0 %v669
    %1970 = vmatpush.msra.mxu0 %v665
    %1971 = vmatpush.msra.mxu0 %v661
    %1972 = vmatpush.msra.mxu0 %v657
    %1973 = vmatpush.msra.mxu0 %v653
    %1974 = vmatpush.msra.mxu0 %v649
    %1975 = vmatpush.msra.mxu0 %v645
    %1976 = vmatpush.msra.mxu0 %v641
    %1977 = vmatpush.msra.mxu0 %v637
    %1978 = vmatpush.msra.mxu0 %v633
    %1979 = vmatpush.msra.mxu0 %v629
    %1980 = vmatpush.msra.mxu0 %v625
    %1981 = vmatpush.msra.mxu0 %v621
    %1982 = vmatpush.msra.mxu0 %v617
    %1983 = vmatmul.f32.gmra.mxu0 %v429
    %v1984 = vpop.f32.mrf.mxu0
    %v1985 = vadd.f32 %v1947, %v1984
    %1986 = vmatmul.f32.gmra.mxu0 %v433
    %v1987 = vpop.f32.mrf.mxu0
    %v1988 = vadd.f32 %v1950, %v1987
    %1989 = vmatmul.f32.gmra.mxu0 %v437
    %v1990 = vpop.f32.mrf.mxu0
    %v1991 = vadd.f32 %v1953, %v1990
    %1992 = vmatmul.f32.gmra.mxu0 %v441
    %v1993 = vpop.f32.mrf.mxu0
    %v1994 = vadd.f32 %v1956, %v1993
    %1995 = vmatmul.f32.gmra.mxu0 %v445
    %v1996 = vpop.f32.mrf.mxu0
    %v1997 = vadd.f32 %v1959, %v1996
    %1998 = vmatmul.f32.gmra.mxu0 %v449
    %v1999 = vpop.f32.mrf.mxu0
    %v2000 = vadd.f32 %v1962, %v1999
    %2001 = vmatmul.f32.gmra.mxu0 %v453
    %v2002 = vpop.f32.mrf.mxu0
    %v2003 = vadd.f32 %v1965, %v2002
    %2004 = vdwg.mxu0
    %2005 = vmatpush.msra.mxu0 0.0
    %2006 = vmatpush.msra.mxu0 0.0
    %2007 = vmatpush.msra.mxu0 0.0
    %2008 = vmatpush.msra.mxu0 0.0
    %2009 = vmatpush.msra.mxu0 0.0
    %2010 = vmatpush.msra.mxu0 0.0
    %2011 = vmatpush.msra.mxu0 0.0
    %2012 = vmatpush.msra.mxu0 0.0
    %2013 = vmatpush.msra.mxu0 %v709
    %2014 = vmatpush.msra.mxu0 %v705
    %2015 = vmatpush.msra.mxu0 %v701
    %2016 = vmatpush.msra.mxu0 %v697
    %2017 = vmatpush.msra.mxu0 %v693
    %2018 = vmatpush.msra.mxu0 %v689
    %2019 = vmatpush.msra.mxu0 %v685
    %2020 = vmatpush.msra.mxu0 %v681
    %2021 = vmatmul.f32.gmra.mxu0 %v1567
    %v2022 = vpop.f32.mrf.mxu0
    %v2023 = vadd.f32 %v1985, %v2022
    %2024 = vmatmul.f32.gmra.mxu0 %v1570
    %v2025 = vpop.f32.mrf.mxu0
    %v2026 = vadd.f32 %v1988, %v2025
    %2027 = vmatmul.f32.gmra.mxu0 %v1573
    %v2028 = vpop.f32.mrf.mxu0
    %v2029 = vadd.f32 %v1991, %v2028
    %2030 = vmatmul.f32.gmra.mxu0 %v1576
    %v2031 = vpop.f32.mrf.mxu0
    %v2032 = vadd.f32 %v1994, %v2031
    %2033 = vmatmul.f32.gmra.mxu0 %v1579
    %v2034 = vpop.f32.mrf.mxu0
    %v2035 = vadd.f32 %v1997, %v2034
    %2036 = vmatmul.f32.gmra.mxu0 %v1582
    %v2037 = vpop.f32.mrf.mxu0
    %v2038 = vadd.f32 %v2000, %v2037
    %2039 = vmatmul.f32.gmra.mxu0 %v1585
    %v2040 = vpop.f32.mrf.mxu0
    %v2041 = vadd.f32 %v2003, %v2040
    %2042 = vdwg.mxu0
    %2043 = vmatpush.msra.mxu0 %v550
    %2044 = vmatpush.msra.mxu0 %v546
    %2045 = vmatpush.msra.mxu0 %v542
    %2046 = vmatpush.msra.mxu0 %v538
    %2047 = vmatpush.msra.mxu0 %v534
    %2048 = vmatpush.msra.mxu0 %v530
    %2049 = vmatpush.msra.mxu0 %v526
    %2050 = vmatpush.msra.mxu0 %v522
    %2051 = vmatpush.msra.mxu0 %v518
    %2052 = vmatpush.msra.mxu0 %v514
    %2053 = vmatpush.msra.mxu0 %v510
    %2054 = vmatpush.msra.mxu0 %v506
    %2055 = vmatpush.msra.mxu0 %v502
    %2056 = vmatpush.msra.mxu0 %v498
    %2057 = vmatpush.msra.mxu0 %v494
    %2058 = vmatpush.msra.mxu0 %v490
    %2059 = vmatmul.f32.gmra.mxu0 %v427
    %v2060 = vpop.f32.mrf.mxu0
    %v2061 = vadd.f32 %v1546, %v2060
    %2062 = vmatmul.f32.gmra.mxu0 %v431
    %v2063 = vpop.f32.mrf.mxu0
    %v2064 = vadd.f32 %v1549, %v2063
    %2065 = vmatmul.f32.gmra.mxu0 %v435
    %v2066 = vpop.f32.mrf.mxu0
    %v2067 = vadd.f32 %v1552, %v2066
    %2068 = vmatmul.f32.gmra.mxu0 %v439
    %v2069 = vpop.f32.mrf.mxu0
    %v2070 = vadd.f32 %v1555, %v2069
    %2071 = vmatmul.f32.gmra.mxu0 %v443
    %v2072 = vpop.f32.mrf.mxu0
    %v2073 = vadd.f32 %v1558, %v2072
    %2074 = vmatmul.f32.gmra.mxu0 %v447
    %v2075 = vpop.f32.mrf.mxu0
    %v2076 = vadd.f32 %v1561, %v2075
    %2077 = vmatmul.f32.gmra.mxu0 %v451
    %v2078 = vpop.f32.mrf.mxu0
    %v2079 = vadd.f32 %v1564, %v2078
    %2080 = vdwg.mxu0
    %2081 = vmatpush.msra.mxu0 %v614
    %2082 = vmatpush.msra.mxu0 %v610
    %2083 = vmatpush.msra.mxu0 %v606
    %2084 = vmatpush.msra.mxu0 %v602
    %2085 = vmatpush.msra.mxu0 %v598
    %2086 = vmatpush.msra.mxu0 %v594
    %2087 = vmatpush.msra.mxu0 %v590
    %2088 = vmatpush.msra.mxu0 %v586
    %2089 = vmatpush.msra.mxu0 %v582
    %2090 = vmatpush.msra.mxu0 %v578
    %2091 = vmatpush.msra.mxu0 %v574
    %2092 = vmatpush.msra.mxu0 %v570
    %2093 = vmatpush.msra.mxu0 %v566
    %2094 = vmatpush.msra.mxu0 %v562
    %2095 = vmatpush.msra.mxu0 %v558
    %2096 = vmatpush.msra.mxu0 %v554
    %2097 = vmatmul.f32.gmra.mxu0 %v428
    %v2098 = vpop.f32.mrf.mxu0
    %v2099 = vadd.f32 %v2061, %v2098
    %2100 = vmatmul.f32.gmra.mxu0 %v432
    %v2101 = vpop.f32.mrf.mxu0
    %v2102 = vadd.f32 %v2064, %v2101
    %2103 = vmatmul.f32.gmra.mxu0 %v436
    %v2104 = vpop.f32.mrf.mxu0
    %v2105 = vadd.f32 %v2067, %v2104
    %2106 = vmatmul.f32.gmra.mxu0 %v440
    %v2107 = vpop.f32.mrf.mxu0
    %v2108 = vadd.f32 %v2070, %v2107
    %2109 = vmatmul.f32.gmra.mxu0 %v444
    %v2110 = vpop.f32.mrf.mxu0
    %v2111 = vadd.f32 %v2073, %v2110
    %2112 = vmatmul.f32.gmra.mxu0 %v448
    %v2113 = vpop.f32.mrf.mxu0
    %v2114 = vadd.f32 %v2076, %v2113
    %2115 = vmatmul.f32.gmra.mxu0 %v452
    %v2116 = vpop.f32.mrf.mxu0
    %v2117 = vadd.f32 %v2079, %v2116
    %2118 = vdwg.mxu0
    %2119 = vmatpush.msra.mxu0 %v678
    %2120 = vmatpush.msra.mxu0 %v674
    %2121 = vmatpush.msra.mxu0 %v670
    %2122 = vmatpush.msra.mxu0 %v666
    %2123 = vmatpush.msra.mxu0 %v662
    %2124 = vmatpush.msra.mxu0 %v658
    %2125 = vmatpush.msra.mxu0 %v654
    %2126 = vmatpush.msra.mxu0 %v650
    %2127 = vmatpush.msra.mxu0 %v646
    %2128 = vmatpush.msra.mxu0 %v642
    %2129 = vmatpush.msra.mxu0 %v638
    %2130 = vmatpush.msra.mxu0 %v634
    %2131 = vmatpush.msra.mxu0 %v630
    %2132 = vmatpush.msra.mxu0 %v626
    %2133 = vmatpush.msra.mxu0 %v622
    %2134 = vmatpush.msra.mxu0 %v618
    %2135 = vmatmul.f32.gmra.mxu0 %v429
    %v2136 = vpop.f32.mrf.mxu0
    %v2137 = vadd.f32 %v2099, %v2136
    %2138 = vmatmul.f32.gmra.mxu0 %v433
    %v2139 = vpop.f32.mrf.mxu0
    %v2140 = vadd.f32 %v2102, %v2139
    %2141 = vmatmul.f32.gmra.mxu0 %v437
    %v2142 = vpop.f32.mrf.mxu0
    %v2143 = vadd.f32 %v2105, %v2142
    %2144 = vmatmul.f32.gmra.mxu0 %v441
    %v2145 = vpop.f32.mrf.mxu0
    %v2146 = vadd.f32 %v2108, %v2145
    %2147 = vmatmul.f32.gmra.mxu0 %v445
    %v2148 = vpop.f32.mrf.mxu0
    %v2149 = vadd.f32 %v2111, %v2148
    %2150 = vmatmul.f32.gmra.mxu0 %v449
    %v2151 = vpop.f32.mrf.mxu0
    %v2152 = vadd.f32 %v2114, %v2151
    %2153 = vmatmul.f32.gmra.mxu0 %v453
    %v2154 = vpop.f32.mrf.mxu0
    %v2155 = vadd.f32 %v2117, %v2154
    %2156 = vdwg.mxu0
    %2157 = vmatpush.msra.mxu0 0.0
    %2158 = vmatpush.msra.mxu0 0.0
    %2159 = vmatpush.msra.mxu0 0.0
    %2160 = vmatpush.msra.mxu0 0.0
    %2161 = vmatpush.msra.mxu0 0.0
    %2162 = vmatpush.msra.mxu0 0.0
    %2163 = vmatpush.msra.mxu0 0.0
    %2164 = vmatpush.msra.mxu0 0.0
    %2165 = vmatpush.msra.mxu0 %v710
    %2166 = vmatpush.msra.mxu0 %v706
    %2167 = vmatpush.msra.mxu0 %v702
    %2168 = vmatpush.msra.mxu0 %v698
    %2169 = vmatpush.msra.mxu0 %v694
    %2170 = vmatpush.msra.mxu0 %v690
    %2171 = vmatpush.msra.mxu0 %v686
    %2172 = vmatpush.msra.mxu0 %v682
    %2173 = vmatmul.f32.gmra.mxu0 %v1567
    %v2174 = vpop.f32.mrf.mxu0
    %v2175 = vadd.f32 %v2137, %v2174
    %2176 = vmatmul.f32.gmra.mxu0 %v1570
    %v2177 = vpop.f32.mrf.mxu0
    %v2178 = vadd.f32 %v2140, %v2177
    %2179 = vmatmul.f32.gmra.mxu0 %v1573
    %v2180 = vpop.f32.mrf.mxu0
    %v2181 = vadd.f32 %v2143, %v2180
    %2182 = vmatmul.f32.gmra.mxu0 %v1576
    %v2183 = vpop.f32.mrf.mxu0
    %v2184 = vadd.f32 %v2146, %v2183
    %2185 = vmatmul.f32.gmra.mxu0 %v1579
    %v2186 = vpop.f32.mrf.mxu0
    %v2187 = vadd.f32 %v2149, %v2186
    %2188 = vmatmul.f32.gmra.mxu0 %v1582
    %v2189 = vpop.f32.mrf.mxu0
    %v2190 = vadd.f32 %v2152, %v2189
    %2191 = vmatmul.f32.gmra.mxu0 %v1585
    %v2192 = vpop.f32.mrf.mxu0
    %v2193 = vadd.f32 %v2155, %v2192
    %2194 = vdwg.mxu0
    %s2195 = scalar_lea.vmem %s2, 3584
    %v2196 = vld [vmem:[%s2195] sm:$0xff]
    %v2197 = vld [vmem:[%s2195 + $0x8] sm:$0xff]
    %v2198 = vld [vmem:[%s2195 + $0x10] sm:$0xff]
    %v2199 = vld [vmem:[%s2195 + $0x18] sm:$0xff]
    %v2200 = vld [vmem:[%s2195 + $0x20] sm:$0xff]
    %v2201 = vld [vmem:[%s2195 + $0x28] sm:$0xff]
    %v2202 = vld [vmem:[%s2195 + $0x30] sm:$0xff]
    %v2203 = vld [vmem:[%s2195 + $0x38] sm:$0xff]
    %v2204 = vld [vmem:[%s2195 + $0x40] sm:$0xff]
    %v2205 = vld [vmem:[%s2195 + $0x48] sm:$0xff]
    %v2206 = vld [vmem:[%s2195 + $0x50] sm:$0xff]
    %v2207 = vld [vmem:[%s2195 + $0x58] sm:$0xff]
    %v2208 = vld [vmem:[%s2195 + $0x60] sm:$0xff]
    %v2209 = vld [vmem:[%s2195 + $0x68] sm:$0xff]
    %v2210 = vld [vmem:[%s2195 + $0x70] sm:$0xff]
    %v2211 = vld [vmem:[%s2195 + $0x78] sm:$0xff]
    %v2212 = vld [vmem:[%s2195 + $0x80] sm:$0xff]
    %v2213 = vld [vmem:[%s2195 + $0x88] sm:$0xff]
    %v2214 = vld [vmem:[%s2195 + $0x90] sm:$0xff]
    %v2215 = vld [vmem:[%s2195 + $0x98] sm:$0xff]
    %v2216 = vld [vmem:[%s2195 + $0xa0] sm:$0xff]
    %v2217 = vld [vmem:[%s2195 + $0xa8] sm:$0xff]
    %v2218 = vld [vmem:[%s2195 + $0xb0] sm:$0xff]
    %v2219 = vld [vmem:[%s2195 + $0xb8] sm:$0xff]
    %v2220 = vld [vmem:[%s2195 + $0xc0] sm:$0xff]
    %v2221 = vld [vmem:[%s2195 + $0xc8] sm:$0xff]
    %v2222 = vld [vmem:[%s2195 + $0xd0] sm:$0xff]
    %v2223 = vld [vmem:[%s2195 + $0xd8] sm:$0xff]
    %v2224 = vld [vmem:[%s2195 + $0xe0] sm:$0xff]
    %v2225 = vld [vmem:[%s2195 + $0xe8] sm:$0xff]
    %v2226 = vld [vmem:[%s2195 + $0xf0] sm:$0xff]
    %v2227 = vld [vmem:[%s2195 + $0xf8] sm:$0xff]
    %v2228 = vld [vmem:[%s2195 + $0x100] sm:$0xff]
    %v2229 = vld [vmem:[%s2195 + $0x108] sm:$0xff]
    %v2230 = vld [vmem:[%s2195 + $0x110] sm:$0xff]
    %v2231 = vld [vmem:[%s2195 + $0x118] sm:$0xff]
    %v2232 = vld [vmem:[%s2195 + $0x120] sm:$0xff]
    %v2233 = vld [vmem:[%s2195 + $0x128] sm:$0xff]
    %v2234 = vld [vmem:[%s2195 + $0x130] sm:$0xff]
    %v2235 = vld [vmem:[%s2195 + $0x138] sm:$0xff]
    %v2236 = vld [vmem:[%s2195 + $0x140] sm:$0xff]
    %v2237 = vld [vmem:[%s2195 + $0x148] sm:$0xff]
    %v2238 = vld [vmem:[%s2195 + $0x150] sm:$0xff]
    %v2239 = vld [vmem:[%s2195 + $0x158] sm:$0xff]
    %v2240 = vld [vmem:[%s2195 + $0x160] sm:$0xff]
    %v2241 = vld [vmem:[%s2195 + $0x168] sm:$0xff]
    %v2242 = vld [vmem:[%s2195 + $0x170] sm:$0xff]
    %v2243 = vld [vmem:[%s2195 + $0x178] sm:$0xff]
    %v2244 = vld [vmem:[%s2195 + $0x180] sm:$0xff]
    %v2245 = vld [vmem:[%s2195 + $0x188] sm:$0xff]
    %v2246 = vld [vmem:[%s2195 + $0x190] sm:$0xff]
    %v2247 = vld [vmem:[%s2195 + $0x198] sm:$0xff]
    %v2248 = vld [vmem:[%s2195 + $0x1a0] sm:$0xff]
    %v2249 = vld [vmem:[%s2195 + $0x1a8] sm:$0xff]
    %v2250 = vld [vmem:[%s2195 + $0x1b0] sm:$0xff]
    %v2251 = vld [vmem:[%s2195 + $0x1b8] sm:$0xff]
    %v2252 = vld [vmem:[%s2195 + $0x1c0] sm:$0xff]
    %v2253 = vld [vmem:[%s2195 + $0x1c8] sm:$0xff]
    %v2254 = vld [vmem:[%s2195 + $0x1d0] sm:$0xff]
    %v2255 = vld [vmem:[%s2195 + $0x1d8] sm:$0xff]
    %v2256 = vld [vmem:[%s2195 + $0x1e0] sm:$0xff]
    %v2257 = vld [vmem:[%s2195 + $0x1e8] sm:$0xff]
    %v2258 = vld [vmem:[%s2195 + $0x1f0] sm:$0xff]
    %v2259 = vld [vmem:[%s2195 + $0x1f8] sm:$0xff]
    %v2260 = vld [vmem:[%s2195 + $0x200] sm:$0xff]
    %v2261 = vld [vmem:[%s2195 + $0x208] sm:$0xff]
    %v2262 = vld [vmem:[%s2195 + $0x210] sm:$0xff]
    %v2263 = vld [vmem:[%s2195 + $0x218] sm:$0xff]
    %v2264 = vld [vmem:[%s2195 + $0x220] sm:$0xff]
    %v2265 = vld [vmem:[%s2195 + $0x228] sm:$0xff]
    %v2266 = vld [vmem:[%s2195 + $0x230] sm:$0xff]
    %v2267 = vld [vmem:[%s2195 + $0x238] sm:$0xff]
    %v2268 = vld [vmem:[%s2195 + $0x240] sm:$0xff]
    %v2269 = vld [vmem:[%s2195 + $0x248] sm:$0xff]
    %v2270 = vld [vmem:[%s2195 + $0x250] sm:$0xff]
    %v2271 = vld [vmem:[%s2195 + $0x258] sm:$0xff]
    %v2272 = vld [vmem:[%s2195 + $0x260] sm:$0xff]
    %v2273 = vld [vmem:[%s2195 + $0x268] sm:$0xff]
    %v2274 = vld [vmem:[%s2195 + $0x270] sm:$0xff]
    %v2275 = vld [vmem:[%s2195 + $0x278] sm:$0xff]
    %v2276 = vld [vmem:[%s2195 + $0x280] sm:$0xff]
    %v2277 = vld [vmem:[%s2195 + $0x288] sm:$0xff]
    %v2278 = vld [vmem:[%s2195 + $0x290] sm:$0xff]
    %v2279 = vld [vmem:[%s2195 + $0x298] sm:$0xff]
    %v2280 = vld [vmem:[%s2195 + $0x2a0] sm:$0xff]
    %v2281 = vld [vmem:[%s2195 + $0x2a8] sm:$0xff]
    %v2282 = vld [vmem:[%s2195 + $0x2b0] sm:$0xff]
    %v2283 = vld [vmem:[%s2195 + $0x2b8] sm:$0xff]
    %v2284 = vld [vmem:[%s2195 + $0x2c0] sm:$0xff]
    %v2285 = vld [vmem:[%s2195 + $0x2c8] sm:$0xff]
    %v2286 = vld [vmem:[%s2195 + $0x2d0] sm:$0xff]
    %v2287 = vld [vmem:[%s2195 + $0x2d8] sm:$0xff]
    %v2288 = vld [vmem:[%s2195 + $0x2e0] sm:$0xff]
    %v2289 = vld [vmem:[%s2195 + $0x2e8] sm:$0xff]
    %v2290 = vld [vmem:[%s2195 + $0x2f0] sm:$0xff]
    %v2291 = vld [vmem:[%s2195 + $0x2f8] sm:$0xff]
    %v2292 = vld [vmem:[%s2195 + $0x300] sm:$0xff]
    %v2293 = vld [vmem:[%s2195 + $0x308] sm:$0xff]
    %v2294 = vld [vmem:[%s2195 + $0x310] sm:$0xff]
    %v2295 = vld [vmem:[%s2195 + $0x318] sm:$0xff]
    %v2296 = vld [vmem:[%s2195 + $0x320] sm:$0xff]
    %v2297 = vld [vmem:[%s2195 + $0x328] sm:$0xff]
    %v2298 = vld [vmem:[%s2195 + $0x330] sm:$0xff]
    %v2299 = vld [vmem:[%s2195 + $0x338] sm:$0xff]
    %v2300 = vld [vmem:[%s2195 + $0x340] sm:$0xff]
    %v2301 = vld [vmem:[%s2195 + $0x348] sm:$0xff]
    %v2302 = vld [vmem:[%s2195 + $0x350] sm:$0xff]
    %v2303 = vld [vmem:[%s2195 + $0x358] sm:$0xff]
    %v2304 = vld [vmem:[%s2195 + $0x360] sm:$0xff]
    %v2305 = vld [vmem:[%s2195 + $0x368] sm:$0xff]
    %v2306 = vld [vmem:[%s2195 + $0x370] sm:$0xff]
    %v2307 = vld [vmem:[%s2195 + $0x378] sm:$0xff]
    %v2308 = vld [vmem:[%s2195 + $0x380] sm:$0xff]
    %v2309 = vld [vmem:[%s2195 + $0x388] sm:$0xff]
    %v2310 = vld [vmem:[%s2195 + $0x390] sm:$0xff]
    %v2311 = vld [vmem:[%s2195 + $0x398] sm:$0xff]
    %v2312 = vld [vmem:[%s2195 + $0x3a0] sm:$0xff]
    %v2313 = vld [vmem:[%s2195 + $0x3a8] sm:$0xff]
    %v2314 = vld [vmem:[%s2195 + $0x3b0] sm:$0xff]
    %v2315 = vld [vmem:[%s2195 + $0x3b8] sm:$0xff]
    %v2316 = vld [vmem:[%s2195 + $0x3c0] sm:$0xff]
    %v2317 = vld [vmem:[%s2195 + $0x3c8] sm:$0xff]
    %v2318 = vld [vmem:[%s2195 + $0x3d0] sm:$0xff]
    %v2319 = vld [vmem:[%s2195 + $0x3d8] sm:$0xff]
    %v2320 = vld [vmem:[%s2195 + $0x3e0] sm:$0xff]
    %v2321 = vld [vmem:[%s2195 + $0x3e8] sm:$0xff]
    %v2322 = vld [vmem:[%s2195 + $0x3f0] sm:$0xff]
    %v2323 = vld [vmem:[%s2195 + $0x3f8] sm:$0xff]
    %v2324 = vld [vmem:[%s2195 + $0x400] sm:$0xff]
    %v2325 = vld [vmem:[%s2195 + $0x408] sm:$0xff]
    %v2326 = vld [vmem:[%s2195 + $0x410] sm:$0xff]
    %v2327 = vld [vmem:[%s2195 + $0x418] sm:$0xff]
    %v2328 = vld [vmem:[%s2195 + $0x420] sm:$0xff]
    %v2329 = vld [vmem:[%s2195 + $0x428] sm:$0xff]
    %v2330 = vld [vmem:[%s2195 + $0x430] sm:$0xff]
    %v2331 = vld [vmem:[%s2195 + $0x438] sm:$0xff]
    %v2332 = vld [vmem:[%s2195 + $0x440] sm:$0xff]
    %v2333 = vld [vmem:[%s2195 + $0x448] sm:$0xff]
    %v2334 = vld [vmem:[%s2195 + $0x450] sm:$0xff]
    %v2335 = vld [vmem:[%s2195 + $0x458] sm:$0xff]
    %v2336 = vld [vmem:[%s2195 + $0x460] sm:$0xff]
    %v2337 = vld [vmem:[%s2195 + $0x468] sm:$0xff]
    %v2338 = vld [vmem:[%s2195 + $0x470] sm:$0xff]
    %v2339 = vld [vmem:[%s2195 + $0x478] sm:$0xff]
    %v2340 = vld [vmem:[%s2195 + $0x480] sm:$0xff]
    %v2341 = vld [vmem:[%s2195 + $0x488] sm:$0xff]
    %v2342 = vld [vmem:[%s2195 + $0x490] sm:$0xff]
    %v2343 = vld [vmem:[%s2195 + $0x498] sm:$0xff]
    %v2344 = vld [vmem:[%s2195 + $0x4a0] sm:$0xff]
    %v2345 = vld [vmem:[%s2195 + $0x4a8] sm:$0xff]
    %v2346 = vld [vmem:[%s2195 + $0x4b0] sm:$0xff]
    %v2347 = vld [vmem:[%s2195 + $0x4b8] sm:$0xff]
    %v2348 = vld [vmem:[%s2195 + $0x4c0] sm:$0xff]
    %v2349 = vld [vmem:[%s2195 + $0x4c8] sm:$0xff]
    %v2350 = vld [vmem:[%s2195 + $0x4d0] sm:$0xff]
    %v2351 = vld [vmem:[%s2195 + $0x4d8] sm:$0xff]
    %v2352 = vld [vmem:[%s2195 + $0x4e0] sm:$0xff]
    %v2353 = vld [vmem:[%s2195 + $0x4e8] sm:$0xff]
    %v2354 = vld [vmem:[%s2195 + $0x4f0] sm:$0xff]
    %v2355 = vld [vmem:[%s2195 + $0x4f8] sm:$0xff]
    %v2356 = vld [vmem:[%s2195 + $0x500] sm:$0xff]
    %v2357 = vld [vmem:[%s2195 + $0x508] sm:$0xff]
    %v2358 = vld [vmem:[%s2195 + $0x510] sm:$0xff]
    %v2359 = vld [vmem:[%s2195 + $0x518] sm:$0xff]
    %v2360 = vld [vmem:[%s2195 + $0x520] sm:$0xff]
    %v2361 = vld [vmem:[%s2195 + $0x528] sm:$0xff]
    %v2362 = vld [vmem:[%s2195 + $0x530] sm:$0xff]
    %v2363 = vld [vmem:[%s2195 + $0x538] sm:$0xff]
    %v2364 = vld [vmem:[%s2195 + $0x540] sm:$0xff]
    %v2365 = vld [vmem:[%s2195 + $0x548] sm:$0xff]
    %v2366 = vld [vmem:[%s2195 + $0x550] sm:$0xff]
    %v2367 = vld [vmem:[%s2195 + $0x558] sm:$0xff]
    %v2368 = vld [vmem:[%s2195 + $0x560] sm:$0xff]
    %v2369 = vld [vmem:[%s2195 + $0x568] sm:$0xff]
    %v2370 = vld [vmem:[%s2195 + $0x570] sm:$0xff]
    %v2371 = vld [vmem:[%s2195 + $0x578] sm:$0xff]
    %v2372 = vld [vmem:[%s2195 + $0x580] sm:$0xff]
    %v2373 = vld [vmem:[%s2195 + $0x588] sm:$0xff]
    %v2374 = vld [vmem:[%s2195 + $0x590] sm:$0xff]
    %v2375 = vld [vmem:[%s2195 + $0x598] sm:$0xff]
    %v2376 = vld [vmem:[%s2195 + $0x5a0] sm:$0xff]
    %v2377 = vld [vmem:[%s2195 + $0x5a8] sm:$0xff]
    %v2378 = vld [vmem:[%s2195 + $0x5b0] sm:$0xff]
    %v2379 = vld [vmem:[%s2195 + $0x5b8] sm:$0xff]
    %v2380 = vld [vmem:[%s2195 + $0x5c0] sm:$0xff]
    %v2381 = vld [vmem:[%s2195 + $0x5c8] sm:$0xff]
    %v2382 = vld [vmem:[%s2195 + $0x5d0] sm:$0xff]
    %v2383 = vld [vmem:[%s2195 + $0x5d8] sm:$0xff]
    %v2384 = vld [vmem:[%s2195 + $0x5e0] sm:$0xff]
    %v2385 = vld [vmem:[%s2195 + $0x5e8] sm:$0xff]
    %v2386 = vld [vmem:[%s2195 + $0x5f0] sm:$0xff]
    %v2387 = vld [vmem:[%s2195 + $0x5f8] sm:$0xff]
    %v2388 = vld [vmem:[%s2195 + $0x600] sm:$0xff]
    %v2389 = vld [vmem:[%s2195 + $0x608] sm:$0xff]
    %v2390 = vld [vmem:[%s2195 + $0x610] sm:$0xff]
    %v2391 = vld [vmem:[%s2195 + $0x618] sm:$0xff]
    %v2392 = vld [vmem:[%s2195 + $0x620] sm:$0xff]
    %v2393 = vld [vmem:[%s2195 + $0x628] sm:$0xff]
    %v2394 = vld [vmem:[%s2195 + $0x630] sm:$0xff]
    %v2395 = vld [vmem:[%s2195 + $0x638] sm:$0xff]
    %v2396 = vld [vmem:[%s2195 + $0x640] sm:$0xff]
    %v2397 = vld [vmem:[%s2195 + $0x648] sm:$0xff]
    %v2398 = vld [vmem:[%s2195 + $0x650] sm:$0xff]
    %v2399 = vld [vmem:[%s2195 + $0x658] sm:$0xff]
    %v2400 = vld [vmem:[%s2195 + $0x660] sm:$0xff]
    %v2401 = vld [vmem:[%s2195 + $0x668] sm:$0xff]
    %v2402 = vld [vmem:[%s2195 + $0x670] sm:$0xff]
    %v2403 = vld [vmem:[%s2195 + $0x678] sm:$0xff]
    %v2404 = vld [vmem:[%s2195 + $0x680] sm:$0xff]
    %v2405 = vld [vmem:[%s2195 + $0x688] sm:$0xff]
    %v2406 = vld [vmem:[%s2195 + $0x690] sm:$0xff]
    %v2407 = vld [vmem:[%s2195 + $0x698] sm:$0xff]
    %v2408 = vld [vmem:[%s2195 + $0x6a0] sm:$0xff]
    %v2409 = vld [vmem:[%s2195 + $0x6a8] sm:$0xff]
    %v2410 = vld [vmem:[%s2195 + $0x6b0] sm:$0xff]
    %v2411 = vld [vmem:[%s2195 + $0x6b8] sm:$0xff]
    %v2412 = vld [vmem:[%s2195 + $0x6c0] sm:$0xff]
    %v2413 = vld [vmem:[%s2195 + $0x6c8] sm:$0xff]
    %v2414 = vld [vmem:[%s2195 + $0x6d0] sm:$0xff]
    %v2415 = vld [vmem:[%s2195 + $0x6d8] sm:$0xff]
    %v2416 = vld [vmem:[%s2195 + $0x6e0] sm:$0xff]
    %v2417 = vld [vmem:[%s2195 + $0x6e8] sm:$0xff]
    %v2418 = vld [vmem:[%s2195 + $0x6f0] sm:$0xff]
    %v2419 = vld [vmem:[%s2195 + $0x6f8] sm:$0xff]
    %v2421 = vsel %vm936, %v458, 0
    %2423 = vmatpush.msra.mxu0 %v2256
    %2424 = vmatpush.msra.mxu0 %v2252
    %2425 = vmatpush.msra.mxu0 %v2248
    %2426 = vmatpush.msra.mxu0 %v2244
    %2427 = vmatpush.msra.mxu0 %v2240
    %2428 = vmatpush.msra.mxu0 %v2236
    %2429 = vmatpush.msra.mxu0 %v2232
    %2430 = vmatpush.msra.mxu0 %v2228
    %2431 = vmatpush.msra.mxu0 %v2224
    %2432 = vmatpush.msra.mxu0 %v2220
    %2433 = vmatpush.msra.mxu0 %v2216
    %2434 = vmatpush.msra.mxu0 %v2212
    %2435 = vmatpush.msra.mxu0 %v2208
    %2436 = vmatpush.msra.mxu0 %v2204
    %2437 = vmatpush.msra.mxu0 %v2200
    %2438 = vmatpush.msra.mxu0 %v2196
    %2439 = vmatmul.f32.gmra.mxu0 %v431
    %v2440 = vpop.f32.mrf.mxu0
    %v2441 = vadd.f32 0.0, %v2440
    %2442 = vmatmul.f32.gmra.mxu0 %v435
    %v2443 = vpop.f32.mrf.mxu0
    %v2444 = vadd.f32 0.0, %v2443
    %2445 = vmatmul.f32.gmra.mxu0 %v439
    %v2446 = vpop.f32.mrf.mxu0
    %v2447 = vadd.f32 0.0, %v2446
    %2448 = vmatmul.f32.gmra.mxu0 %v443
    %v2449 = vpop.f32.mrf.mxu0
    %v2450 = vadd.f32 0.0, %v2449
    %2451 = vmatmul.f32.gmra.mxu0 %v447
    %v2452 = vpop.f32.mrf.mxu0
    %v2453 = vadd.f32 0.0, %v2452
    %2454 = vmatmul.f32.gmra.mxu0 %v451
    %v2455 = vpop.f32.mrf.mxu0
    %v2456 = vadd.f32 0.0, %v2455
    %2457 = vmatmul.f32.gmra.mxu0 %v455
    %v2458 = vpop.f32.mrf.mxu0
    %v2459 = vadd.f32 0.0, %v2458
    %2460 = vdwg.mxu0
    %2461 = vmatpush.msra.mxu0 %v2320
    %2462 = vmatpush.msra.mxu0 %v2316
    %2463 = vmatpush.msra.mxu0 %v2312
    %2464 = vmatpush.msra.mxu0 %v2308
    %2465 = vmatpush.msra.mxu0 %v2304
    %2466 = vmatpush.msra.mxu0 %v2300
    %2467 = vmatpush.msra.mxu0 %v2296
    %2468 = vmatpush.msra.mxu0 %v2292
    %2469 = vmatpush.msra.mxu0 %v2288
    %2470 = vmatpush.msra.mxu0 %v2284
    %2471 = vmatpush.msra.mxu0 %v2280
    %2472 = vmatpush.msra.mxu0 %v2276
    %2473 = vmatpush.msra.mxu0 %v2272
    %2474 = vmatpush.msra.mxu0 %v2268
    %2475 = vmatpush.msra.mxu0 %v2264
    %2476 = vmatpush.msra.mxu0 %v2260
    %2477 = vmatmul.f32.gmra.mxu0 %v432
    %v2478 = vpop.f32.mrf.mxu0
    %v2479 = vadd.f32 %v2441, %v2478
    %2480 = vmatmul.f32.gmra.mxu0 %v436
    %v2481 = vpop.f32.mrf.mxu0
    %v2482 = vadd.f32 %v2444, %v2481
    %2483 = vmatmul.f32.gmra.mxu0 %v440
    %v2484 = vpop.f32.mrf.mxu0
    %v2485 = vadd.f32 %v2447, %v2484
    %2486 = vmatmul.f32.gmra.mxu0 %v444
    %v2487 = vpop.f32.mrf.mxu0
    %v2488 = vadd.f32 %v2450, %v2487
    %2489 = vmatmul.f32.gmra.mxu0 %v448
    %v2490 = vpop.f32.mrf.mxu0
    %v2491 = vadd.f32 %v2453, %v2490
    %2492 = vmatmul.f32.gmra.mxu0 %v452
    %v2493 = vpop.f32.mrf.mxu0
    %v2494 = vadd.f32 %v2456, %v2493
    %2495 = vmatmul.f32.gmra.mxu0 %v456
    %v2496 = vpop.f32.mrf.mxu0
    %v2497 = vadd.f32 %v2459, %v2496
    %2498 = vdwg.mxu0
    %2499 = vmatpush.msra.mxu0 %v2384
    %2500 = vmatpush.msra.mxu0 %v2380
    %2501 = vmatpush.msra.mxu0 %v2376
    %2502 = vmatpush.msra.mxu0 %v2372
    %2503 = vmatpush.msra.mxu0 %v2368
    %2504 = vmatpush.msra.mxu0 %v2364
    %2505 = vmatpush.msra.mxu0 %v2360
    %2506 = vmatpush.msra.mxu0 %v2356
    %2507 = vmatpush.msra.mxu0 %v2352
    %2508 = vmatpush.msra.mxu0 %v2348
    %2509 = vmatpush.msra.mxu0 %v2344
    %2510 = vmatpush.msra.mxu0 %v2340
    %2511 = vmatpush.msra.mxu0 %v2336
    %2512 = vmatpush.msra.mxu0 %v2332
    %2513 = vmatpush.msra.mxu0 %v2328
    %2514 = vmatpush.msra.mxu0 %v2324
    %2515 = vmatmul.f32.gmra.mxu0 %v433
    %v2516 = vpop.f32.mrf.mxu0
    %v2517 = vadd.f32 %v2479, %v2516
    %2518 = vmatmul.f32.gmra.mxu0 %v437
    %v2519 = vpop.f32.mrf.mxu0
    %v2520 = vadd.f32 %v2482, %v2519
    %2521 = vmatmul.f32.gmra.mxu0 %v441
    %v2522 = vpop.f32.mrf.mxu0
    %v2523 = vadd.f32 %v2485, %v2522
    %2524 = vmatmul.f32.gmra.mxu0 %v445
    %v2525 = vpop.f32.mrf.mxu0
    %v2526 = vadd.f32 %v2488, %v2525
    %2527 = vmatmul.f32.gmra.mxu0 %v449
    %v2528 = vpop.f32.mrf.mxu0
    %v2529 = vadd.f32 %v2491, %v2528
    %2530 = vmatmul.f32.gmra.mxu0 %v453
    %v2531 = vpop.f32.mrf.mxu0
    %v2532 = vadd.f32 %v2494, %v2531
    %2533 = vmatmul.f32.gmra.mxu0 %v457
    %v2534 = vpop.f32.mrf.mxu0
    %v2535 = vadd.f32 %v2497, %v2534
    %2536 = vdwg.mxu0
    %2537 = vmatpush.msra.mxu0 0.0
    %2538 = vmatpush.msra.mxu0 0.0
    %2539 = vmatpush.msra.mxu0 0.0
    %2540 = vmatpush.msra.mxu0 0.0
    %2541 = vmatpush.msra.mxu0 0.0
    %2542 = vmatpush.msra.mxu0 0.0
    %2543 = vmatpush.msra.mxu0 0.0
    %2544 = vmatpush.msra.mxu0 0.0
    %2545 = vmatpush.msra.mxu0 %v2416
    %2546 = vmatpush.msra.mxu0 %v2412
    %2547 = vmatpush.msra.mxu0 %v2408
    %2548 = vmatpush.msra.mxu0 %v2404
    %2549 = vmatpush.msra.mxu0 %v2400
    %2550 = vmatpush.msra.mxu0 %v2396
    %2551 = vmatpush.msra.mxu0 %v2392
    %2552 = vmatpush.msra.mxu0 %v2388
    %2553 = vmatmul.f32.gmra.mxu0 %v1570
    %v2554 = vpop.f32.mrf.mxu0
    %v2555 = vadd.f32 %v2517, %v2554
    %2556 = vmatmul.f32.gmra.mxu0 %v1573
    %v2557 = vpop.f32.mrf.mxu0
    %v2558 = vadd.f32 %v2520, %v2557
    %2559 = vmatmul.f32.gmra.mxu0 %v1576
    %v2560 = vpop.f32.mrf.mxu0
    %v2561 = vadd.f32 %v2523, %v2560
    %2562 = vmatmul.f32.gmra.mxu0 %v1579
    %v2563 = vpop.f32.mrf.mxu0
    %v2564 = vadd.f32 %v2526, %v2563
    %2565 = vmatmul.f32.gmra.mxu0 %v1582
    %v2566 = vpop.f32.mrf.mxu0
    %v2567 = vadd.f32 %v2529, %v2566
    %2568 = vmatmul.f32.gmra.mxu0 %v1585
    %v2569 = vpop.f32.mrf.mxu0
    %v2570 = vadd.f32 %v2532, %v2569
    %2571 = vmatmul.f32.gmra.mxu0 %v2421
    %v2572 = vpop.f32.mrf.mxu0
    %v2573 = vadd.f32 %v2535, %v2572
    %2574 = vdwg.mxu0
    %2575 = vmatpush.msra.mxu0 %v2257
    %2576 = vmatpush.msra.mxu0 %v2253
    %2577 = vmatpush.msra.mxu0 %v2249
    %2578 = vmatpush.msra.mxu0 %v2245
    %2579 = vmatpush.msra.mxu0 %v2241
    %2580 = vmatpush.msra.mxu0 %v2237
    %2581 = vmatpush.msra.mxu0 %v2233
    %2582 = vmatpush.msra.mxu0 %v2229
    %2583 = vmatpush.msra.mxu0 %v2225
    %2584 = vmatpush.msra.mxu0 %v2221
    %2585 = vmatpush.msra.mxu0 %v2217
    %2586 = vmatpush.msra.mxu0 %v2213
    %2587 = vmatpush.msra.mxu0 %v2209
    %2588 = vmatpush.msra.mxu0 %v2205
    %2589 = vmatpush.msra.mxu0 %v2201
    %2590 = vmatpush.msra.mxu0 %v2197
    %2591 = vmatmul.f32.gmra.mxu0 %v431
    %v2592 = vpop.f32.mrf.mxu0
    %v2593 = vadd.f32 0.0, %v2592
    %2594 = vmatmul.f32.gmra.mxu0 %v435
    %v2595 = vpop.f32.mrf.mxu0
    %v2596 = vadd.f32 0.0, %v2595
    %2597 = vmatmul.f32.gmra.mxu0 %v439
    %v2598 = vpop.f32.mrf.mxu0
    %v2599 = vadd.f32 0.0, %v2598
    %2600 = vmatmul.f32.gmra.mxu0 %v443
    %v2601 = vpop.f32.mrf.mxu0
    %v2602 = vadd.f32 0.0, %v2601
    %2603 = vmatmul.f32.gmra.mxu0 %v447
    %v2604 = vpop.f32.mrf.mxu0
    %v2605 = vadd.f32 0.0, %v2604
    %2606 = vmatmul.f32.gmra.mxu0 %v451
    %v2607 = vpop.f32.mrf.mxu0
    %v2608 = vadd.f32 0.0, %v2607
    %2609 = vmatmul.f32.gmra.mxu0 %v455
    %v2610 = vpop.f32.mrf.mxu0
    %v2611 = vadd.f32 0.0, %v2610
    %2612 = vdwg.mxu0
    %2613 = vmatpush.msra.mxu0 %v2321
    %2614 = vmatpush.msra.mxu0 %v2317
    %2615 = vmatpush.msra.mxu0 %v2313
    %2616 = vmatpush.msra.mxu0 %v2309
    %2617 = vmatpush.msra.mxu0 %v2305
    %2618 = vmatpush.msra.mxu0 %v2301
    %2619 = vmatpush.msra.mxu0 %v2297
    %2620 = vmatpush.msra.mxu0 %v2293
    %2621 = vmatpush.msra.mxu0 %v2289
    %2622 = vmatpush.msra.mxu0 %v2285
    %2623 = vmatpush.msra.mxu0 %v2281
    %2624 = vmatpush.msra.mxu0 %v2277
    %2625 = vmatpush.msra.mxu0 %v2273
    %2626 = vmatpush.msra.mxu0 %v2269
    %2627 = vmatpush.msra.mxu0 %v2265
    %2628 = vmatpush.msra.mxu0 %v2261
    %2629 = vmatmul.f32.gmra.mxu0 %v432
    %v2630 = vpop.f32.mrf.mxu0
    %v2631 = vadd.f32 %v2593, %v2630
    %2632 = vmatmul.f32.gmra.mxu0 %v436
    %v2633 = vpop.f32.mrf.mxu0
    %v2634 = vadd.f32 %v2596, %v2633
    %2635 = vmatmul.f32.gmra.mxu0 %v440
    %v2636 = vpop.f32.mrf.mxu0
    %v2637 = vadd.f32 %v2599, %v2636
    %2638 = vmatmul.f32.gmra.mxu0 %v444
    %v2639 = vpop.f32.mrf.mxu0
    %v2640 = vadd.f32 %v2602, %v2639
    %2641 = vmatmul.f32.gmra.mxu0 %v448
    %v2642 = vpop.f32.mrf.mxu0
    %v2643 = vadd.f32 %v2605, %v2642
    %2644 = vmatmul.f32.gmra.mxu0 %v452
    %v2645 = vpop.f32.mrf.mxu0
    %v2646 = vadd.f32 %v2608, %v2645
    %2647 = vmatmul.f32.gmra.mxu0 %v456
    %v2648 = vpop.f32.mrf.mxu0
    %v2649 = vadd.f32 %v2611, %v2648
    %2650 = vdwg.mxu0
    %2651 = vmatpush.msra.mxu0 %v2385
    %2652 = vmatpush.msra.mxu0 %v2381
    %2653 = vmatpush.msra.mxu0 %v2377
    %2654 = vmatpush.msra.mxu0 %v2373
    %2655 = vmatpush.msra.mxu0 %v2369
    %2656 = vmatpush.msra.mxu0 %v2365
    %2657 = vmatpush.msra.mxu0 %v2361
    %2658 = vmatpush.msra.mxu0 %v2357
    %2659 = vmatpush.msra.mxu0 %v2353
    %2660 = vmatpush.msra.mxu0 %v2349
    %2661 = vmatpush.msra.mxu0 %v2345
    %2662 = vmatpush.msra.mxu0 %v2341
    %2663 = vmatpush.msra.mxu0 %v2337
    %2664 = vmatpush.msra.mxu0 %v2333
    %2665 = vmatpush.msra.mxu0 %v2329
    %2666 = vmatpush.msra.mxu0 %v2325
    %2667 = vmatmul.f32.gmra.mxu0 %v433
    %v2668 = vpop.f32.mrf.mxu0
    %v2669 = vadd.f32 %v2631, %v2668
    %2670 = vmatmul.f32.gmra.mxu0 %v437
    %v2671 = vpop.f32.mrf.mxu0
    %v2672 = vadd.f32 %v2634, %v2671
    %2673 = vmatmul.f32.gmra.mxu0 %v441
    %v2674 = vpop.f32.mrf.mxu0
    %v2675 = vadd.f32 %v2637, %v2674
    %2676 = vmatmul.f32.gmra.mxu0 %v445
    %v2677 = vpop.f32.mrf.mxu0
    %v2678 = vadd.f32 %v2640, %v2677
    %2679 = vmatmul.f32.gmra.mxu0 %v449
    %v2680 = vpop.f32.mrf.mxu0
    %v2681 = vadd.f32 %v2643, %v2680
    %2682 = vmatmul.f32.gmra.mxu0 %v453
    %v2683 = vpop.f32.mrf.mxu0
    %v2684 = vadd.f32 %v2646, %v2683
    %2685 = vmatmul.f32.gmra.mxu0 %v457
    %v2686 = vpop.f32.mrf.mxu0
    %v2687 = vadd.f32 %v2649, %v2686
    %2688 = vdwg.mxu0
    %2689 = vmatpush.msra.mxu0 0.0
    %2690 = vmatpush.msra.mxu0 0.0
    %2691 = vmatpush.msra.mxu0 0.0
    %2692 = vmatpush.msra.mxu0 0.0
    %2693 = vmatpush.msra.mxu0 0.0
    %2694 = vmatpush.msra.mxu0 0.0
    %2695 = vmatpush.msra.mxu0 0.0
    %2696 = vmatpush.msra.mxu0 0.0
    %2697 = vmatpush.msra.mxu0 %v2417
    %2698 = vmatpush.msra.mxu0 %v2413
    %2699 = vmatpush.msra.mxu0 %v2409
    %2700 = vmatpush.msra.mxu0 %v2405
    %2701 = vmatpush.msra.mxu0 %v2401
    %2702 = vmatpush.msra.mxu0 %v2397
    %2703 = vmatpush.msra.mxu0 %v2393
    %2704 = vmatpush.msra.mxu0 %v2389
    %2705 = vmatmul.f32.gmra.mxu0 %v1570
    %v2706 = vpop.f32.mrf.mxu0
    %v2707 = vadd.f32 %v2669, %v2706
    %2708 = vmatmul.f32.gmra.mxu0 %v1573
    %v2709 = vpop.f32.mrf.mxu0
    %v2710 = vadd.f32 %v2672, %v2709
    %2711 = vmatmul.f32.gmra.mxu0 %v1576
    %v2712 = vpop.f32.mrf.mxu0
    %v2713 = vadd.f32 %v2675, %v2712
    %2714 = vmatmul.f32.gmra.mxu0 %v1579
    %v2715 = vpop.f32.mrf.mxu0
    %v2716 = vadd.f32 %v2678, %v2715
    %2717 = vmatmul.f32.gmra.mxu0 %v1582
    %v2718 = vpop.f32.mrf.mxu0
    %v2719 = vadd.f32 %v2681, %v2718
    %2720 = vmatmul.f32.gmra.mxu0 %v1585
    %v2721 = vpop.f32.mrf.mxu0
    %v2722 = vadd.f32 %v2684, %v2721
    %2723 = vmatmul.f32.gmra.mxu0 %v2421
    %v2724 = vpop.f32.mrf.mxu0
    %v2725 = vadd.f32 %v2687, %v2724
    %2726 = vdwg.mxu0
    %2727 = vmatpush.msra.mxu0 %v2258
    %2728 = vmatpush.msra.mxu0 %v2254
    %2729 = vmatpush.msra.mxu0 %v2250
    %2730 = vmatpush.msra.mxu0 %v2246
    %2731 = vmatpush.msra.mxu0 %v2242
    %2732 = vmatpush.msra.mxu0 %v2238
    %2733 = vmatpush.msra.mxu0 %v2234
    %2734 = vmatpush.msra.mxu0 %v2230
    %2735 = vmatpush.msra.mxu0 %v2226
    %2736 = vmatpush.msra.mxu0 %v2222
    %2737 = vmatpush.msra.mxu0 %v2218
    %2738 = vmatpush.msra.mxu0 %v2214
    %2739 = vmatpush.msra.mxu0 %v2210
    %2740 = vmatpush.msra.mxu0 %v2206
    %2741 = vmatpush.msra.mxu0 %v2202
    %2742 = vmatpush.msra.mxu0 %v2198
    %2743 = vmatmul.f32.gmra.mxu0 %v431
    %v2744 = vpop.f32.mrf.mxu0
    %v2745 = vadd.f32 0.0, %v2744
    %2746 = vmatmul.f32.gmra.mxu0 %v435
    %v2747 = vpop.f32.mrf.mxu0
    %v2748 = vadd.f32 0.0, %v2747
    %2749 = vmatmul.f32.gmra.mxu0 %v439
    %v2750 = vpop.f32.mrf.mxu0
    %v2751 = vadd.f32 0.0, %v2750
    %2752 = vmatmul.f32.gmra.mxu0 %v443
    %v2753 = vpop.f32.mrf.mxu0
    %v2754 = vadd.f32 0.0, %v2753
    %2755 = vmatmul.f32.gmra.mxu0 %v447
    %v2756 = vpop.f32.mrf.mxu0
    %v2757 = vadd.f32 0.0, %v2756
    %2758 = vmatmul.f32.gmra.mxu0 %v451
    %v2759 = vpop.f32.mrf.mxu0
    %v2760 = vadd.f32 0.0, %v2759
    %2761 = vmatmul.f32.gmra.mxu0 %v455
    %v2762 = vpop.f32.mrf.mxu0
    %v2763 = vadd.f32 0.0, %v2762
    %2764 = vdwg.mxu0
    %2765 = vmatpush.msra.mxu0 %v2322
    %2766 = vmatpush.msra.mxu0 %v2318
    %2767 = vmatpush.msra.mxu0 %v2314
    %2768 = vmatpush.msra.mxu0 %v2310
    %2769 = vmatpush.msra.mxu0 %v2306
    %2770 = vmatpush.msra.mxu0 %v2302
    %2771 = vmatpush.msra.mxu0 %v2298
    %2772 = vmatpush.msra.mxu0 %v2294
    %2773 = vmatpush.msra.mxu0 %v2290
    %2774 = vmatpush.msra.mxu0 %v2286
    %2775 = vmatpush.msra.mxu0 %v2282
    %2776 = vmatpush.msra.mxu0 %v2278
    %2777 = vmatpush.msra.mxu0 %v2274
    %2778 = vmatpush.msra.mxu0 %v2270
    %2779 = vmatpush.msra.mxu0 %v2266
    %2780 = vmatpush.msra.mxu0 %v2262
    %2781 = vmatmul.f32.gmra.mxu0 %v432
    %v2782 = vpop.f32.mrf.mxu0
    %v2783 = vadd.f32 %v2745, %v2782
    %2784 = vmatmul.f32.gmra.mxu0 %v436
    %v2785 = vpop.f32.mrf.mxu0
    %v2786 = vadd.f32 %v2748, %v2785
    %2787 = vmatmul.f32.gmra.mxu0 %v440
    %v2788 = vpop.f32.mrf.mxu0
    %v2789 = vadd.f32 %v2751, %v2788
    %2790 = vmatmul.f32.gmra.mxu0 %v444
    %v2791 = vpop.f32.mrf.mxu0
    %v2792 = vadd.f32 %v2754, %v2791
    %2793 = vmatmul.f32.gmra.mxu0 %v448
    %v2794 = vpop.f32.mrf.mxu0
    %v2795 = vadd.f32 %v2757, %v2794
    %2796 = vmatmul.f32.gmra.mxu0 %v452
    %v2797 = vpop.f32.mrf.mxu0
    %v2798 = vadd.f32 %v2760, %v2797
    %2799 = vmatmul.f32.gmra.mxu0 %v456
    %v2800 = vpop.f32.mrf.mxu0
    %v2801 = vadd.f32 %v2763, %v2800
    %2802 = vdwg.mxu0
    %2803 = vmatpush.msra.mxu0 %v2386
    %2804 = vmatpush.msra.mxu0 %v2382
    %2805 = vmatpush.msra.mxu0 %v2378
    %2806 = vmatpush.msra.mxu0 %v2374
    %2807 = vmatpush.msra.mxu0 %v2370
    %2808 = vmatpush.msra.mxu0 %v2366
    %2809 = vmatpush.msra.mxu0 %v2362
    %2810 = vmatpush.msra.mxu0 %v2358
    %2811 = vmatpush.msra.mxu0 %v2354
    %2812 = vmatpush.msra.mxu0 %v2350
    %2813 = vmatpush.msra.mxu0 %v2346
    %2814 = vmatpush.msra.mxu0 %v2342
    %2815 = vmatpush.msra.mxu0 %v2338
    %2816 = vmatpush.msra.mxu0 %v2334
    %2817 = vmatpush.msra.mxu0 %v2330
    %2818 = vmatpush.msra.mxu0 %v2326
    %2819 = vmatmul.f32.gmra.mxu0 %v433
    %v2820 = vpop.f32.mrf.mxu0
    %v2821 = vadd.f32 %v2783, %v2820
    %2822 = vmatmul.f32.gmra.mxu0 %v437
    %v2823 = vpop.f32.mrf.mxu0
    %v2824 = vadd.f32 %v2786, %v2823
    %2825 = vmatmul.f32.gmra.mxu0 %v441
    %v2826 = vpop.f32.mrf.mxu0
    %v2827 = vadd.f32 %v2789, %v2826
    %2828 = vmatmul.f32.gmra.mxu0 %v445
    %v2829 = vpop.f32.mrf.mxu0
    %v2830 = vadd.f32 %v2792, %v2829
    %2831 = vmatmul.f32.gmra.mxu0 %v449
    %v2832 = vpop.f32.mrf.mxu0
    %v2833 = vadd.f32 %v2795, %v2832
    %2834 = vmatmul.f32.gmra.mxu0 %v453
    %v2835 = vpop.f32.mrf.mxu0
    %v2836 = vadd.f32 %v2798, %v2835
    %2837 = vmatmul.f32.gmra.mxu0 %v457
    %v2838 = vpop.f32.mrf.mxu0
    %v2839 = vadd.f32 %v2801, %v2838
    %2840 = vdwg.mxu0
    %2841 = vmatpush.msra.mxu0 0.0
    %2842 = vmatpush.msra.mxu0 0.0
    %2843 = vmatpush.msra.mxu0 0.0
    %2844 = vmatpush.msra.mxu0 0.0
    %2845 = vmatpush.msra.mxu0 0.0
    %2846 = vmatpush.msra.mxu0 0.0
    %2847 = vmatpush.msra.mxu0 0.0
    %2848 = vmatpush.msra.mxu0 0.0
    %2849 = vmatpush.msra.mxu0 %v2418
    %2850 = vmatpush.msra.mxu0 %v2414
    %2851 = vmatpush.msra.mxu0 %v2410
    %2852 = vmatpush.msra.mxu0 %v2406
    %2853 = vmatpush.msra.mxu0 %v2402
    %2854 = vmatpush.msra.mxu0 %v2398
    %2855 = vmatpush.msra.mxu0 %v2394
    %2856 = vmatpush.msra.mxu0 %v2390
    %2857 = vmatmul.f32.gmra.mxu0 %v1570
    %v2858 = vpop.f32.mrf.mxu0
    %v2859 = vadd.f32 %v2821, %v2858
    %2860 = vmatmul.f32.gmra.mxu0 %v1573
    %v2861 = vpop.f32.mrf.mxu0
    %v2862 = vadd.f32 %v2824, %v2861
    %2863 = vmatmul.f32.gmra.mxu0 %v1576
    %v2864 = vpop.f32.mrf.mxu0
    %v2865 = vadd.f32 %v2827, %v2864
    %2866 = vmatmul.f32.gmra.mxu0 %v1579
    %v2867 = vpop.f32.mrf.mxu0
    %v2868 = vadd.f32 %v2830, %v2867
    %2869 = vmatmul.f32.gmra.mxu0 %v1582
    %v2870 = vpop.f32.mrf.mxu0
    %v2871 = vadd.f32 %v2833, %v2870
    %2872 = vmatmul.f32.gmra.mxu0 %v1585
    %v2873 = vpop.f32.mrf.mxu0
    %v2874 = vadd.f32 %v2836, %v2873
    %2875 = vmatmul.f32.gmra.mxu0 %v2421
    %v2876 = vpop.f32.mrf.mxu0
    %v2877 = vadd.f32 %v2839, %v2876
    %2878 = vdwg.mxu0
    %2879 = vmatpush.msra.mxu0 %v2259
    %2880 = vmatpush.msra.mxu0 %v2255
    %2881 = vmatpush.msra.mxu0 %v2251
    %2882 = vmatpush.msra.mxu0 %v2247
    %2883 = vmatpush.msra.mxu0 %v2243
    %2884 = vmatpush.msra.mxu0 %v2239
    %2885 = vmatpush.msra.mxu0 %v2235
    %2886 = vmatpush.msra.mxu0 %v2231
    %2887 = vmatpush.msra.mxu0 %v2227
    %2888 = vmatpush.msra.mxu0 %v2223
    %2889 = vmatpush.msra.mxu0 %v2219
    %2890 = vmatpush.msra.mxu0 %v2215
    %2891 = vmatpush.msra.mxu0 %v2211
    %2892 = vmatpush.msra.mxu0 %v2207
    %2893 = vmatpush.msra.mxu0 %v2203
    %2894 = vmatpush.msra.mxu0 %v2199
    %2895 = vmatmul.f32.gmra.mxu0 %v431
    %v2896 = vpop.f32.mrf.mxu0
    %v2897 = vadd.f32 0.0, %v2896
    %2898 = vmatmul.f32.gmra.mxu0 %v435
    %v2899 = vpop.f32.mrf.mxu0
    %v2900 = vadd.f32 0.0, %v2899
    %2901 = vmatmul.f32.gmra.mxu0 %v439
    %v2902 = vpop.f32.mrf.mxu0
    %v2903 = vadd.f32 0.0, %v2902
    %2904 = vmatmul.f32.gmra.mxu0 %v443
    %v2905 = vpop.f32.mrf.mxu0
    %v2906 = vadd.f32 0.0, %v2905
    %2907 = vmatmul.f32.gmra.mxu0 %v447
    %v2908 = vpop.f32.mrf.mxu0
    %v2909 = vadd.f32 0.0, %v2908
    %2910 = vmatmul.f32.gmra.mxu0 %v451
    %v2911 = vpop.f32.mrf.mxu0
    %v2912 = vadd.f32 0.0, %v2911
    %2913 = vmatmul.f32.gmra.mxu0 %v455
    %v2914 = vpop.f32.mrf.mxu0
    %v2915 = vadd.f32 0.0, %v2914
    %2916 = vdwg.mxu0
    %2917 = vmatpush.msra.mxu0 %v2323
    %2918 = vmatpush.msra.mxu0 %v2319
    %2919 = vmatpush.msra.mxu0 %v2315
    %2920 = vmatpush.msra.mxu0 %v2311
    %2921 = vmatpush.msra.mxu0 %v2307
    %2922 = vmatpush.msra.mxu0 %v2303
    %2923 = vmatpush.msra.mxu0 %v2299
    %2924 = vmatpush.msra.mxu0 %v2295
    %2925 = vmatpush.msra.mxu0 %v2291
    %2926 = vmatpush.msra.mxu0 %v2287
    %2927 = vmatpush.msra.mxu0 %v2283
    %2928 = vmatpush.msra.mxu0 %v2279
    %2929 = vmatpush.msra.mxu0 %v2275
    %2930 = vmatpush.msra.mxu0 %v2271
    %2931 = vmatpush.msra.mxu0 %v2267
    %2932 = vmatpush.msra.mxu0 %v2263
    %2933 = vmatmul.f32.gmra.mxu0 %v432
    %v2934 = vpop.f32.mrf.mxu0
    %v2935 = vadd.f32 %v2897, %v2934
    %2936 = vmatmul.f32.gmra.mxu0 %v436
    %v2937 = vpop.f32.mrf.mxu0
    %v2938 = vadd.f32 %v2900, %v2937
    %2939 = vmatmul.f32.gmra.mxu0 %v440
    %v2940 = vpop.f32.mrf.mxu0
    %v2941 = vadd.f32 %v2903, %v2940
    %2942 = vmatmul.f32.gmra.mxu0 %v444
    %v2943 = vpop.f32.mrf.mxu0
    %v2944 = vadd.f32 %v2906, %v2943
    %2945 = vmatmul.f32.gmra.mxu0 %v448
    %v2946 = vpop.f32.mrf.mxu0
    %v2947 = vadd.f32 %v2909, %v2946
    %2948 = vmatmul.f32.gmra.mxu0 %v452
    %v2949 = vpop.f32.mrf.mxu0
    %v2950 = vadd.f32 %v2912, %v2949
    %2951 = vmatmul.f32.gmra.mxu0 %v456
    %v2952 = vpop.f32.mrf.mxu0
    %v2953 = vadd.f32 %v2915, %v2952
    %2954 = vdwg.mxu0
    %2955 = vmatpush.msra.mxu0 %v2387
    %2956 = vmatpush.msra.mxu0 %v2383
    %2957 = vmatpush.msra.mxu0 %v2379
    %2958 = vmatpush.msra.mxu0 %v2375
    %2959 = vmatpush.msra.mxu0 %v2371
    %2960 = vmatpush.msra.mxu0 %v2367
    %2961 = vmatpush.msra.mxu0 %v2363
    %2962 = vmatpush.msra.mxu0 %v2359
    %2963 = vmatpush.msra.mxu0 %v2355
    %2964 = vmatpush.msra.mxu0 %v2351
    %2965 = vmatpush.msra.mxu0 %v2347
    %2966 = vmatpush.msra.mxu0 %v2343
    %2967 = vmatpush.msra.mxu0 %v2339
    %2968 = vmatpush.msra.mxu0 %v2335
    %2969 = vmatpush.msra.mxu0 %v2331
    %2970 = vmatpush.msra.mxu0 %v2327
    %2971 = vmatmul.f32.gmra.mxu0 %v433
    %v2972 = vpop.f32.mrf.mxu0
    %v2973 = vadd.f32 %v2935, %v2972
    %2974 = vmatmul.f32.gmra.mxu0 %v437
    %v2975 = vpop.f32.mrf.mxu0
    %v2976 = vadd.f32 %v2938, %v2975
    %2977 = vmatmul.f32.gmra.mxu0 %v441
    %v2978 = vpop.f32.mrf.mxu0
    %v2979 = vadd.f32 %v2941, %v2978
    %2980 = vmatmul.f32.gmra.mxu0 %v445
    %v2981 = vpop.f32.mrf.mxu0
    %v2982 = vadd.f32 %v2944, %v2981
    %2983 = vmatmul.f32.gmra.mxu0 %v449
    %v2984 = vpop.f32.mrf.mxu0
    %v2985 = vadd.f32 %v2947, %v2984
    %2986 = vmatmul.f32.gmra.mxu0 %v453
    %v2987 = vpop.f32.mrf.mxu0
    %v2988 = vadd.f32 %v2950, %v2987
    %2989 = vmatmul.f32.gmra.mxu0 %v457
    %v2990 = vpop.f32.mrf.mxu0
    %v2991 = vadd.f32 %v2953, %v2990
    %2992 = vdwg.mxu0
    %2993 = vmatpush.msra.mxu0 0.0
    %2994 = vmatpush.msra.mxu0 0.0
    %2995 = vmatpush.msra.mxu0 0.0
    %2996 = vmatpush.msra.mxu0 0.0
    %2997 = vmatpush.msra.mxu0 0.0
    %2998 = vmatpush.msra.mxu0 0.0
    %2999 = vmatpush.msra.mxu0 0.0
    %3000 = vmatpush.msra.mxu0 0.0
    %3001 = vmatpush.msra.mxu0 %v2419
    %3002 = vmatpush.msra.mxu0 %v2415
    %3003 = vmatpush.msra.mxu0 %v2411
    %3004 = vmatpush.msra.mxu0 %v2407
    %3005 = vmatpush.msra.mxu0 %v2403
    %3006 = vmatpush.msra.mxu0 %v2399
    %3007 = vmatpush.msra.mxu0 %v2395
    %3008 = vmatpush.msra.mxu0 %v2391
    %3009 = vmatmul.f32.gmra.mxu0 %v1570
    %v3010 = vpop.f32.mrf.mxu0
    %v3011 = vadd.f32 %v2973, %v3010
    %3012 = vmatmul.f32.gmra.mxu0 %v1573
    %v3013 = vpop.f32.mrf.mxu0
    %v3014 = vadd.f32 %v2976, %v3013
    %3015 = vmatmul.f32.gmra.mxu0 %v1576
    %v3016 = vpop.f32.mrf.mxu0
    %v3017 = vadd.f32 %v2979, %v3016
    %3018 = vmatmul.f32.gmra.mxu0 %v1579
    %v3019 = vpop.f32.mrf.mxu0
    %v3020 = vadd.f32 %v2982, %v3019
    %3021 = vmatmul.f32.gmra.mxu0 %v1582
    %v3022 = vpop.f32.mrf.mxu0
    %v3023 = vadd.f32 %v2985, %v3022
    %3024 = vmatmul.f32.gmra.mxu0 %v1585
    %v3025 = vpop.f32.mrf.mxu0
    %v3026 = vadd.f32 %v2988, %v3025
    %3027 = vmatmul.f32.gmra.mxu0 %v2421
    %v3028 = vpop.f32.mrf.mxu0
    %v3029 = vadd.f32 %v2991, %v3028
    %3030 = vdwg.mxu0
    %v3031 = vadd.f32 %v1719, %v2555
    %v3032 = vadd.f32 %v1871, %v2707
    %v3033 = vadd.f32 %v2023, %v2859
    %v3034 = vadd.f32 %v2175, %v3011
    %v3035 = vadd.f32 %v1722, %v2558
    %v3036 = vadd.f32 %v1874, %v2710
    %v3037 = vadd.f32 %v2026, %v2862
    %v3038 = vadd.f32 %v2178, %v3014
    %v3039 = vadd.f32 %v1725, %v2561
    %v3040 = vadd.f32 %v1877, %v2713
    %v3041 = vadd.f32 %v2029, %v2865
    %v3042 = vadd.f32 %v2181, %v3017
    %v3043 = vadd.f32 %v1728, %v2564
    %v3044 = vadd.f32 %v1880, %v2716
    %v3045 = vadd.f32 %v2032, %v2868
    %v3046 = vadd.f32 %v2184, %v3020
    %v3047 = vadd.f32 %v1731, %v2567
    %v3048 = vadd.f32 %v1883, %v2719
    %v3049 = vadd.f32 %v2035, %v2871
    %v3050 = vadd.f32 %v2187, %v3023
    %v3051 = vadd.f32 %v1734, %v2570
    %v3052 = vadd.f32 %v1886, %v2722
    %v3053 = vadd.f32 %v2038, %v2874
    %v3054 = vadd.f32 %v2190, %v3026
    %v3055 = vadd.f32 %v1737, %v2573
    %v3056 = vadd.f32 %v1889, %v2725
    %v3057 = vadd.f32 %v2041, %v2877
    %v3058 = vadd.f32 %v2193, %v3029
    %v3059 = vld [vmem:[%s3] sm:$0xf]
    %v3061 = vperm.slane %v3059, 0
    %v3062 = vperm.slane %v3059, 1
    %v3063 = vperm.slane %v3059, 2
    %v3064 = vperm.slane %v3059, 3
    %v3069 = vadd.f32 %v3031, %v3061
    %v3070 = vadd.f32 %v3032, %v3062
    %v3071 = vadd.f32 %v3033, %v3063
    %v3072 = vadd.f32 %v3034, %v3064
    %v3073 = vadd.f32 %v3035, %v3061
    %v3074 = vadd.f32 %v3036, %v3062
    %v3075 = vadd.f32 %v3037, %v3063
    %v3076 = vadd.f32 %v3038, %v3064
    %v3077 = vadd.f32 %v3039, %v3061
    %v3078 = vadd.f32 %v3040, %v3062
    %v3079 = vadd.f32 %v3041, %v3063
    %v3080 = vadd.f32 %v3042, %v3064
    %v3081 = vadd.f32 %v3043, %v3061
    %v3082 = vadd.f32 %v3044, %v3062
    %v3083 = vadd.f32 %v3045, %v3063
    %v3084 = vadd.f32 %v3046, %v3064
    %v3085 = vadd.f32 %v3047, %v3061
    %v3086 = vadd.f32 %v3048, %v3062
    %v3087 = vadd.f32 %v3049, %v3063
    %v3088 = vadd.f32 %v3050, %v3064
    %v3089 = vadd.f32 %v3051, %v3061
    %v3090 = vadd.f32 %v3052, %v3062
    %v3091 = vadd.f32 %v3053, %v3063
    %v3092 = vadd.f32 %v3054, %v3064
    %v3093 = vadd.f32 %v3055, %v3061
    %v3094 = vadd.f32 %v3056, %v3062
    %v3095 = vadd.f32 %v3057, %v3063
    %v3096 = vadd.f32 %v3058, %v3064
    %v3097 = vmax.f32 %v3069, 0.0
    %v3098 = vmax.f32 %v3070, 0.0
    %v3099 = vmax.f32 %v3071, 0.0
    %v3100 = vmax.f32 %v3072, 0.0
    %v3101 = vmax.f32 %v3073, 0.0
    %v3102 = vmax.f32 %v3074, 0.0
    %v3103 = vmax.f32 %v3075, 0.0
    %v3104 = vmax.f32 %v3076, 0.0
    %v3105 = vmax.f32 %v3077, 0.0
    %v3106 = vmax.f32 %v3078, 0.0
    %v3107 = vmax.f32 %v3079, 0.0
    %v3108 = vmax.f32 %v3080, 0.0
    %v3109 = vmax.f32 %v3081, 0.0
    %v3110 = vmax.f32 %v3082, 0.0
    %v3111 = vmax.f32 %v3083, 0.0
    %v3112 = vmax.f32 %v3084, 0.0
    %v3113 = vmax.f32 %v3085, 0.0
    %v3114 = vmax.f32 %v3086, 0.0
    %v3115 = vmax.f32 %v3087, 0.0
    %v3116 = vmax.f32 %v3088, 0.0
    %v3117 = vmax.f32 %v3089, 0.0
    %v3118 = vmax.f32 %v3090, 0.0
    %v3119 = vmax.f32 %v3091, 0.0
    %v3120 = vmax.f32 %v3092, 0.0
    %v3121 = vmax.f32 %v3093, 0.0
    %v3122 = vmax.f32 %v3094, 0.0
    %v3123 = vmax.f32 %v3095, 0.0
    %v3124 = vmax.f32 %v3096, 0.0
    %v3125 = vld [vmem:[%s4] sm:$0xff]
    %v3126 = vld [vmem:[%s4 + $0x8] sm:$0xff]
    %v3127 = vld [vmem:[%s4 + $0x10] sm:$0xff]
    %v3128 = vld [vmem:[%s4 + $0x18] sm:$0xff]
    %v3129 = vld [vmem:[%s4 + $0x20] sm:$0xff]
    %v3130 = vld [vmem:[%s4 + $0x28] sm:$0xff]
    %v3131 = vld [vmem:[%s4 + $0x30] sm:$0xff]
    %v3132 = vld [vmem:[%s4 + $0x38] sm:$0xff]
    %v3133 = vld [vmem:[%s4 + $0x40] sm:$0xff]
    %v3134 = vld [vmem:[%s4 + $0x48] sm:$0xff]
    %v3135 = vld [vmem:[%s4 + $0x50] sm:$0xff]
    %v3136 = vld [vmem:[%s4 + $0x58] sm:$0xff]
    %v3137 = vld [vmem:[%s4 + $0x60] sm:$0xff]
    %v3138 = vld [vmem:[%s4 + $0x68] sm:$0xff]
    %v3139 = vld [vmem:[%s4 + $0x70] sm:$0xff]
    %v3140 = vld [vmem:[%s4 + $0x78] sm:$0xff]
    %v3141 = vld [vmem:[%s4 + $0x80] sm:$0xff]
    %v3142 = vld [vmem:[%s4 + $0x88] sm:$0xff]
    %v3143 = vld [vmem:[%s4 + $0x90] sm:$0xff]
    %v3144 = vld [vmem:[%s4 + $0x98] sm:$0xff]
    %v3145 = vld [vmem:[%s4 + $0xa0] sm:$0xff]
    %v3146 = vld [vmem:[%s4 + $0xa8] sm:$0xff]
    %v3147 = vld [vmem:[%s4 + $0xb0] sm:$0xff]
    %v3148 = vld [vmem:[%s4 + $0xb8] sm:$0xff]
    %v3149 = vld [vmem:[%s4 + $0xc0] sm:$0xff]
    %v3150 = vld [vmem:[%s4 + $0xc8] sm:$0xff]
    %v3151 = vld [vmem:[%s4 + $0xd0] sm:$0xff]
    %v3152 = vld [vmem:[%s4 + $0xd8] sm:$0xff]
    %v3153 = vld [vmem:[%s4 + $0xe0] sm:$0xff]
    %v3154 = vld [vmem:[%s4 + $0xe8] sm:$0xff]
    %v3155 = vld [vmem:[%s4 + $0xf0] sm:$0xff]
    %v3156 = vld [vmem:[%s4 + $0xf8] sm:$0xff]
    %v3157 = vld [vmem:[%s4 + $0x100] sm:$0xff]
    %v3158 = vld [vmem:[%s4 + $0x108] sm:$0xff]
    %v3159 = vld [vmem:[%s4 + $0x110] sm:$0xff]
    %v3160 = vld [vmem:[%s4 + $0x118] sm:$0xff]
    %v3161 = vld [vmem:[%s4 + $0x120] sm:$0xff]
    %v3162 = vld [vmem:[%s4 + $0x128] sm:$0xff]
    %v3163 = vld [vmem:[%s4 + $0x130] sm:$0xff]
    %v3164 = vld [vmem:[%s4 + $0x138] sm:$0xff]
    %v3165 = vld [vmem:[%s4 + $0x140] sm:$0xff]
    %v3166 = vld [vmem:[%s4 + $0x148] sm:$0xff]
    %v3167 = vld [vmem:[%s4 + $0x150] sm:$0xff]
    %v3168 = vld [vmem:[%s4 + $0x158] sm:$0xff]
    %v3169 = vld [vmem:[%s4 + $0x160] sm:$0xff]
    %v3170 = vld [vmem:[%s4 + $0x168] sm:$0xff]
    %v3171 = vld [vmem:[%s4 + $0x170] sm:$0xff]
    %v3172 = vld [vmem:[%s4 + $0x178] sm:$0xff]
    %v3173 = vld [vmem:[%s4 + $0x180] sm:$0xff]
    %v3174 = vld [vmem:[%s4 + $0x188] sm:$0xff]
    %v3175 = vld [vmem:[%s4 + $0x190] sm:$0xff]
    %v3176 = vld [vmem:[%s4 + $0x198] sm:$0xff]
    %v3177 = vld [vmem:[%s4 + $0x1a0] sm:$0xff]
    %v3178 = vld [vmem:[%s4 + $0x1a8] sm:$0xff]
    %v3179 = vld [vmem:[%s4 + $0x1b0] sm:$0xff]
    %v3180 = vld [vmem:[%s4 + $0x1b8] sm:$0xff]
    %s3181 = scalar_lea.vmem %s4, 448
    %v3182 = vld [vmem:[%s3181] sm:$0xff]
    %v3183 = vld [vmem:[%s3181 + $0x8] sm:$0xff]
    %v3184 = vld [vmem:[%s3181 + $0x10] sm:$0xff]
    %v3185 = vld [vmem:[%s3181 + $0x18] sm:$0xff]
    %v3186 = vld [vmem:[%s3181 + $0x20] sm:$0xff]
    %v3187 = vld [vmem:[%s3181 + $0x28] sm:$0xff]
    %v3188 = vld [vmem:[%s3181 + $0x30] sm:$0xff]
    %v3189 = vld [vmem:[%s3181 + $0x38] sm:$0xff]
    %v3190 = vld [vmem:[%s3181 + $0x40] sm:$0xff]
    %v3191 = vld [vmem:[%s3181 + $0x48] sm:$0xff]
    %v3192 = vld [vmem:[%s3181 + $0x50] sm:$0xff]
    %v3193 = vld [vmem:[%s3181 + $0x58] sm:$0xff]
    %v3194 = vld [vmem:[%s3181 + $0x60] sm:$0xff]
    %v3195 = vld [vmem:[%s3181 + $0x68] sm:$0xff]
    %v3196 = vld [vmem:[%s3181 + $0x70] sm:$0xff]
    %v3197 = vld [vmem:[%s3181 + $0x78] sm:$0xff]
    %v3198 = vld [vmem:[%s3181 + $0x80] sm:$0xff]
    %v3199 = vld [vmem:[%s3181 + $0x88] sm:$0xff]
    %v3200 = vld [vmem:[%s3181 + $0x90] sm:$0xff]
    %v3201 = vld [vmem:[%s3181 + $0x98] sm:$0xff]
    %v3202 = vld [vmem:[%s3181 + $0xa0] sm:$0xff]
    %v3203 = vld [vmem:[%s3181 + $0xa8] sm:$0xff]
    %v3204 = vld [vmem:[%s3181 + $0xb0] sm:$0xff]
    %v3205 = vld [vmem:[%s3181 + $0xb8] sm:$0xff]
    %v3206 = vld [vmem:[%s3181 + $0xc0] sm:$0xff]
    %v3207 = vld [vmem:[%s3181 + $0xc8] sm:$0xff]
    %v3208 = vld [vmem:[%s3181 + $0xd0] sm:$0xff]
    %v3209 = vld [vmem:[%s3181 + $0xd8] sm:$0xff]
    %v3210 = vld [vmem:[%s3181 + $0xe0] sm:$0xff]
    %v3211 = vld [vmem:[%s3181 + $0xe8] sm:$0xff]
    %v3212 = vld [vmem:[%s3181 + $0xf0] sm:$0xff]
    %v3213 = vld [vmem:[%s3181 + $0xf8] sm:$0xff]
    %v3214 = vld [vmem:[%s3181 + $0x100] sm:$0xff]
    %v3215 = vld [vmem:[%s3181 + $0x108] sm:$0xff]
    %v3216 = vld [vmem:[%s3181 + $0x110] sm:$0xff]
    %v3217 = vld [vmem:[%s3181 + $0x118] sm:$0xff]
    %v3218 = vld [vmem:[%s3181 + $0x120] sm:$0xff]
    %v3219 = vld [vmem:[%s3181 + $0x128] sm:$0xff]
    %v3220 = vld [vmem:[%s3181 + $0x130] sm:$0xff]
    %v3221 = vld [vmem:[%s3181 + $0x138] sm:$0xff]
    %v3222 = vld [vmem:[%s3181 + $0x140] sm:$0xff]
    %v3223 = vld [vmem:[%s3181 + $0x148] sm:$0xff]
    %v3224 = vld [vmem:[%s3181 + $0x150] sm:$0xff]
    %v3225 = vld [vmem:[%s3181 + $0x158] sm:$0xff]
    %v3226 = vld [vmem:[%s3181 + $0x160] sm:$0xff]
    %v3227 = vld [vmem:[%s3181 + $0x168] sm:$0xff]
    %v3228 = vld [vmem:[%s3181 + $0x170] sm:$0xff]
    %v3229 = vld [vmem:[%s3181 + $0x178] sm:$0xff]
    %v3230 = vld [vmem:[%s3181 + $0x180] sm:$0xff]
    %v3231 = vld [vmem:[%s3181 + $0x188] sm:$0xff]
    %v3232 = vld [vmem:[%s3181 + $0x190] sm:$0xff]
    %v3233 = vld [vmem:[%s3181 + $0x198] sm:$0xff]
    %v3234 = vld [vmem:[%s3181 + $0x1a0] sm:$0xff]
    %v3235 = vld [vmem:[%s3181 + $0x1a8] sm:$0xff]
    %v3236 = vld [vmem:[%s3181 + $0x1b0] sm:$0xff]
    %v3237 = vld [vmem:[%s3181 + $0x1b8] sm:$0xff]
    %v3239 = vsel %vm936, %v3104, 0
    %3241 = vmatpush.msra.mxu0 %v3197
    %3242 = vmatpush.msra.mxu0 %v3196
    %3243 = vmatpush.msra.mxu0 %v3195
    %3244 = vmatpush.msra.mxu0 %v3194
    %3245 = vmatpush.msra.mxu0 %v3193
    %3246 = vmatpush.msra.mxu0 %v3192
    %3247 = vmatpush.msra.mxu0 %v3191
    %3248 = vmatpush.msra.mxu0 %v3190
    %3249 = vmatpush.msra.mxu0 %v3189
    %3250 = vmatpush.msra.mxu0 %v3188
    %3251 = vmatpush.msra.mxu0 %v3187
    %3252 = vmatpush.msra.mxu0 %v3186
    %3253 = vmatpush.msra.mxu0 %v3185
    %3254 = vmatpush.msra.mxu0 %v3184
    %3255 = vmatpush.msra.mxu0 %v3183
    %3256 = vmatpush.msra.mxu0 %v3182
    %3257 = vmatmul.f32.gmra.mxu0 %v3101
    %v3258 = vpop.f32.mrf.mxu0
    %v3259 = vadd.f32 0.0, %v3258
    %3260 = vdwg.mxu0
    %3261 = vmatpush.msra.mxu0 %v3213
    %3262 = vmatpush.msra.mxu0 %v3212
    %3263 = vmatpush.msra.mxu0 %v3211
    %3264 = vmatpush.msra.mxu0 %v3210
    %3265 = vmatpush.msra.mxu0 %v3209
    %3266 = vmatpush.msra.mxu0 %v3208
    %3267 = vmatpush.msra.mxu0 %v3207
    %3268 = vmatpush.msra.mxu0 %v3206
    %3269 = vmatpush.msra.mxu0 %v3205
    %3270 = vmatpush.msra.mxu0 %v3204
    %3271 = vmatpush.msra.mxu0 %v3203
    %3272 = vmatpush.msra.mxu0 %v3202
    %3273 = vmatpush.msra.mxu0 %v3201
    %3274 = vmatpush.msra.mxu0 %v3200
    %3275 = vmatpush.msra.mxu0 %v3199
    %3276 = vmatpush.msra.mxu0 %v3198
    %3277 = vmatmul.f32.gmra.mxu0 %v3102
    %v3278 = vpop.f32.mrf.mxu0
    %v3279 = vadd.f32 %v3259, %v3278
    %3280 = vdwg.mxu0
    %3281 = vmatpush.msra.mxu0 %v3229
    %3282 = vmatpush.msra.mxu0 %v3228
    %3283 = vmatpush.msra.mxu0 %v3227
    %3284 = vmatpush.msra.mxu0 %v3226
    %3285 = vmatpush.msra.mxu0 %v3225
    %3286 = vmatpush.msra.mxu0 %v3224
    %3287 = vmatpush.msra.mxu0 %v3223
    %3288 = vmatpush.msra.mxu0 %v3222
    %3289 = vmatpush.msra.mxu0 %v3221
    %3290 = vmatpush.msra.mxu0 %v3220
    %3291 = vmatpush.msra.mxu0 %v3219
    %3292 = vmatpush.msra.mxu0 %v3218
    %3293 = vmatpush.msra.mxu0 %v3217
    %3294 = vmatpush.msra.mxu0 %v3216
    %3295 = vmatpush.msra.mxu0 %v3215
    %3296 = vmatpush.msra.mxu0 %v3214
    %3297 = vmatmul.f32.gmra.mxu0 %v3103
    %v3298 = vpop.f32.mrf.mxu0
    %v3299 = vadd.f32 %v3279, %v3298
    %3300 = vdwg.mxu0
    %3301 = vmatpush.msra.mxu0 0.0
    %3302 = vmatpush.msra.mxu0 0.0
    %3303 = vmatpush.msra.mxu0 0.0
    %3304 = vmatpush.msra.mxu0 0.0
    %3305 = vmatpush.msra.mxu0 0.0
    %3306 = vmatpush.msra.mxu0 0.0
    %3307 = vmatpush.msra.mxu0 0.0
    %3308 = vmatpush.msra.mxu0 0.0
    %3309 = vmatpush.msra.mxu0 %v3237
    %3310 = vmatpush.msra.mxu0 %v3236
    %3311 = vmatpush.msra.mxu0 %v3235
    %3312 = vmatpush.msra.mxu0 %v3234
    %3313 = vmatpush.msra.mxu0 %v3233
    %3314 = vmatpush.msra.mxu0 %v3232
    %3315 = vmatpush.msra.mxu0 %v3231
    %3316 = vmatpush.msra.mxu0 %v3230
    %3317 = vmatmul.f32.gmra.mxu0 %v3239
    %v3318 = vpop.f32.mrf.mxu0
    %v3319 = vadd.f32 %v3299, %v3318
    %3320 = vdwg.mxu0
    %v3322 = vsel %vm936, %v3100, 0
    %3324 = vmatpush.msra.mxu0 %v3140
    %3325 = vmatpush.msra.mxu0 %v3139
    %3326 = vmatpush.msra.mxu0 %v3138
    %3327 = vmatpush.msra.mxu0 %v3137
    %3328 = vmatpush.msra.mxu0 %v3136
    %3329 = vmatpush.msra.mxu0 %v3135
    %3330 = vmatpush.msra.mxu0 %v3134
    %3331 = vmatpush.msra.mxu0 %v3133
    %3332 = vmatpush.msra.mxu0 %v3132
    %3333 = vmatpush.msra.mxu0 %v3131
    %3334 = vmatpush.msra.mxu0 %v3130
    %3335 = vmatpush.msra.mxu0 %v3129
    %3336 = vmatpush.msra.mxu0 %v3128
    %3337 = vmatpush.msra.mxu0 %v3127
    %3338 = vmatpush.msra.mxu0 %v3126
    %3339 = vmatpush.msra.mxu0 %v3125
    %3340 = vmatmul.f32.gmra.mxu0 %v3097
    %v3341 = vpop.f32.mrf.mxu0
    %v3342 = vadd.f32 %v3319, %v3341
    %3343 = vdwg.mxu0
    %3344 = vmatpush.msra.mxu0 %v3156
    %3345 = vmatpush.msra.mxu0 %v3155
    %3346 = vmatpush.msra.mxu0 %v3154
    %3347 = vmatpush.msra.mxu0 %v3153
    %3348 = vmatpush.msra.mxu0 %v3152
    %3349 = vmatpush.msra.mxu0 %v3151
    %3350 = vmatpush.msra.mxu0 %v3150
    %3351 = vmatpush.msra.mxu0 %v3149
    %3352 = vmatpush.msra.mxu0 %v3148
    %3353 = vmatpush.msra.mxu0 %v3147
    %3354 = vmatpush.msra.mxu0 %v3146
    %3355 = vmatpush.msra.mxu0 %v3145
    %3356 = vmatpush.msra.mxu0 %v3144
    %3357 = vmatpush.msra.mxu0 %v3143
    %3358 = vmatpush.msra.mxu0 %v3142
    %3359 = vmatpush.msra.mxu0 %v3141
    %3360 = vmatmul.f32.gmra.mxu0 %v3098
    %v3361 = vpop.f32.mrf.mxu0
    %v3362 = vadd.f32 %v3342, %v3361
    %3363 = vdwg.mxu0
    %3364 = vmatpush.msra.mxu0 %v3172
    %3365 = vmatpush.msra.mxu0 %v3171
    %3366 = vmatpush.msra.mxu0 %v3170
    %3367 = vmatpush.msra.mxu0 %v3169
    %3368 = vmatpush.msra.mxu0 %v3168
    %3369 = vmatpush.msra.mxu0 %v3167
    %3370 = vmatpush.msra.mxu0 %v3166
    %3371 = vmatpush.msra.mxu0 %v3165
    %3372 = vmatpush.msra.mxu0 %v3164
    %3373 = vmatpush.msra.mxu0 %v3163
    %3374 = vmatpush.msra.mxu0 %v3162
    %3375 = vmatpush.msra.mxu0 %v3161
    %3376 = vmatpush.msra.mxu0 %v3160
    %3377 = vmatpush.msra.mxu0 %v3159
    %3378 = vmatpush.msra.mxu0 %v3158
    %3379 = vmatpush.msra.mxu0 %v3157
    %3380 = vmatmul.f32.gmra.mxu0 %v3099
    %v3381 = vpop.f32.mrf.mxu0
    %v3382 = vadd.f32 %v3362, %v3381
    %3383 = vdwg.mxu0
    %3384 = vmatpush.msra.mxu0 0.0
    %3385 = vmatpush.msra.mxu0 0.0
    %3386 = vmatpush.msra.mxu0 0.0
    %3387 = vmatpush.msra.mxu0 0.0
    %3388 = vmatpush.msra.mxu0 0.0
    %3389 = vmatpush.msra.mxu0 0.0
    %3390 = vmatpush.msra.mxu0 0.0
    %3391 = vmatpush.msra.mxu0 0.0
    %3392 = vmatpush.msra.mxu0 %v3180
    %3393 = vmatpush.msra.mxu0 %v3179
    %3394 = vmatpush.msra.mxu0 %v3178
    %3395 = vmatpush.msra.mxu0 %v3177
    %3396 = vmatpush.msra.mxu0 %v3176
    %3397 = vmatpush.msra.mxu0 %v3175
    %3398 = vmatpush.msra.mxu0 %v3174
    %3399 = vmatpush.msra.mxu0 %v3173
    %3400 = vmatmul.f32.gmra.mxu0 %v3322
    %v3401 = vpop.f32.mrf.mxu0
    %v3402 = vadd.f32 %v3382, %v3401
    %3403 = vdwg.mxu0
    %s3404 = scalar_lea.vmem %s4, 896
    %v3405 = vld [vmem:[%s3404] sm:$0xff]
    %v3406 = vld [vmem:[%s3404 + $0x8] sm:$0xff]
    %v3407 = vld [vmem:[%s3404 + $0x10] sm:$0xff]
    %v3408 = vld [vmem:[%s3404 + $0x18] sm:$0xff]
    %v3409 = vld [vmem:[%s3404 + $0x20] sm:$0xff]
    %v3410 = vld [vmem:[%s3404 + $0x28] sm:$0xff]
    %v3411 = vld [vmem:[%s3404 + $0x30] sm:$0xff]
    %v3412 = vld [vmem:[%s3404 + $0x38] sm:$0xff]
    %v3413 = vld [vmem:[%s3404 + $0x40] sm:$0xff]
    %v3414 = vld [vmem:[%s3404 + $0x48] sm:$0xff]
    %v3415 = vld [vmem:[%s3404 + $0x50] sm:$0xff]
    %v3416 = vld [vmem:[%s3404 + $0x58] sm:$0xff]
    %v3417 = vld [vmem:[%s3404 + $0x60] sm:$0xff]
    %v3418 = vld [vmem:[%s3404 + $0x68] sm:$0xff]
    %v3419 = vld [vmem:[%s3404 + $0x70] sm:$0xff]
    %v3420 = vld [vmem:[%s3404 + $0x78] sm:$0xff]
    %v3421 = vld [vmem:[%s3404 + $0x80] sm:$0xff]
    %v3422 = vld [vmem:[%s3404 + $0x88] sm:$0xff]
    %v3423 = vld [vmem:[%s3404 + $0x90] sm:$0xff]
    %v3424 = vld [vmem:[%s3404 + $0x98] sm:$0xff]
    %v3425 = vld [vmem:[%s3404 + $0xa0] sm:$0xff]
    %v3426 = vld [vmem:[%s3404 + $0xa8] sm:$0xff]
    %v3427 = vld [vmem:[%s3404 + $0xb0] sm:$0xff]
    %v3428 = vld [vmem:[%s3404 + $0xb8] sm:$0xff]
    %v3429 = vld [vmem:[%s3404 + $0xc0] sm:$0xff]
    %v3430 = vld [vmem:[%s3404 + $0xc8] sm:$0xff]
    %v3431 = vld [vmem:[%s3404 + $0xd0] sm:$0xff]
    %v3432 = vld [vmem:[%s3404 + $0xd8] sm:$0xff]
    %v3433 = vld [vmem:[%s3404 + $0xe0] sm:$0xff]
    %v3434 = vld [vmem:[%s3404 + $0xe8] sm:$0xff]
    %v3435 = vld [vmem:[%s3404 + $0xf0] sm:$0xff]
    %v3436 = vld [vmem:[%s3404 + $0xf8] sm:$0xff]
    %v3437 = vld [vmem:[%s3404 + $0x100] sm:$0xff]
    %v3438 = vld [vmem:[%s3404 + $0x108] sm:$0xff]
    %v3439 = vld [vmem:[%s3404 + $0x110] sm:$0xff]
    %v3440 = vld [vmem:[%s3404 + $0x118] sm:$0xff]
    %v3441 = vld [vmem:[%s3404 + $0x120] sm:$0xff]
    %v3442 = vld [vmem:[%s3404 + $0x128] sm:$0xff]
    %v3443 = vld [vmem:[%s3404 + $0x130] sm:$0xff]
    %v3444 = vld [vmem:[%s3404 + $0x138] sm:$0xff]
    %v3445 = vld [vmem:[%s3404 + $0x140] sm:$0xff]
    %v3446 = vld [vmem:[%s3404 + $0x148] sm:$0xff]
    %v3447 = vld [vmem:[%s3404 + $0x150] sm:$0xff]
    %v3448 = vld [vmem:[%s3404 + $0x158] sm:$0xff]
    %v3449 = vld [vmem:[%s3404 + $0x160] sm:$0xff]
    %v3450 = vld [vmem:[%s3404 + $0x168] sm:$0xff]
    %v3451 = vld [vmem:[%s3404 + $0x170] sm:$0xff]
    %v3452 = vld [vmem:[%s3404 + $0x178] sm:$0xff]
    %v3453 = vld [vmem:[%s3404 + $0x180] sm:$0xff]
    %v3454 = vld [vmem:[%s3404 + $0x188] sm:$0xff]
    %v3455 = vld [vmem:[%s3404 + $0x190] sm:$0xff]
    %v3456 = vld [vmem:[%s3404 + $0x198] sm:$0xff]
    %v3457 = vld [vmem:[%s3404 + $0x1a0] sm:$0xff]
    %v3458 = vld [vmem:[%s3404 + $0x1a8] sm:$0xff]
    %v3459 = vld [vmem:[%s3404 + $0x1b0] sm:$0xff]
    %v3460 = vld [vmem:[%s3404 + $0x1b8] sm:$0xff]
    %v3462 = vsel %vm936, %v3108, 0
    %3464 = vmatpush.msra.mxu0 %v3420
    %3465 = vmatpush.msra.mxu0 %v3419
    %3466 = vmatpush.msra.mxu0 %v3418
    %3467 = vmatpush.msra.mxu0 %v3417
    %3468 = vmatpush.msra.mxu0 %v3416
    %3469 = vmatpush.msra.mxu0 %v3415
    %3470 = vmatpush.msra.mxu0 %v3414
    %3471 = vmatpush.msra.mxu0 %v3413
    %3472 = vmatpush.msra.mxu0 %v3412
    %3473 = vmatpush.msra.mxu0 %v3411
    %3474 = vmatpush.msra.mxu0 %v3410
    %3475 = vmatpush.msra.mxu0 %v3409
    %3476 = vmatpush.msra.mxu0 %v3408
    %3477 = vmatpush.msra.mxu0 %v3407
    %3478 = vmatpush.msra.mxu0 %v3406
    %3479 = vmatpush.msra.mxu0 %v3405
    %3480 = vmatmul.f32.gmra.mxu0 %v3105
    %v3481 = vpop.f32.mrf.mxu0
    %v3482 = vadd.f32 0.0, %v3481
    %3483 = vdwg.mxu0
    %3484 = vmatpush.msra.mxu0 %v3436
    %3485 = vmatpush.msra.mxu0 %v3435
    %3486 = vmatpush.msra.mxu0 %v3434
    %3487 = vmatpush.msra.mxu0 %v3433
    %3488 = vmatpush.msra.mxu0 %v3432
    %3489 = vmatpush.msra.mxu0 %v3431
    %3490 = vmatpush.msra.mxu0 %v3430
    %3491 = vmatpush.msra.mxu0 %v3429
    %3492 = vmatpush.msra.mxu0 %v3428
    %3493 = vmatpush.msra.mxu0 %v3427
    %3494 = vmatpush.msra.mxu0 %v3426
    %3495 = vmatpush.msra.mxu0 %v3425
    %3496 = vmatpush.msra.mxu0 %v3424
    %3497 = vmatpush.msra.mxu0 %v3423
    %3498 = vmatpush.msra.mxu0 %v3422
    %3499 = vmatpush.msra.mxu0 %v3421
    %3500 = vmatmul.f32.gmra.mxu0 %v3106
    %v3501 = vpop.f32.mrf.mxu0
    %v3502 = vadd.f32 %v3482, %v3501
    %3503 = vdwg.mxu0
    %3504 = vmatpush.msra.mxu0 %v3452
    %3505 = vmatpush.msra.mxu0 %v3451
    %3506 = vmatpush.msra.mxu0 %v3450
    %3507 = vmatpush.msra.mxu0 %v3449
    %3508 = vmatpush.msra.mxu0 %v3448
    %3509 = vmatpush.msra.mxu0 %v3447
    %3510 = vmatpush.msra.mxu0 %v3446
    %3511 = vmatpush.msra.mxu0 %v3445
    %3512 = vmatpush.msra.mxu0 %v3444
    %3513 = vmatpush.msra.mxu0 %v3443
    %3514 = vmatpush.msra.mxu0 %v3442
    %3515 = vmatpush.msra.mxu0 %v3441
    %3516 = vmatpush.msra.mxu0 %v3440
    %3517 = vmatpush.msra.mxu0 %v3439
    %3518 = vmatpush.msra.mxu0 %v3438
    %3519 = vmatpush.msra.mxu0 %v3437
    %3520 = vmatmul.f32.gmra.mxu0 %v3107
    %v3521 = vpop.f32.mrf.mxu0
    %v3522 = vadd.f32 %v3502, %v3521
    %3523 = vdwg.mxu0
    %3524 = vmatpush.msra.mxu0 0.0
    %3525 = vmatpush.msra.mxu0 0.0
    %3526 = vmatpush.msra.mxu0 0.0
    %3527 = vmatpush.msra.mxu0 0.0
    %3528 = vmatpush.msra.mxu0 0.0
    %3529 = vmatpush.msra.mxu0 0.0
    %3530 = vmatpush.msra.mxu0 0.0
    %3531 = vmatpush.msra.mxu0 0.0
    %3532 = vmatpush.msra.mxu0 %v3460
    %3533 = vmatpush.msra.mxu0 %v3459
    %3534 = vmatpush.msra.mxu0 %v3458
    %3535 = vmatpush.msra.mxu0 %v3457
    %3536 = vmatpush.msra.mxu0 %v3456
    %3537 = vmatpush.msra.mxu0 %v3455
    %3538 = vmatpush.msra.mxu0 %v3454
    %3539 = vmatpush.msra.mxu0 %v3453
    %3540 = vmatmul.f32.gmra.mxu0 %v3462
    %v3541 = vpop.f32.mrf.mxu0
    %v3542 = vadd.f32 %v3522, %v3541
    %3543 = vdwg.mxu0
    %v3544 = vadd.f32 %v3402, %v3542
    %s3545 = scalar_lea.vmem %s4, 1344
    %v3546 = vld [vmem:[%s3545] sm:$0xff]
    %v3547 = vld [vmem:[%s3545 + $0x8] sm:$0xff]
    %v3548 = vld [vmem:[%s3545 + $0x10] sm:$0xff]
    %v3549 = vld [vmem:[%s3545 + $0x18] sm:$0xff]
    %v3550 = vld [vmem:[%s3545 + $0x20] sm:$0xff]
    %v3551 = vld [vmem:[%s3545 + $0x28] sm:$0xff]
    %v3552 = vld [vmem:[%s3545 + $0x30] sm:$0xff]
    %v3553 = vld [vmem:[%s3545 + $0x38] sm:$0xff]
    %v3554 = vld [vmem:[%s3545 + $0x40] sm:$0xff]
    %v3555 = vld [vmem:[%s3545 + $0x48] sm:$0xff]
    %v3556 = vld [vmem:[%s3545 + $0x50] sm:$0xff]
    %v3557 = vld [vmem:[%s3545 + $0x58] sm:$0xff]
    %v3558 = vld [vmem:[%s3545 + $0x60] sm:$0xff]
    %v3559 = vld [vmem:[%s3545 + $0x68] sm:$0xff]
    %v3560 = vld [vmem:[%s3545 + $0x70] sm:$0xff]
    %v3561 = vld [vmem:[%s3545 + $0x78] sm:$0xff]
    %v3562 = vld [vmem:[%s3545 + $0x80] sm:$0xff]
    %v3563 = vld [vmem:[%s3545 + $0x88] sm:$0xff]
    %v3564 = vld [vmem:[%s3545 + $0x90] sm:$0xff]
    %v3565 = vld [vmem:[%s3545 + $0x98] sm:$0xff]
    %v3566 = vld [vmem:[%s3545 + $0xa0] sm:$0xff]
    %v3567 = vld [vmem:[%s3545 + $0xa8] sm:$0xff]
    %v3568 = vld [vmem:[%s3545 + $0xb0] sm:$0xff]
    %v3569 = vld [vmem:[%s3545 + $0xb8] sm:$0xff]
    %v3570 = vld [vmem:[%s3545 + $0xc0] sm:$0xff]
    %v3571 = vld [vmem:[%s3545 + $0xc8] sm:$0xff]
    %v3572 = vld [vmem:[%s3545 + $0xd0] sm:$0xff]
    %v3573 = vld [vmem:[%s3545 + $0xd8] sm:$0xff]
    %v3574 = vld [vmem:[%s3545 + $0xe0] sm:$0xff]
    %v3575 = vld [vmem:[%s3545 + $0xe8] sm:$0xff]
    %v3576 = vld [vmem:[%s3545 + $0xf0] sm:$0xff]
    %v3577 = vld [vmem:[%s3545 + $0xf8] sm:$0xff]
    %v3578 = vld [vmem:[%s3545 + $0x100] sm:$0xff]
    %v3579 = vld [vmem:[%s3545 + $0x108] sm:$0xff]
    %v3580 = vld [vmem:[%s3545 + $0x110] sm:$0xff]
    %v3581 = vld [vmem:[%s3545 + $0x118] sm:$0xff]
    %v3582 = vld [vmem:[%s3545 + $0x120] sm:$0xff]
    %v3583 = vld [vmem:[%s3545 + $0x128] sm:$0xff]
    %v3584 = vld [vmem:[%s3545 + $0x130] sm:$0xff]
    %v3585 = vld [vmem:[%s3545 + $0x138] sm:$0xff]
    %v3586 = vld [vmem:[%s3545 + $0x140] sm:$0xff]
    %v3587 = vld [vmem:[%s3545 + $0x148] sm:$0xff]
    %v3588 = vld [vmem:[%s3545 + $0x150] sm:$0xff]
    %v3589 = vld [vmem:[%s3545 + $0x158] sm:$0xff]
    %v3590 = vld [vmem:[%s3545 + $0x160] sm:$0xff]
    %v3591 = vld [vmem:[%s3545 + $0x168] sm:$0xff]
    %v3592 = vld [vmem:[%s3545 + $0x170] sm:$0xff]
    %v3593 = vld [vmem:[%s3545 + $0x178] sm:$0xff]
    %v3594 = vld [vmem:[%s3545 + $0x180] sm:$0xff]
    %v3595 = vld [vmem:[%s3545 + $0x188] sm:$0xff]
    %v3596 = vld [vmem:[%s3545 + $0x190] sm:$0xff]
    %v3597 = vld [vmem:[%s3545 + $0x198] sm:$0xff]
    %v3598 = vld [vmem:[%s3545 + $0x1a0] sm:$0xff]
    %v3599 = vld [vmem:[%s3545 + $0x1a8] sm:$0xff]
    %v3600 = vld [vmem:[%s3545 + $0x1b0] sm:$0xff]
    %v3601 = vld [vmem:[%s3545 + $0x1b8] sm:$0xff]
    %v3603 = vsel %vm936, %v3112, 0
    %3605 = vmatpush.msra.mxu0 %v3561
    %3606 = vmatpush.msra.mxu0 %v3560
    %3607 = vmatpush.msra.mxu0 %v3559
    %3608 = vmatpush.msra.mxu0 %v3558
    %3609 = vmatpush.msra.mxu0 %v3557
    %3610 = vmatpush.msra.mxu0 %v3556
    %3611 = vmatpush.msra.mxu0 %v3555
    %3612 = vmatpush.msra.mxu0 %v3554
    %3613 = vmatpush.msra.mxu0 %v3553
    %3614 = vmatpush.msra.mxu0 %v3552
    %3615 = vmatpush.msra.mxu0 %v3551
    %3616 = vmatpush.msra.mxu0 %v3550
    %3617 = vmatpush.msra.mxu0 %v3549
    %3618 = vmatpush.msra.mxu0 %v3548
    %3619 = vmatpush.msra.mxu0 %v3547
    %3620 = vmatpush.msra.mxu0 %v3546
    %3621 = vmatmul.f32.gmra.mxu0 %v3109
    %v3622 = vpop.f32.mrf.mxu0
    %v3623 = vadd.f32 0.0, %v3622
    %3624 = vdwg.mxu0
    %3625 = vmatpush.msra.mxu0 %v3577
    %3626 = vmatpush.msra.mxu0 %v3576
    %3627 = vmatpush.msra.mxu0 %v3575
    %3628 = vmatpush.msra.mxu0 %v3574
    %3629 = vmatpush.msra.mxu0 %v3573
    %3630 = vmatpush.msra.mxu0 %v3572
    %3631 = vmatpush.msra.mxu0 %v3571
    %3632 = vmatpush.msra.mxu0 %v3570
    %3633 = vmatpush.msra.mxu0 %v3569
    %3634 = vmatpush.msra.mxu0 %v3568
    %3635 = vmatpush.msra.mxu0 %v3567
    %3636 = vmatpush.msra.mxu0 %v3566
    %3637 = vmatpush.msra.mxu0 %v3565
    %3638 = vmatpush.msra.mxu0 %v3564
    %3639 = vmatpush.msra.mxu0 %v3563
    %3640 = vmatpush.msra.mxu0 %v3562
    %3641 = vmatmul.f32.gmra.mxu0 %v3110
    %v3642 = vpop.f32.mrf.mxu0
    %v3643 = vadd.f32 %v3623, %v3642
    %3644 = vdwg.mxu0
    %3645 = vmatpush.msra.mxu0 %v3593
    %3646 = vmatpush.msra.mxu0 %v3592
    %3647 = vmatpush.msra.mxu0 %v3591
    %3648 = vmatpush.msra.mxu0 %v3590
    %3649 = vmatpush.msra.mxu0 %v3589
    %3650 = vmatpush.msra.mxu0 %v3588
    %3651 = vmatpush.msra.mxu0 %v3587
    %3652 = vmatpush.msra.mxu0 %v3586
    %3653 = vmatpush.msra.mxu0 %v3585
    %3654 = vmatpush.msra.mxu0 %v3584
    %3655 = vmatpush.msra.mxu0 %v3583
    %3656 = vmatpush.msra.mxu0 %v3582
    %3657 = vmatpush.msra.mxu0 %v3581
    %3658 = vmatpush.msra.mxu0 %v3580
    %3659 = vmatpush.msra.mxu0 %v3579
    %3660 = vmatpush.msra.mxu0 %v3578
    %3661 = vmatmul.f32.gmra.mxu0 %v3111
    %v3662 = vpop.f32.mrf.mxu0
    %v3663 = vadd.f32 %v3643, %v3662
    %3664 = vdwg.mxu0
    %3665 = vmatpush.msra.mxu0 0.0
    %3666 = vmatpush.msra.mxu0 0.0
    %3667 = vmatpush.msra.mxu0 0.0
    %3668 = vmatpush.msra.mxu0 0.0
    %3669 = vmatpush.msra.mxu0 0.0
    %3670 = vmatpush.msra.mxu0 0.0
    %3671 = vmatpush.msra.mxu0 0.0
    %3672 = vmatpush.msra.mxu0 0.0
    %3673 = vmatpush.msra.mxu0 %v3601
    %3674 = vmatpush.msra.mxu0 %v3600
    %3675 = vmatpush.msra.mxu0 %v3599
    %3676 = vmatpush.msra.mxu0 %v3598
    %3677 = vmatpush.msra.mxu0 %v3597
    %3678 = vmatpush.msra.mxu0 %v3596
    %3679 = vmatpush.msra.mxu0 %v3595
    %3680 = vmatpush.msra.mxu0 %v3594
    %3681 = vmatmul.f32.gmra.mxu0 %v3603
    %v3682 = vpop.f32.mrf.mxu0
    %v3683 = vadd.f32 %v3663, %v3682
    %3684 = vdwg.mxu0
    %v3685 = vadd.f32 %v3544, %v3683
    %s3686 = scalar_lea.vmem %s4, 1792
    %v3687 = vld [vmem:[%s3686] sm:$0xff]
    %v3688 = vld [vmem:[%s3686 + $0x8] sm:$0xff]
    %v3689 = vld [vmem:[%s3686 + $0x10] sm:$0xff]
    %v3690 = vld [vmem:[%s3686 + $0x18] sm:$0xff]
    %v3691 = vld [vmem:[%s3686 + $0x20] sm:$0xff]
    %v3692 = vld [vmem:[%s3686 + $0x28] sm:$0xff]
    %v3693 = vld [vmem:[%s3686 + $0x30] sm:$0xff]
    %v3694 = vld [vmem:[%s3686 + $0x38] sm:$0xff]
    %v3695 = vld [vmem:[%s3686 + $0x40] sm:$0xff]
    %v3696 = vld [vmem:[%s3686 + $0x48] sm:$0xff]
    %v3697 = vld [vmem:[%s3686 + $0x50] sm:$0xff]
    %v3698 = vld [vmem:[%s3686 + $0x58] sm:$0xff]
    %v3699 = vld [vmem:[%s3686 + $0x60] sm:$0xff]
    %v3700 = vld [vmem:[%s3686 + $0x68] sm:$0xff]
    %v3701 = vld [vmem:[%s3686 + $0x70] sm:$0xff]
    %v3702 = vld [vmem:[%s3686 + $0x78] sm:$0xff]
    %v3703 = vld [vmem:[%s3686 + $0x80] sm:$0xff]
    %v3704 = vld [vmem:[%s3686 + $0x88] sm:$0xff]
    %v3705 = vld [vmem:[%s3686 + $0x90] sm:$0xff]
    %v3706 = vld [vmem:[%s3686 + $0x98] sm:$0xff]
    %v3707 = vld [vmem:[%s3686 + $0xa0] sm:$0xff]
    %v3708 = vld [vmem:[%s3686 + $0xa8] sm:$0xff]
    %v3709 = vld [vmem:[%s3686 + $0xb0] sm:$0xff]
    %v3710 = vld [vmem:[%s3686 + $0xb8] sm:$0xff]
    %v3711 = vld [vmem:[%s3686 + $0xc0] sm:$0xff]
    %v3712 = vld [vmem:[%s3686 + $0xc8] sm:$0xff]
    %v3713 = vld [vmem:[%s3686 + $0xd0] sm:$0xff]
    %v3714 = vld [vmem:[%s3686 + $0xd8] sm:$0xff]
    %v3715 = vld [vmem:[%s3686 + $0xe0] sm:$0xff]
    %v3716 = vld [vmem:[%s3686 + $0xe8] sm:$0xff]
    %v3717 = vld [vmem:[%s3686 + $0xf0] sm:$0xff]
    %v3718 = vld [vmem:[%s3686 + $0xf8] sm:$0xff]
    %v3719 = vld [vmem:[%s3686 + $0x100] sm:$0xff]
    %v3720 = vld [vmem:[%s3686 + $0x108] sm:$0xff]
    %v3721 = vld [vmem:[%s3686 + $0x110] sm:$0xff]
    %v3722 = vld [vmem:[%s3686 + $0x118] sm:$0xff]
    %v3723 = vld [vmem:[%s3686 + $0x120] sm:$0xff]
    %v3724 = vld [vmem:[%s3686 + $0x128] sm:$0xff]
    %v3725 = vld [vmem:[%s3686 + $0x130] sm:$0xff]
    %v3726 = vld [vmem:[%s3686 + $0x138] sm:$0xff]
    %v3727 = vld [vmem:[%s3686 + $0x140] sm:$0xff]
    %v3728 = vld [vmem:[%s3686 + $0x148] sm:$0xff]
    %v3729 = vld [vmem:[%s3686 + $0x150] sm:$0xff]
    %v3730 = vld [vmem:[%s3686 + $0x158] sm:$0xff]
    %v3731 = vld [vmem:[%s3686 + $0x160] sm:$0xff]
    %v3732 = vld [vmem:[%s3686 + $0x168] sm:$0xff]
    %v3733 = vld [vmem:[%s3686 + $0x170] sm:$0xff]
    %v3734 = vld [vmem:[%s3686 + $0x178] sm:$0xff]
    %v3735 = vld [vmem:[%s3686 + $0x180] sm:$0xff]
    %v3736 = vld [vmem:[%s3686 + $0x188] sm:$0xff]
    %v3737 = vld [vmem:[%s3686 + $0x190] sm:$0xff]
    %v3738 = vld [vmem:[%s3686 + $0x198] sm:$0xff]
    %v3739 = vld [vmem:[%s3686 + $0x1a0] sm:$0xff]
    %v3740 = vld [vmem:[%s3686 + $0x1a8] sm:$0xff]
    %v3741 = vld [vmem:[%s3686 + $0x1b0] sm:$0xff]
    %v3742 = vld [vmem:[%s3686 + $0x1b8] sm:$0xff]
    %v3744 = vsel %vm936, %v3116, 0
    %3746 = vmatpush.msra.mxu0 %v3702
    %3747 = vmatpush.msra.mxu0 %v3701
    %3748 = vmatpush.msra.mxu0 %v3700
    %3749 = vmatpush.msra.mxu0 %v3699
    %3750 = vmatpush.msra.mxu0 %v3698
    %3751 = vmatpush.msra.mxu0 %v3697
    %3752 = vmatpush.msra.mxu0 %v3696
    %3753 = vmatpush.msra.mxu0 %v3695
    %3754 = vmatpush.msra.mxu0 %v3694
    %3755 = vmatpush.msra.mxu0 %v3693
    %3756 = vmatpush.msra.mxu0 %v3692
    %3757 = vmatpush.msra.mxu0 %v3691
    %3758 = vmatpush.msra.mxu0 %v3690
    %3759 = vmatpush.msra.mxu0 %v3689
    %3760 = vmatpush.msra.mxu0 %v3688
    %3761 = vmatpush.msra.mxu0 %v3687
    %3762 = vmatmul.f32.gmra.mxu0 %v3113
    %v3763 = vpop.f32.mrf.mxu0
    %v3764 = vadd.f32 0.0, %v3763
    %3765 = vdwg.mxu0
    %3766 = vmatpush.msra.mxu0 %v3718
    %3767 = vmatpush.msra.mxu0 %v3717
    %3768 = vmatpush.msra.mxu0 %v3716
    %3769 = vmatpush.msra.mxu0 %v3715
    %3770 = vmatpush.msra.mxu0 %v3714
    %3771 = vmatpush.msra.mxu0 %v3713
    %3772 = vmatpush.msra.mxu0 %v3712
    %3773 = vmatpush.msra.mxu0 %v3711
    %3774 = vmatpush.msra.mxu0 %v3710
    %3775 = vmatpush.msra.mxu0 %v3709
    %3776 = vmatpush.msra.mxu0 %v3708
    %3777 = vmatpush.msra.mxu0 %v3707
    %3778 = vmatpush.msra.mxu0 %v3706
    %3779 = vmatpush.msra.mxu0 %v3705
    %3780 = vmatpush.msra.mxu0 %v3704
    %3781 = vmatpush.msra.mxu0 %v3703
    %3782 = vmatmul.f32.gmra.mxu0 %v3114
    %v3783 = vpop.f32.mrf.mxu0
    %v3784 = vadd.f32 %v3764, %v3783
    %3785 = vdwg.mxu0
    %3786 = vmatpush.msra.mxu0 %v3734
    %3787 = vmatpush.msra.mxu0 %v3733
    %3788 = vmatpush.msra.mxu0 %v3732
    %3789 = vmatpush.msra.mxu0 %v3731
    %3790 = vmatpush.msra.mxu0 %v3730
    %3791 = vmatpush.msra.mxu0 %v3729
    %3792 = vmatpush.msra.mxu0 %v3728
    %3793 = vmatpush.msra.mxu0 %v3727
    %3794 = vmatpush.msra.mxu0 %v3726
    %3795 = vmatpush.msra.mxu0 %v3725
    %3796 = vmatpush.msra.mxu0 %v3724
    %3797 = vmatpush.msra.mxu0 %v3723
    %3798 = vmatpush.msra.mxu0 %v3722
    %3799 = vmatpush.msra.mxu0 %v3721
    %3800 = vmatpush.msra.mxu0 %v3720
    %3801 = vmatpush.msra.mxu0 %v3719
    %3802 = vmatmul.f32.gmra.mxu0 %v3115
    %v3803 = vpop.f32.mrf.mxu0
    %v3804 = vadd.f32 %v3784, %v3803
    %3805 = vdwg.mxu0
    %3806 = vmatpush.msra.mxu0 0.0
    %3807 = vmatpush.msra.mxu0 0.0
    %3808 = vmatpush.msra.mxu0 0.0
    %3809 = vmatpush.msra.mxu0 0.0
    %3810 = vmatpush.msra.mxu0 0.0
    %3811 = vmatpush.msra.mxu0 0.0
    %3812 = vmatpush.msra.mxu0 0.0
    %3813 = vmatpush.msra.mxu0 0.0
    %3814 = vmatpush.msra.mxu0 %v3742
    %3815 = vmatpush.msra.mxu0 %v3741
    %3816 = vmatpush.msra.mxu0 %v3740
    %3817 = vmatpush.msra.mxu0 %v3739
    %3818 = vmatpush.msra.mxu0 %v3738
    %3819 = vmatpush.msra.mxu0 %v3737
    %3820 = vmatpush.msra.mxu0 %v3736
    %3821 = vmatpush.msra.mxu0 %v3735
    %3822 = vmatmul.f32.gmra.mxu0 %v3744
    %v3823 = vpop.f32.mrf.mxu0
    %v3824 = vadd.f32 %v3804, %v3823
    %3825 = vdwg.mxu0
    %v3826 = vadd.f32 %v3685, %v3824
    %s3827 = scalar_lea.vmem %s4, 2240
    %v3828 = vld [vmem:[%s3827] sm:$0xff]
    %v3829 = vld [vmem:[%s3827 + $0x8] sm:$0xff]
    %v3830 = vld [vmem:[%s3827 + $0x10] sm:$0xff]
    %v3831 = vld [vmem:[%s3827 + $0x18] sm:$0xff]
    %v3832 = vld [vmem:[%s3827 + $0x20] sm:$0xff]
    %v3833 = vld [vmem:[%s3827 + $0x28] sm:$0xff]
    %v3834 = vld [vmem:[%s3827 + $0x30] sm:$0xff]
    %v3835 = vld [vmem:[%s3827 + $0x38] sm:$0xff]
    %v3836 = vld [vmem:[%s3827 + $0x40] sm:$0xff]
    %v3837 = vld [vmem:[%s3827 + $0x48] sm:$0xff]
    %v3838 = vld [vmem:[%s3827 + $0x50] sm:$0xff]
    %v3839 = vld [vmem:[%s3827 + $0x58] sm:$0xff]
    %v3840 = vld [vmem:[%s3827 + $0x60] sm:$0xff]
    %v3841 = vld [vmem:[%s3827 + $0x68] sm:$0xff]
    %v3842 = vld [vmem:[%s3827 + $0x70] sm:$0xff]
    %v3843 = vld [vmem:[%s3827 + $0x78] sm:$0xff]
    %v3844 = vld [vmem:[%s3827 + $0x80] sm:$0xff]
    %v3845 = vld [vmem:[%s3827 + $0x88] sm:$0xff]
    %v3846 = vld [vmem:[%s3827 + $0x90] sm:$0xff]
    %v3847 = vld [vmem:[%s3827 + $0x98] sm:$0xff]
    %v3848 = vld [vmem:[%s3827 + $0xa0] sm:$0xff]
    %v3849 = vld [vmem:[%s3827 + $0xa8] sm:$0xff]
    %v3850 = vld [vmem:[%s3827 + $0xb0] sm:$0xff]
    %v3851 = vld [vmem:[%s3827 + $0xb8] sm:$0xff]
    %v3852 = vld [vmem:[%s3827 + $0xc0] sm:$0xff]
    %v3853 = vld [vmem:[%s3827 + $0xc8] sm:$0xff]
    %v3854 = vld [vmem:[%s3827 + $0xd0] sm:$0xff]
    %v3855 = vld [vmem:[%s3827 + $0xd8] sm:$0xff]
    %v3856 = vld [vmem:[%s3827 + $0xe0] sm:$0xff]
    %v3857 = vld [vmem:[%s3827 + $0xe8] sm:$0xff]
    %v3858 = vld [vmem:[%s3827 + $0xf0] sm:$0xff]
    %v3859 = vld [vmem:[%s3827 + $0xf8] sm:$0xff]
    %v3860 = vld [vmem:[%s3827 + $0x100] sm:$0xff]
    %v3861 = vld [vmem:[%s3827 + $0x108] sm:$0xff]
    %v3862 = vld [vmem:[%s3827 + $0x110] sm:$0xff]
    %v3863 = vld [vmem:[%s3827 + $0x118] sm:$0xff]
    %v3864 = vld [vmem:[%s3827 + $0x120] sm:$0xff]
    %v3865 = vld [vmem:[%s3827 + $0x128] sm:$0xff]
    %v3866 = vld [vmem:[%s3827 + $0x130] sm:$0xff]
    %v3867 = vld [vmem:[%s3827 + $0x138] sm:$0xff]
    %v3868 = vld [vmem:[%s3827 + $0x140] sm:$0xff]
    %v3869 = vld [vmem:[%s3827 + $0x148] sm:$0xff]
    %v3870 = vld [vmem:[%s3827 + $0x150] sm:$0xff]
    %v3871 = vld [vmem:[%s3827 + $0x158] sm:$0xff]
    %v3872 = vld [vmem:[%s3827 + $0x160] sm:$0xff]
    %v3873 = vld [vmem:[%s3827 + $0x168] sm:$0xff]
    %v3874 = vld [vmem:[%s3827 + $0x170] sm:$0xff]
    %v3875 = vld [vmem:[%s3827 + $0x178] sm:$0xff]
    %v3876 = vld [vmem:[%s3827 + $0x180] sm:$0xff]
    %v3877 = vld [vmem:[%s3827 + $0x188] sm:$0xff]
    %v3878 = vld [vmem:[%s3827 + $0x190] sm:$0xff]
    %v3879 = vld [vmem:[%s3827 + $0x198] sm:$0xff]
    %v3880 = vld [vmem:[%s3827 + $0x1a0] sm:$0xff]
    %v3881 = vld [vmem:[%s3827 + $0x1a8] sm:$0xff]
    %v3882 = vld [vmem:[%s3827 + $0x1b0] sm:$0xff]
    %v3883 = vld [vmem:[%s3827 + $0x1b8] sm:$0xff]
    %v3885 = vsel %vm936, %v3120, 0
    %3887 = vmatpush.msra.mxu0 %v3843
    %3888 = vmatpush.msra.mxu0 %v3842
    %3889 = vmatpush.msra.mxu0 %v3841
    %3890 = vmatpush.msra.mxu0 %v3840
    %3891 = vmatpush.msra.mxu0 %v3839
    %3892 = vmatpush.msra.mxu0 %v3838
    %3893 = vmatpush.msra.mxu0 %v3837
    %3894 = vmatpush.msra.mxu0 %v3836
    %3895 = vmatpush.msra.mxu0 %v3835
    %3896 = vmatpush.msra.mxu0 %v3834
    %3897 = vmatpush.msra.mxu0 %v3833
    %3898 = vmatpush.msra.mxu0 %v3832
    %3899 = vmatpush.msra.mxu0 %v3831
    %3900 = vmatpush.msra.mxu0 %v3830
    %3901 = vmatpush.msra.mxu0 %v3829
    %3902 = vmatpush.msra.mxu0 %v3828
    %3903 = vmatmul.f32.gmra.mxu0 %v3117
    %v3904 = vpop.f32.mrf.mxu0
    %v3905 = vadd.f32 0.0, %v3904
    %3906 = vdwg.mxu0
    %3907 = vmatpush.msra.mxu0 %v3859
    %3908 = vmatpush.msra.mxu0 %v3858
    %3909 = vmatpush.msra.mxu0 %v3857
    %3910 = vmatpush.msra.mxu0 %v3856
    %3911 = vmatpush.msra.mxu0 %v3855
    %3912 = vmatpush.msra.mxu0 %v3854
    %3913 = vmatpush.msra.mxu0 %v3853
    %3914 = vmatpush.msra.mxu0 %v3852
    %3915 = vmatpush.msra.mxu0 %v3851
    %3916 = vmatpush.msra.mxu0 %v3850
    %3917 = vmatpush.msra.mxu0 %v3849
    %3918 = vmatpush.msra.mxu0 %v3848
    %3919 = vmatpush.msra.mxu0 %v3847
    %3920 = vmatpush.msra.mxu0 %v3846
    %3921 = vmatpush.msra.mxu0 %v3845
    %3922 = vmatpush.msra.mxu0 %v3844
    %3923 = vmatmul.f32.gmra.mxu0 %v3118
    %v3924 = vpop.f32.mrf.mxu0
    %v3925 = vadd.f32 %v3905, %v3924
    %3926 = vdwg.mxu0
    %3927 = vmatpush.msra.mxu0 %v3875
    %3928 = vmatpush.msra.mxu0 %v3874
    %3929 = vmatpush.msra.mxu0 %v3873
    %3930 = vmatpush.msra.mxu0 %v3872
    %3931 = vmatpush.msra.mxu0 %v3871
    %3932 = vmatpush.msra.mxu0 %v3870
    %3933 = vmatpush.msra.mxu0 %v3869
    %3934 = vmatpush.msra.mxu0 %v3868
    %3935 = vmatpush.msra.mxu0 %v3867
    %3936 = vmatpush.msra.mxu0 %v3866
    %3937 = vmatpush.msra.mxu0 %v3865
    %3938 = vmatpush.msra.mxu0 %v3864
    %3939 = vmatpush.msra.mxu0 %v3863
    %3940 = vmatpush.msra.mxu0 %v3862
    %3941 = vmatpush.msra.mxu0 %v3861
    %3942 = vmatpush.msra.mxu0 %v3860
    %3943 = vmatmul.f32.gmra.mxu0 %v3119
    %v3944 = vpop.f32.mrf.mxu0
    %v3945 = vadd.f32 %v3925, %v3944
    %3946 = vdwg.mxu0
    %3947 = vmatpush.msra.mxu0 0.0
    %3948 = vmatpush.msra.mxu0 0.0
    %3949 = vmatpush.msra.mxu0 0.0
    %3950 = vmatpush.msra.mxu0 0.0
    %3951 = vmatpush.msra.mxu0 0.0
    %3952 = vmatpush.msra.mxu0 0.0
    %3953 = vmatpush.msra.mxu0 0.0
    %3954 = vmatpush.msra.mxu0 0.0
    %3955 = vmatpush.msra.mxu0 %v3883
    %3956 = vmatpush.msra.mxu0 %v3882
    %3957 = vmatpush.msra.mxu0 %v3881
    %3958 = vmatpush.msra.mxu0 %v3880
    %3959 = vmatpush.msra.mxu0 %v3879
    %3960 = vmatpush.msra.mxu0 %v3878
    %3961 = vmatpush.msra.mxu0 %v3877
    %3962 = vmatpush.msra.mxu0 %v3876
    %3963 = vmatmul.f32.gmra.mxu0 %v3885
    %v3964 = vpop.f32.mrf.mxu0
    %v3965 = vadd.f32 %v3945, %v3964
    %3966 = vdwg.mxu0
    %v3967 = vadd.f32 %v3826, %v3965
    %s3968 = scalar_lea.vmem %s4, 2688
    %v3969 = vld [vmem:[%s3968] sm:$0xff]
    %v3970 = vld [vmem:[%s3968 + $0x8] sm:$0xff]
    %v3971 = vld [vmem:[%s3968 + $0x10] sm:$0xff]
    %v3972 = vld [vmem:[%s3968 + $0x18] sm:$0xff]
    %v3973 = vld [vmem:[%s3968 + $0x20] sm:$0xff]
    %v3974 = vld [vmem:[%s3968 + $0x28] sm:$0xff]
    %v3975 = vld [vmem:[%s3968 + $0x30] sm:$0xff]
    %v3976 = vld [vmem:[%s3968 + $0x38] sm:$0xff]
    %v3977 = vld [vmem:[%s3968 + $0x40] sm:$0xff]
    %v3978 = vld [vmem:[%s3968 + $0x48] sm:$0xff]
    %v3979 = vld [vmem:[%s3968 + $0x50] sm:$0xff]
    %v3980 = vld [vmem:[%s3968 + $0x58] sm:$0xff]
    %v3981 = vld [vmem:[%s3968 + $0x60] sm:$0xff]
    %v3982 = vld [vmem:[%s3968 + $0x68] sm:$0xff]
    %v3983 = vld [vmem:[%s3968 + $0x70] sm:$0xff]
    %v3984 = vld [vmem:[%s3968 + $0x78] sm:$0xff]
    %v3985 = vld [vmem:[%s3968 + $0x80] sm:$0xff]
    %v3986 = vld [vmem:[%s3968 + $0x88] sm:$0xff]
    %v3987 = vld [vmem:[%s3968 + $0x90] sm:$0xff]
    %v3988 = vld [vmem:[%s3968 + $0x98] sm:$0xff]
    %v3989 = vld [vmem:[%s3968 + $0xa0] sm:$0xff]
    %v3990 = vld [vmem:[%s3968 + $0xa8] sm:$0xff]
    %v3991 = vld [vmem:[%s3968 + $0xb0] sm:$0xff]
    %v3992 = vld [vmem:[%s3968 + $0xb8] sm:$0xff]
    %v3993 = vld [vmem:[%s3968 + $0xc0] sm:$0xff]
    %v3994 = vld [vmem:[%s3968 + $0xc8] sm:$0xff]
    %v3995 = vld [vmem:[%s3968 + $0xd0] sm:$0xff]
    %v3996 = vld [vmem:[%s3968 + $0xd8] sm:$0xff]
    %v3997 = vld [vmem:[%s3968 + $0xe0] sm:$0xff]
    %v3998 = vld [vmem:[%s3968 + $0xe8] sm:$0xff]
    %v3999 = vld [vmem:[%s3968 + $0xf0] sm:$0xff]
    %v4000 = vld [vmem:[%s3968 + $0xf8] sm:$0xff]
    %v4001 = vld [vmem:[%s3968 + $0x100] sm:$0xff]
    %v4002 = vld [vmem:[%s3968 + $0x108] sm:$0xff]
    %v4003 = vld [vmem:[%s3968 + $0x110] sm:$0xff]
    %v4004 = vld [vmem:[%s3968 + $0x118] sm:$0xff]
    %v4005 = vld [vmem:[%s3968 + $0x120] sm:$0xff]
    %v4006 = vld [vmem:[%s3968 + $0x128] sm:$0xff]
    %v4007 = vld [vmem:[%s3968 + $0x130] sm:$0xff]
    %v4008 = vld [vmem:[%s3968 + $0x138] sm:$0xff]
    %v4009 = vld [vmem:[%s3968 + $0x140] sm:$0xff]
    %v4010 = vld [vmem:[%s3968 + $0x148] sm:$0xff]
    %v4011 = vld [vmem:[%s3968 + $0x150] sm:$0xff]
    %v4012 = vld [vmem:[%s3968 + $0x158] sm:$0xff]
    %v4013 = vld [vmem:[%s3968 + $0x160] sm:$0xff]
    %v4014 = vld [vmem:[%s3968 + $0x168] sm:$0xff]
    %v4015 = vld [vmem:[%s3968 + $0x170] sm:$0xff]
    %v4016 = vld [vmem:[%s3968 + $0x178] sm:$0xff]
    %v4017 = vld [vmem:[%s3968 + $0x180] sm:$0xff]
    %v4018 = vld [vmem:[%s3968 + $0x188] sm:$0xff]
    %v4019 = vld [vmem:[%s3968 + $0x190] sm:$0xff]
    %v4020 = vld [vmem:[%s3968 + $0x198] sm:$0xff]
    %v4021 = vld [vmem:[%s3968 + $0x1a0] sm:$0xff]
    %v4022 = vld [vmem:[%s3968 + $0x1a8] sm:$0xff]
    %v4023 = vld [vmem:[%s3968 + $0x1b0] sm:$0xff]
    %v4024 = vld [vmem:[%s3968 + $0x1b8] sm:$0xff]
    %v4026 = vsel %vm936, %v3124, 0
    %4028 = vmatpush.msra.mxu0 %v3984
    %4029 = vmatpush.msra.mxu0 %v3983
    %4030 = vmatpush.msra.mxu0 %v3982
    %4031 = vmatpush.msra.mxu0 %v3981
    %4032 = vmatpush.msra.mxu0 %v3980
    %4033 = vmatpush.msra.mxu0 %v3979
    %4034 = vmatpush.msra.mxu0 %v3978
    %4035 = vmatpush.msra.mxu0 %v3977
    %4036 = vmatpush.msra.mxu0 %v3976
    %4037 = vmatpush.msra.mxu0 %v3975
    %4038 = vmatpush.msra.mxu0 %v3974
    %4039 = vmatpush.msra.mxu0 %v3973
    %4040 = vmatpush.msra.mxu0 %v3972
    %4041 = vmatpush.msra.mxu0 %v3971
    %4042 = vmatpush.msra.mxu0 %v3970
    %4043 = vmatpush.msra.mxu0 %v3969
    %4044 = vmatmul.f32.gmra.mxu0 %v3121
    %v4045 = vpop.f32.mrf.mxu0
    %v4046 = vadd.f32 0.0, %v4045
    %4047 = vdwg.mxu0
    %4048 = vmatpush.msra.mxu0 %v4000
    %4049 = vmatpush.msra.mxu0 %v3999
    %4050 = vmatpush.msra.mxu0 %v3998
    %4051 = vmatpush.msra.mxu0 %v3997
    %4052 = vmatpush.msra.mxu0 %v3996
    %4053 = vmatpush.msra.mxu0 %v3995
    %4054 = vmatpush.msra.mxu0 %v3994
    %4055 = vmatpush.msra.mxu0 %v3993
    %4056 = vmatpush.msra.mxu0 %v3992
    %4057 = vmatpush.msra.mxu0 %v3991
    %4058 = vmatpush.msra.mxu0 %v3990
    %4059 = vmatpush.msra.mxu0 %v3989
    %4060 = vmatpush.msra.mxu0 %v3988
    %4061 = vmatpush.msra.mxu0 %v3987
    %4062 = vmatpush.msra.mxu0 %v3986
    %4063 = vmatpush.msra.mxu0 %v3985
    %4064 = vmatmul.f32.gmra.mxu0 %v3122
    %v4065 = vpop.f32.mrf.mxu0
    %v4066 = vadd.f32 %v4046, %v4065
    %4067 = vdwg.mxu0
    %4068 = vmatpush.msra.mxu0 %v4016
    %4069 = vmatpush.msra.mxu0 %v4015
    %4070 = vmatpush.msra.mxu0 %v4014
    %4071 = vmatpush.msra.mxu0 %v4013
    %4072 = vmatpush.msra.mxu0 %v4012
    %4073 = vmatpush.msra.mxu0 %v4011
    %4074 = vmatpush.msra.mxu0 %v4010
    %4075 = vmatpush.msra.mxu0 %v4009
    %4076 = vmatpush.msra.mxu0 %v4008
    %4077 = vmatpush.msra.mxu0 %v4007
    %4078 = vmatpush.msra.mxu0 %v4006
    %4079 = vmatpush.msra.mxu0 %v4005
    %4080 = vmatpush.msra.mxu0 %v4004
    %4081 = vmatpush.msra.mxu0 %v4003
    %4082 = vmatpush.msra.mxu0 %v4002
    %4083 = vmatpush.msra.mxu0 %v4001
    %4084 = vmatmul.f32.gmra.mxu0 %v3123
    %v4085 = vpop.f32.mrf.mxu0
    %v4086 = vadd.f32 %v4066, %v4085
    %4087 = vdwg.mxu0
    %4088 = vmatpush.msra.mxu0 0.0
    %4089 = vmatpush.msra.mxu0 0.0
    %4090 = vmatpush.msra.mxu0 0.0
    %4091 = vmatpush.msra.mxu0 0.0
    %4092 = vmatpush.msra.mxu0 0.0
    %4093 = vmatpush.msra.mxu0 0.0
    %4094 = vmatpush.msra.mxu0 0.0
    %4095 = vmatpush.msra.mxu0 0.0
    %4096 = vmatpush.msra.mxu0 %v4024
    %4097 = vmatpush.msra.mxu0 %v4023
    %4098 = vmatpush.msra.mxu0 %v4022
    %4099 = vmatpush.msra.mxu0 %v4021
    %4100 = vmatpush.msra.mxu0 %v4020
    %4101 = vmatpush.msra.mxu0 %v4019
    %4102 = vmatpush.msra.mxu0 %v4018
    %4103 = vmatpush.msra.mxu0 %v4017
    %4104 = vmatmul.f32.gmra.mxu0 %v4026
    %v4105 = vpop.f32.mrf.mxu0
    %v4106 = vadd.f32 %v4086, %v4105
    %4107 = vdwg.mxu0
    %v4108 = vadd.f32 %v3967, %v4106
    %v4109 = vld [vmem:[%s5] sm:$0x1]
    %v4111 = vperm.slane %v4109, 0
    %v4113 = vadd.f32 %v4108, %v4111
    %v4114 = vmax.f32 %v4113, 0.0
    %v4115 = vld [vmem:[%s6] sm:$0xff]
    %v4116 = vld [vmem:[%s6 + $0x8] sm:$0xff]
    %v4117 = vld [vmem:[%s6 + $0x10] sm:$0xff]
    %v4118 = vld [vmem:[%s6 + $0x18] sm:$0xff]
    %v4119 = vld [vmem:[%s6 + $0x20] sm:$0xff]
    %v4120 = vld [vmem:[%s6 + $0x28] sm:$0xff]
    %v4121 = vld [vmem:[%s6 + $0x30] sm:$0xff]
    %v4122 = vld [vmem:[%s6 + $0x38] sm:$0xff]
    %v4123 = vld [vmem:[%s6 + $0x40] sm:$0xff]
    %v4124 = vld [vmem:[%s6 + $0x48] sm:$0xff]
    %v4125 = vld [vmem:[%s6 + $0x50] sm:$0xff]
    %v4126 = vld [vmem:[%s6 + $0x58] sm:$0xff]
    %v4127 = vld [vmem:[%s7] sm:$0x7]
    %v4129 = vperm.slane %v4127, 0
    %v4130 = vperm.slane %v4127, 1
    %v4131 = vperm.slane %v4127, 2
    %vm4135 = vcmask 261120
    %v4137 = vsel %vm4135, %v4114, 0
    %4139 = vmatpush.msra.mxu0 0.0
    %4140 = vmatpush.msra.mxu0 0.0
    %4141 = vmatpush.msra.mxu0 0.0
    %4142 = vmatpush.msra.mxu0 0.0
    %4143 = vmatpush.msra.mxu0 0.0
    %4144 = vmatpush.msra.mxu0 0.0
    %4145 = vmatpush.msra.mxu0 0.0
    %4146 = vmatpush.msra.mxu0 0.0
    %4147 = vmatpush.msra.mxu0 0.0
    %4148 = vmatpush.msra.mxu0 0.0
    %4149 = vmatpush.msra.mxu0 0.0
    %4150 = vmatpush.msra.mxu0 0.0
    %4151 = vmatpush.msra.mxu0 %v4124
    %4152 = vmatpush.msra.mxu0 %v4121
    %4153 = vmatpush.msra.mxu0 %v4118
    %4154 = vmatpush.msra.mxu0 %v4115
    %4155 = vmatmul.f32.gmra.mxu0 %v4137
    %v4156 = vpop.f32.mrf.mxu0
    %v4157 = vadd.f32 %v4129, %v4156
    %4158 = vdwg.mxu0
    %4159 = vmatpush.msra.mxu0 0.0
    %4160 = vmatpush.msra.mxu0 0.0
    %4161 = vmatpush.msra.mxu0 0.0
    %4162 = vmatpush.msra.mxu0 0.0
    %4163 = vmatpush.msra.mxu0 0.0
    %4164 = vmatpush.msra.mxu0 0.0
    %4165 = vmatpush.msra.mxu0 0.0
    %4166 = vmatpush.msra.mxu0 0.0
    %4167 = vmatpush.msra.mxu0 0.0
    %4168 = vmatpush.msra.mxu0 0.0
    %4169 = vmatpush.msra.mxu0 0.0
    %4170 = vmatpush.msra.mxu0 0.0
    %4171 = vmatpush.msra.mxu0 %v4125
    %4172 = vmatpush.msra.mxu0 %v4122
    %4173 = vmatpush.msra.mxu0 %v4119
    %4174 = vmatpush.msra.mxu0 %v4116
    %4175 = vmatmul.f32.gmra.mxu0 %v4137
    %v4176 = vpop.f32.mrf.mxu0
    %v4177 = vadd.f32 %v4130, %v4176
    %4178 = vdwg.mxu0
    %4179 = vmatpush.msra.mxu0 0.0
    %4180 = vmatpush.msra.mxu0 0.0
    %4181 = vmatpush.msra.mxu0 0.0
    %4182 = vmatpush.msra.mxu0 0.0
    %4183 = vmatpush.msra.mxu0 0.0
    %4184 = vmatpush.msra.mxu0 0.0
    %4185 = vmatpush.msra.mxu0 0.0
    %4186 = vmatpush.msra.mxu0 0.0
    %4187 = vmatpush.msra.mxu0 0.0
    %4188 = vmatpush.msra.mxu0 0.0
    %4189 = vmatpush.msra.mxu0 0.0
    %4190 = vmatpush.msra.mxu0 0.0
    %4191 = vmatpush.msra.mxu0 %v4126
    %4192 = vmatpush.msra.mxu0 %v4123
    %4193 = vmatpush.msra.mxu0 %v4120
    %4194 = vmatpush.msra.mxu0 %v4117
    %4195 = vmatmul.f32.gmra.mxu0 %v4137
    %v4196 = vpop.f32.mrf.mxu0
    %v4197 = vadd.f32 %v4131, %v4196
    %4198 = vdwg.mxu0
    %4199 = vst [vmem:[%s8] sm:$0xff] %v4157
    %4200 = vst [vmem:[%s8 + $0x8] sm:$0xff] %v4177
    %4201 = vst.msk [vmem:[%s8 + $0x10] sm:$0xff] %vm936, %v4197
    // Predicated region
    $region38: #{encoder_forward.1} parent=1 // pred_check
      _
    $region39: #{encoder_forward.1} parent=1 // pred_check_branch
      %4203 = sbr.rel (0) target = $region41
    $region40: #{encoder_forward.1} parent=1 // pred_region
      _
    $region41: #{encoder_forward.1} parent=1 // pred_fallthru
      _
    // Predicated region
    $region42: #{encoder_forward.1} parent=1 // pred_check
      _
    $region43: #{encoder_forward.1} parent=1 // pred_check_branch
      %4205 = sbr.rel (0) target = $region45
    $region44: #{encoder_forward.1} parent=1 // pred_region
      _
    $region45: #{encoder_forward.1} parent=1 // pred_fallthru
      _
    %4206 = vsyncpa [#allocation3], 1

</llo_original>
